<compile_context>
chip_gen: v7x
topology: tpu7x:2x2x1
jax: 0.10.0
libtpu: 0.0.40
codegen_flags: <defaults>
</compile_context>

<pallas_src>
import jax
import jax.numpy as jnp
import numpy as np
from jax.experimental import pallas as pl
from jax.experimental.pallas import tpu as pltpu

V_TH = 1.0       # LIFAct.V_th
DECAY = 0.25     # mem_update decay
THRESH = 0.5 * V_TH
BN_EPS = 1e-5


def _round_up(x, m):
    return (x + m - 1) // m * m


def _make_segmenthead_kernel(W, Cin, S, pad):
    taps = [(dh, dw) for dh in (-1, 0, 1) for dw in (-1, 0, 1)]

    def kernel(x_ref, mask_ref, scale1_ref, shift1_ref, w1_ref,
               scale2_ref, shift2_ref, w2t_ref, b2_ref,
               out_ref, mem1, mem2, spikes):
        t = pl.program_id(1)

        @pl.when(t == 0)
        def _():
            mem1[...] = jnp.zeros_like(mem1)
            mem2[...] = jnp.zeros_like(mem2)
            # NOTE: no memset of `spikes` needed — out-of-image taps are removed
            # with a select against the int8 mask, never multiplied.

        # ---- BN1 (folded affine) + LIF1, lane-dense (Cin, S) ----
        bn1 = x_ref[0, 0] * scale1_ref[...] + shift1_ref[...]
        m1 = mem1[...] * DECAY + bn1
        fire1 = m1 > THRESH                       # spike_activation fwd (V_th folded)
        s1 = fire1.astype(jnp.float32)
        mem1[...] = jnp.where(fire1, 0.0, m1)     # single-select reset

        # ---- conv1: 3x3, pad=1, no bias — 9 lane-shifted taps, MXU-accumulated ----
        # Interior of the halo buffer is fully rewritten every step (lane-aligned
        # store at offset `pad`, a multiple of 128).
        spikes[:, pad:pad + S] = s1
        acc = None
        for idx, (dh, dw) in enumerate(taps):
            off = dh * W + dw
            tap = spikes[:, pad + off:pad + off + S]          # static lane-shifted read
            tap = jnp.where(mask_ref[idx:idx + 1, :] != 0, tap, 0.0)
            part = jnp.dot(w1_ref[idx], tap,                  # (Cm,Cin)@(Cin,S) f32
                           preferred_element_type=jnp.float32)
            acc = part if acc is None else acc + part         # (Cm, S)

        # ---- BN2 (folded affine) + LIF2 ----
        bn2 = acc * scale2_ref[...] + shift2_ref[...]
        m2 = mem2[...] * DECAY + bn2
        fire2 = m2 > THRESH
        s2 = fire2.astype(jnp.float32)
        mem2[...] = jnp.where(fire2, 0.0, m2)

        # ---- conv2: 1x1 with bias — lane-dense (Cout, S) output store ----
        out_ref[0, 0] = jnp.dot(w2t_ref[...], s2,
                                preferred_element_type=jnp.float32) + b2_ref[...]

    return kernel


def segmenthead_forward(x, params, scale_factor=None, batch_blocks=1):
    """x: (T, B, Cin, H, W) float32 (PyTorch layout). Returns (T, B, Cout, H, W)."""
    T, B, Cin, H, W = x.shape
    Cm = params["w1"].shape[-1]
    Cout = params["w2"].shape[-1]
    assert B % batch_blocks == 0
    NB = batch_blocks
    Bc = B // NB
    S = Bc * H * W                                  # flattened (Bc, H, W) axis, in lanes
    assert S % 128 == 0, "flattened spatial axis should be lane-aligned"
    PAD = _round_up(W + 1, 128)                     # covers the (-1,-1) tap for any W

    # Fold BN (inference) into per-channel scale/shift (channels along sublanes).
    s1 = params["gamma1"] / jnp.sqrt(params["var1"] + BN_EPS)
    scale1 = s1.reshape(Cin, 1)
    shift1 = (params["beta1"] - params["mean1"] * s1).reshape(Cin, 1)
    s2 = params["gamma2"] / jnp.sqrt(params["var2"] + BN_EPS)
    scale2 = s2.reshape(Cm, 1)
    shift2 = (params["beta2"] - params["mean2"] * s2).reshape(Cm, 1)

    # conv weights (all f32): per-tap (9, Cm, Cin) matrices and (Cout, Cm).
    w1k = jnp.transpose(params["w1"].reshape(9, Cin, Cm), (0, 2, 1)).astype(jnp.float32)
    w2t = params["w2"].T.astype(jnp.float32)                         # (Cout, Cm)
    b2 = params["b2"].reshape(Cout, 1).astype(jnp.float32)

    # 3x3 halo validity masks, int8, one per tap over the flattened (Bc, H, W) axis.
    hh = (np.arange(S) // W) % H
    ww = np.arange(S) % W
    masks = np.stack([((hh + dh >= 0) & (hh + dh < H) & (ww + dw >= 0) & (ww + dw < W))
                      for dh in (-1, 0, 1) for dw in (-1, 0, 1)]).astype(np.int8)
    masks = jnp.asarray(masks)                                       # (9, S) int8

    # Re-layout: channels into sublanes, flattened (Bc, H, W) spatial into lanes.
    xk = (x.reshape(T, NB, Bc, Cin, H, W)
           .transpose(0, 1, 3, 2, 4, 5)
           .reshape(T, NB, Cin, S))

    kernel = _make_segmenthead_kernel(W, Cin, S, PAD)

    def const(shape):
        return pl.BlockSpec(shape, lambda nb, t, _n=len(shape): (0,) * _n)

    # Explicit VMEM budget (double-buffered blocks + constants + scratch) w/ headroom.
    fb = 4
    vmem_need = (2 * Cin * S * fb                    # x block
                 + 2 * Cout * S * fb                 # out block
                 + 2 * 9 * S                         # int8 tap masks
                 + (Cin + Cm) * S * fb               # LIF membranes
                 + Cin * (S + 2 * PAD) * fb          # halo spike buffer
                 + 2 * (9 * Cm * Cin + Cout * Cm + 2 * Cin + 2 * Cm + Cout) * fb)
    vmem_limit = min(int(1.5 * vmem_need) + (4 << 20), 100 << 20)

    out = pl.pallas_call(
        kernel,
        out_shape=jax.ShapeDtypeStruct((T, NB, Cout, S), jnp.float32),
        grid_spec=pltpu.PrefetchScalarGridSpec(
            num_scalar_prefetch=0,
            grid=(NB, T),                      # T innermost: LIF state carried over time
            in_specs=[
                pl.BlockSpec((1, 1, Cin, S), lambda nb, t: (t, nb, 0, 0)),
                const((9, S)),                 # int8 tap masks
                const((Cin, 1)), const((Cin, 1)),
                const((9, Cm, Cin)),
                const((Cm, 1)), const((Cm, 1)),
                const((Cout, Cm)),
                const((Cout, 1)),
            ],
            out_specs=pl.BlockSpec((1, 1, Cout, S), lambda nb, t: (t, nb, 0, 0)),
            scratch_shapes=[
                pltpu.VMEM((Cin, S), jnp.float32),              # LIF1 membrane
                pltpu.VMEM((Cm, S), jnp.float32),               # LIF2 membrane
                pltpu.VMEM((Cin, S + 2 * PAD), jnp.float32),    # halo spike buffer
            ],
        ),
        # batch chunks independent ("parallel" -> v7x megacore); time stays sequential.
        compiler_params=pltpu.CompilerParams(
            dimension_semantics=("parallel", "arbitrary"),
            vmem_limit_bytes=vmem_limit),
    )(xk, masks, scale1, shift1, w1k, scale2, shift2, w2t, b2)

    # back to PyTorch layout (T, B, Cout, H, W)
    out = (out.reshape(T, NB, Cout, Bc, H, W)
              .transpose(0, 1, 3, 2, 4, 5)
              .reshape(T, B, Cout, H, W))

    if scale_factor is not None:
        # TODO(synk): BasicInterpolate (scale_factor path) is plain-JAX bilinear
        # resize glue (align_corners=False), not implemented inside the kernel.
        out = jax.image.resize(out, (T, B, Cout, H * scale_factor, W * scale_factor),
                               method="bilinear")
    return out


def _reference_forward(x, params):
    """Pure-JAX reference mirroring the PyTorch forward (NCHW), all-f32."""
    T, B, Cin, H, W = x.shape
    s1c = params["gamma1"] / jnp.sqrt(params["var1"] + BN_EPS)
    sh1 = params["beta1"] - params["mean1"] * s1c
    s2c = params["gamma2"] / jnp.sqrt(params["var2"] + BN_EPS)
    sh2 = params["beta2"] - params["mean2"] * s2c
    bcast = lambda v: v.reshape(1, 1, -1, 1, 1)

    def lif(seq):
        def step(mem, xt):
            m = mem * DECAY + xt
            s = (m / V_TH > 0.5).astype(jnp.float32)
            return m * (1.0 - s), s
        _, spikes = jax.lax.scan(step, jnp.zeros_like(seq[0]), seq)
        return spikes

    spk1 = lif(x * bcast(s1c) + bcast(sh1))
    y1 = jax.lax.conv_general_dilated(
        spk1.reshape(T * B, Cin, H, W), params["w1"], (1, 1), "SAME",
        dimension_numbers=("NCHW", "HWIO", "NCHW")).reshape(T, B, -1, H, W)
    spk2 = lif(y1 * bcast(s2c) + bcast(sh2))
    out = jnp.einsum("tbchw,co->tbohw", spk2, params["w2"]) + bcast(params["b2"])
    return out


if __name__ == "__main__":
    # Small shapes: T = nr_temporal_bins, PyTorch layout (T, B, Cin, H, W).
    T, B, H, W = 4, 2, 16, 16
    inplanes, interplanes, outplanes = 16, 16, 8

    key = jax.random.PRNGKey(0)
    k = jax.random.split(key, 12)
    x = jax.random.normal(k[0], (T, B, inplanes, H, W), jnp.float32)

    params = dict(
        gamma1=jax.random.uniform(k[1], (inplanes,), jnp.float32, 0.5, 1.5),
        beta1=0.1 * jax.random.normal(k[2], (inplanes,), jnp.float32),
        mean1=0.1 * jax.random.normal(k[3], (inplanes,), jnp.float32),
        var1=jax.random.uniform(k[4], (inplanes,), jnp.float32, 0.5, 1.5),
        w1=(jax.random.normal(k[5], (3, 3, inplanes, interplanes), jnp.float32)
            * np.sqrt(2.0 / (9 * inplanes))).astype(jnp.float32),
        gamma2=jax.random.uniform(k[6], (interplanes,), jnp.float32, 0.5, 1.5),
        beta2=0.1 * jax.random.normal(k[7], (interplanes,), jnp.float32),
        mean2=0.1 * jax.random.normal(k[8], (interplanes,), jnp.float32),
        var2=jax.random.uniform(k[9], (interplanes,), jnp.float32, 0.5, 1.5),
        w2=(jax.random.normal(k[10], (interplanes, outplanes), jnp.float32)
            * np.sqrt(1.0 / interplanes)).astype(jnp.float32),
        b2=0.1 * jax.random.normal(k[11], (outplanes,), jnp.float32),
    )

    ref = jax.block_until_ready(_reference_forward(x, params))

    for nb in (1, 2):   # nb=2 exercises the core-parallel batch axis (v7x megacore path)
        out = jax.block_until_ready(
            segmenthead_forward(x, params, scale_factor=None, batch_blocks=nb))
        assert out.shape == (T, B, outplanes, H, W)
        assert np.all(np.isfinite(np.asarray(out)))
        diff = np.abs(np.asarray(out) - np.asarray(ref))
        # Spike thresholding is knife-edge sensitive; allow (rare) flips from f32
        # accumulation-order differences (per-tap accumulate vs XLA conv).
        assert np.median(diff) < 1e-5 and np.mean(diff > 1e-3) < 5e-3, float(diff.max())

    print("KERNEL_OK")
</pallas_src>

<mosaic_0001>
module attributes {stable_mosaic.version = 11 : i64} {
  func.func @kernel(%arg0: i32, %arg1: i32, %arg2: memref<1x1x16x512xf32, #tpu.memory_space<vmem>>, %arg3: memref<9x512xi8, #tpu.memory_space<vmem>>, %arg4: memref<16x1xf32, #tpu.memory_space<vmem>>, %arg5: memref<16x1xf32, #tpu.memory_space<vmem>>, %arg6: memref<9x16x16xf32, #tpu.memory_space<vmem>>, %arg7: memref<16x1xf32, #tpu.memory_space<vmem>>, %arg8: memref<16x1xf32, #tpu.memory_space<vmem>>, %arg9: memref<8x16xf32, #tpu.memory_space<vmem>>, %arg10: memref<8x1xf32, #tpu.memory_space<vmem>>, %arg11: memref<1x1x8x512xf32, #tpu.memory_space<vmem>>, %arg12: memref<16x512xf32, #tpu.memory_space<vmem>>, %arg13: memref<16x512xf32, #tpu.memory_space<vmem>>, %arg14: memref<16x768xf32, #tpu.memory_space<vmem>>) attributes {dimension_semantics = [#tpu.dimension_semantics<parallel>, #tpu.dimension_semantics<arbitrary>], iteration_bounds = array<i64: 1, 4>, scalar_prefetch = 0 : i64, scratch_operands = 3 : i64, tpu.core_type = #tpu.core_type<tc>, window_params = [{transform_indices = @transform_0, window_bounds = array<i64: 1, 1, 16, 512>}, {pipeline_mode = #tpu.pipeline_mode<synchronous>, transform_indices = @transform_1, window_bounds = array<i64: 9, 512>}, {pipeline_mode = #tpu.pipeline_mode<synchronous>, transform_indices = @transform_2, window_bounds = array<i64: 16, 1>}, {pipeline_mode = #tpu.pipeline_mode<synchronous>, transform_indices = @transform_3, window_bounds = array<i64: 16, 1>}, {pipeline_mode = #tpu.pipeline_mode<synchronous>, transform_indices = @transform_4, window_bounds = array<i64: 9, 16, 16>}, {pipeline_mode = #tpu.pipeline_mode<synchronous>, transform_indices = @transform_5, window_bounds = array<i64: 16, 1>}, {pipeline_mode = #tpu.pipeline_mode<synchronous>, transform_indices = @transform_6, window_bounds = array<i64: 16, 1>}, {pipeline_mode = #tpu.pipeline_mode<synchronous>, transform_indices = @transform_7, window_bounds = array<i64: 8, 16>}, {pipeline_mode = #tpu.pipeline_mode<synchronous>, transform_indices = @transform_8, window_bounds = array<i64: 8, 1>}, {transform_indices = @transform_9, window_bounds = array<i64: 1, 1, 8, 512>}]} {
    %c0_i32 = arith.constant 0 : i32
    %0 = arith.cmpi eq, %arg1, %c0_i32 : i32
    %1 = arith.extui %0 : i1 to i32
    %c0_i32_0 = arith.constant 0 : i32
    %2 = arith.cmpi ne, %1, %c0_i32_0 : i32
    scf.if %2 {
      %cst_108 = arith.constant 0.000000e+00 : f32
      %155 = vector.broadcast %cst_108 : f32 to vector<16x512xf32>
      %c0_109 = arith.constant 0 : index
      %c0_110 = arith.constant 0 : index
      %156 = vector.load %arg12[%c0_109, %c0_110] : memref<16x512xf32, #tpu.memory_space<vmem>>, vector<16x512xf32>
      tpu.vector_store %arg12[%c0_109, %c0_110], %155 {strides = array<i32>} : memref<16x512xf32, #tpu.memory_space<vmem>>, vector<16x512xf32>,
      %cst_111 = arith.constant 0.000000e+00 : f32
      %157 = vector.broadcast %cst_111 : f32 to vector<16x512xf32>
      %c0_112 = arith.constant 0 : index
      %c0_113 = arith.constant 0 : index
      %158 = vector.load %arg13[%c0_112, %c0_113] : memref<16x512xf32, #tpu.memory_space<vmem>>, vector<16x512xf32>
      tpu.vector_store %arg13[%c0_112, %c0_113], %157 {strides = array<i32>} : memref<16x512xf32, #tpu.memory_space<vmem>>, vector<16x512xf32>,
    } else {
    }
    %c0 = arith.constant 0 : index
    %c0_1 = arith.constant 0 : index
    %c0_2 = arith.constant 0 : index
    %c0_3 = arith.constant 0 : index
    %3 = vector.load %arg2[%c0, %c0_1, %c0_2, %c0_3] : memref<1x1x16x512xf32, #tpu.memory_space<vmem>>, vector<1x1x16x512xf32>
    %4 = vector.shape_cast %3 : vector<1x1x16x512xf32> to vector<16x512xf32>
    %c0_4 = arith.constant 0 : index
    %c0_5 = arith.constant 0 : index
    %5 = vector.load %arg4[%c0_4, %c0_5] : memref<16x1xf32, #tpu.memory_space<vmem>>, vector<16x1xf32>
    %6 = vector.broadcast %5 : vector<16x1xf32> to vector<16x512xf32>
    %7 = arith.mulf %4, %6 : vector<16x512xf32>
    %c0_6 = arith.constant 0 : index
    %c0_7 = arith.constant 0 : index
    %8 = vector.load %arg5[%c0_6, %c0_7] : memref<16x1xf32, #tpu.memory_space<vmem>>, vector<16x1xf32>
    %9 = vector.broadcast %8 : vector<16x1xf32> to vector<16x512xf32>
    %10 = arith.addf %7, %9 : vector<16x512xf32>
    %c0_8 = arith.constant 0 : index
    %c0_9 = arith.constant 0 : index
    %11 = vector.load %arg12[%c0_8, %c0_9] : memref<16x512xf32, #tpu.memory_space<vmem>>, vector<16x512xf32>
    %cst = arith.constant 2.500000e-01 : f32
    %12 = vector.broadcast %cst : f32 to vector<16x512xf32>
    %13 = arith.mulf %11, %12 : vector<16x512xf32>
    %14 = arith.addf %13, %10 : vector<16x512xf32>
    %cst_10 = arith.constant 5.000000e-01 : f32
    %15 = vector.broadcast %cst_10 : f32 to vector<16x512xf32>
    %16 = arith.cmpf ogt, %14, %15 : vector<16x512xf32>
    %17 = arith.extui %16 : vector<16x512xi1> to vector<16x512xi32>
    %18 = arith.sitofp %17 : vector<16x512xi32> to vector<16x512xf32>
    %cst_11 = arith.constant 0.000000e+00 : f32
    %19 = vector.broadcast %cst_11 : f32 to vector<16x512xf32>
    %20 = arith.select %16, %19, %14 : vector<16x512xi1>, vector<16x512xf32>
    %c0_12 = arith.constant 0 : index
    %c0_13 = arith.constant 0 : index
    %21 = vector.load %arg12[%c0_12, %c0_13] : memref<16x512xf32, #tpu.memory_space<vmem>>, vector<16x512xf32>
    tpu.vector_store %arg12[%c0_12, %c0_13], %20 {strides = array<i32>} : memref<16x512xf32, #tpu.memory_space<vmem>>, vector<16x512xf32>,
    %c0_14 = arith.constant 0 : index
    %c128 = arith.constant 128 : index
    %22 = vector.load %arg14[%c0_14, %c128] : memref<16x768xf32, #tpu.memory_space<vmem>>, vector<16x512xf32>
    tpu.vector_store %arg14[%c0_14, %c128], %18 {strides = array<i32>} : memref<16x768xf32, #tpu.memory_space<vmem>>, vector<16x512xf32>,
    %c0_15 = arith.constant 0 : index
    %c111 = arith.constant 111 : index
    %23 = vector.load %arg14[%c0_15, %c111] : memref<16x768xf32, #tpu.memory_space<vmem>>, vector<16x512xf32>
    %c0_16 = arith.constant 0 : index
    %c0_17 = arith.constant 0 : index
    %24 = vector.load %arg3[%c0_16, %c0_17] : memref<9x512xi8, #tpu.memory_space<vmem>>, vector<1x512xi8>
    %c0_i8 = arith.constant 0 : i8
    %25 = vector.broadcast %c0_i8 : i8 to vector<1x512xi8>
    %26 = arith.cmpi ne, %24, %25 : vector<1x512xi8>
    %cst_18 = arith.constant 0.000000e+00 : f32
    %27 = vector.shape_cast %26 : vector<1x512xi1> to vector<1x512xi1>
    %28 = vector.broadcast %27 : vector<1x512xi1> to vector<16x512xi1>
    %29 = vector.broadcast %cst_18 : f32 to vector<16x512xf32>
    %30 = arith.select %28, %23, %29 : vector<16x512xi1>, vector<16x512xf32>
    %c0_19 = arith.constant 0 : index
    %c0_20 = arith.constant 0 : index
    %c0_21 = arith.constant 0 : index
    %31 = vector.load %arg6[%c0_19, %c0_20, %c0_21] : memref<9x16x16xf32, #tpu.memory_space<vmem>>, vector<1x16x16xf32>
    %32 = vector.shape_cast %31 : vector<1x16x16xf32> to vector<16x16xf32>
    %cst_22 = arith.constant dense<0.000000e+00> : vector<16x512xf32>
    %33 = tpu.matmul %32, %30, %cst_22 {dimension_numbers = #tpu.dot_dimension_numbers<[1], [0], [0], [1], [0, 0, 1, 1], [], []>} : vector<16x16xf32>, vector<16x512xf32>, vector<16x512xf32> -> vector<16x512xf32>
    %c0_23 = arith.constant 0 : index
    %c112 = arith.constant 112 : index
    %34 = vector.load %arg14[%c0_23, %c112] : memref<16x768xf32, #tpu.memory_space<vmem>>, vector<16x512xf32>
    %c1 = arith.constant 1 : index
    %c0_24 = arith.constant 0 : index
    %35 = vector.load %arg3[%c1, %c0_24] : memref<9x512xi8, #tpu.memory_space<vmem>>, vector<1x512xi8>
    %c0_i8_25 = arith.constant 0 : i8
    %36 = vector.broadcast %c0_i8_25 : i8 to vector<1x512xi8>
    %37 = arith.cmpi ne, %35, %36 : vector<1x512xi8>
    %cst_26 = arith.constant 0.000000e+00 : f32
    %38 = vector.shape_cast %37 : vector<1x512xi1> to vector<1x512xi1>
    %39 = vector.broadcast %38 : vector<1x512xi1> to vector<16x512xi1>
    %40 = vector.broadcast %cst_26 : f32 to vector<16x512xf32>
    %41 = arith.select %39, %34, %40 : vector<16x512xi1>, vector<16x512xf32>
    %c1_27 = arith.constant 1 : index
    %c0_28 = arith.constant 0 : index
    %c0_29 = arith.constant 0 : index
    %42 = vector.load %arg6[%c1_27, %c0_28, %c0_29] : memref<9x16x16xf32, #tpu.memory_space<vmem>>, vector<1x16x16xf32>
    %43 = vector.shape_cast %42 : vector<1x16x16xf32> to vector<16x16xf32>
    %cst_30 = arith.constant dense<0.000000e+00> : vector<16x512xf32>
    %44 = tpu.matmul %43, %41, %cst_30 {dimension_numbers = #tpu.dot_dimension_numbers<[1], [0], [0], [1], [0, 0, 1, 1], [], []>} : vector<16x16xf32>, vector<16x512xf32>, vector<16x512xf32> -> vector<16x512xf32>
    %45 = arith.addf %33, %44 : vector<16x512xf32>
    %c0_31 = arith.constant 0 : index
    %c113 = arith.constant 113 : index
    %46 = vector.load %arg14[%c0_31, %c113] : memref<16x768xf32, #tpu.memory_space<vmem>>, vector<16x512xf32>
    %c2 = arith.constant 2 : index
    %c0_32 = arith.constant 0 : index
    %47 = vector.load %arg3[%c2, %c0_32] : memref<9x512xi8, #tpu.memory_space<vmem>>, vector<1x512xi8>
    %c0_i8_33 = arith.constant 0 : i8
    %48 = vector.broadcast %c0_i8_33 : i8 to vector<1x512xi8>
    %49 = arith.cmpi ne, %47, %48 : vector<1x512xi8>
    %cst_34 = arith.constant 0.000000e+00 : f32
    %50 = vector.shape_cast %49 : vector<1x512xi1> to vector<1x512xi1>
    %51 = vector.broadcast %50 : vector<1x512xi1> to vector<16x512xi1>
    %52 = vector.broadcast %cst_34 : f32 to vector<16x512xf32>
    %53 = arith.select %51, %46, %52 : vector<16x512xi1>, vector<16x512xf32>
    %c2_35 = arith.constant 2 : index
    %c0_36 = arith.constant 0 : index
    %c0_37 = arith.constant 0 : index
    %54 = vector.load %arg6[%c2_35, %c0_36, %c0_37] : memref<9x16x16xf32, #tpu.memory_space<vmem>>, vector<1x16x16xf32>
    %55 = vector.shape_cast %54 : vector<1x16x16xf32> to vector<16x16xf32>
    %cst_38 = arith.constant dense<0.000000e+00> : vector<16x512xf32>
    %56 = tpu.matmul %55, %53, %cst_38 {dimension_numbers = #tpu.dot_dimension_numbers<[1], [0], [0], [1], [0, 0, 1, 1], [], []>} : vector<16x16xf32>, vector<16x512xf32>, vector<16x512xf32> -> vector<16x512xf32>
    %57 = arith.addf %45, %56 : vector<16x512xf32>
    %c0_39 = arith.constant 0 : index
    %c127 = arith.constant 127 : index
    %58 = vector.load %arg14[%c0_39, %c127] : memref<16x768xf32, #tpu.memory_space<vmem>>, vector<16x512xf32>
    %c3 = arith.constant 3 : index
    %c0_40 = arith.constant 0 : index
    %59 = vector.load %arg3[%c3, %c0_40] : memref<9x512xi8, #tpu.memory_space<vmem>>, vector<1x512xi8>
    %c0_i8_41 = arith.constant 0 : i8
    %60 = vector.broadcast %c0_i8_41 : i8 to vector<1x512xi8>
    %61 = arith.cmpi ne, %59, %60 : vector<1x512xi8>
    %cst_42 = arith.constant 0.000000e+00 : f32
    %62 = vector.shape_cast %61 : vector<1x512xi1> to vector<1x512xi1>
    %63 = vector.broadcast %62 : vector<1x512xi1> to vector<16x512xi1>
    %64 = vector.broadcast %cst_42 : f32 to vector<16x512xf32>
    %65 = arith.select %63, %58, %64 : vector<16x512xi1>, vector<16x512xf32>
    %c3_43 = arith.constant 3 : index
    %c0_44 = arith.constant 0 : index
    %c0_45 = arith.constant 0 : index
    %66 = vector.load %arg6[%c3_43, %c0_44, %c0_45] : memref<9x16x16xf32, #tpu.memory_space<vmem>>, vector<1x16x16xf32>
    %67 = vector.shape_cast %66 : vector<1x16x16xf32> to vector<16x16xf32>
    %cst_46 = arith.constant dense<0.000000e+00> : vector<16x512xf32>
    %68 = tpu.matmul %67, %65, %cst_46 {dimension_numbers = #tpu.dot_dimension_numbers<[1], [0], [0], [1], [0, 0, 1, 1], [], []>} : vector<16x16xf32>, vector<16x512xf32>, vector<16x512xf32> -> vector<16x512xf32>
    %69 = arith.addf %57, %68 : vector<16x512xf32>
    %c0_47 = arith.constant 0 : index
    %c128_48 = arith.constant 128 : index
    %70 = vector.load %arg14[%c0_47, %c128_48] : memref<16x768xf32, #tpu.memory_space<vmem>>, vector<16x512xf32>
    %c4 = arith.constant 4 : index
    %c0_49 = arith.constant 0 : index
    %71 = vector.load %arg3[%c4, %c0_49] : memref<9x512xi8, #tpu.memory_space<vmem>>, vector<1x512xi8>
    %c0_i8_50 = arith.constant 0 : i8
    %72 = vector.broadcast %c0_i8_50 : i8 to vector<1x512xi8>
    %73 = arith.cmpi ne, %71, %72 : vector<1x512xi8>
    %cst_51 = arith.constant 0.000000e+00 : f32
    %74 = vector.shape_cast %73 : vector<1x512xi1> to vector<1x512xi1>
    %75 = vector.broadcast %74 : vector<1x512xi1> to vector<16x512xi1>
    %76 = vector.broadcast %cst_51 : f32 to vector<16x512xf32>
    %77 = arith.select %75, %70, %76 : vector<16x512xi1>, vector<16x512xf32>
    %c4_52 = arith.constant 4 : index
    %c0_53 = arith.constant 0 : index
    %c0_54 = arith.constant 0 : index
    %78 = vector.load %arg6[%c4_52, %c0_53, %c0_54] : memref<9x16x16xf32, #tpu.memory_space<vmem>>, vector<1x16x16xf32>
    %79 = vector.shape_cast %78 : vector<1x16x16xf32> to vector<16x16xf32>
    %cst_55 = arith.constant dense<0.000000e+00> : vector<16x512xf32>
    %80 = tpu.matmul %79, %77, %cst_55 {dimension_numbers = #tpu.dot_dimension_numbers<[1], [0], [0], [1], [0, 0, 1, 1], [], []>} : vector<16x16xf32>, vector<16x512xf32>, vector<16x512xf32> -> vector<16x512xf32>
    %81 = arith.addf %69, %80 : vector<16x512xf32>
    %c0_56 = arith.constant 0 : index
    %c129 = arith.constant 129 : index
    %82 = vector.load %arg14[%c0_56, %c129] : memref<16x768xf32, #tpu.memory_space<vmem>>, vector<16x512xf32>
    %c5 = arith.constant 5 : index
    %c0_57 = arith.constant 0 : index
    %83 = vector.load %arg3[%c5, %c0_57] : memref<9x512xi8, #tpu.memory_space<vmem>>, vector<1x512xi8>
    %c0_i8_58 = arith.constant 0 : i8
    %84 = vector.broadcast %c0_i8_58 : i8 to vector<1x512xi8>
    %85 = arith.cmpi ne, %83, %84 : vector<1x512xi8>
    %cst_59 = arith.constant 0.000000e+00 : f32
    %86 = vector.shape_cast %85 : vector<1x512xi1> to vector<1x512xi1>
    %87 = vector.broadcast %86 : vector<1x512xi1> to vector<16x512xi1>
    %88 = vector.broadcast %cst_59 : f32 to vector<16x512xf32>
    %89 = arith.select %87, %82, %88 : vector<16x512xi1>, vector<16x512xf32>
    %c5_60 = arith.constant 5 : index
    %c0_61 = arith.constant 0 : index
    %c0_62 = arith.constant 0 : index
    %90 = vector.load %arg6[%c5_60, %c0_61, %c0_62] : memref<9x16x16xf32, #tpu.memory_space<vmem>>, vector<1x16x16xf32>
    %91 = vector.shape_cast %90 : vector<1x16x16xf32> to vector<16x16xf32>
    %cst_63 = arith.constant dense<0.000000e+00> : vector<16x512xf32>
    %92 = tpu.matmul %91, %89, %cst_63 {dimension_numbers = #tpu.dot_dimension_numbers<[1], [0], [0], [1], [0, 0, 1, 1], [], []>} : vector<16x16xf32>, vector<16x512xf32>, vector<16x512xf32> -> vector<16x512xf32>
    %93 = arith.addf %81, %92 : vector<16x512xf32>
    %c0_64 = arith.constant 0 : index
    %c143 = arith.constant 143 : index
    %94 = vector.load %arg14[%c0_64, %c143] : memref<16x768xf32, #tpu.memory_space<vmem>>, vector<16x512xf32>
    %c6 = arith.constant 6 : index
    %c0_65 = arith.constant 0 : index
    %95 = vector.load %arg3[%c6, %c0_65] : memref<9x512xi8, #tpu.memory_space<vmem>>, vector<1x512xi8>
    %c0_i8_66 = arith.constant 0 : i8
    %96 = vector.broadcast %c0_i8_66 : i8 to vector<1x512xi8>
    %97 = arith.cmpi ne, %95, %96 : vector<1x512xi8>
    %cst_67 = arith.constant 0.000000e+00 : f32
    %98 = vector.shape_cast %97 : vector<1x512xi1> to vector<1x512xi1>
    %99 = vector.broadcast %98 : vector<1x512xi1> to vector<16x512xi1>
    %100 = vector.broadcast %cst_67 : f32 to vector<16x512xf32>
    %101 = arith.select %99, %94, %100 : vector<16x512xi1>, vector<16x512xf32>
    %c6_68 = arith.constant 6 : index
    %c0_69 = arith.constant 0 : index
    %c0_70 = arith.constant 0 : index
    %102 = vector.load %arg6[%c6_68, %c0_69, %c0_70] : memref<9x16x16xf32, #tpu.memory_space<vmem>>, vector<1x16x16xf32>
    %103 = vector.shape_cast %102 : vector<1x16x16xf32> to vector<16x16xf32>
    %cst_71 = arith.constant dense<0.000000e+00> : vector<16x512xf32>
    %104 = tpu.matmul %103, %101, %cst_71 {dimension_numbers = #tpu.dot_dimension_numbers<[1], [0], [0], [1], [0, 0, 1, 1], [], []>} : vector<16x16xf32>, vector<16x512xf32>, vector<16x512xf32> -> vector<16x512xf32>
    %105 = arith.addf %93, %104 : vector<16x512xf32>
    %c0_72 = arith.constant 0 : index
    %c144 = arith.constant 144 : index
    %106 = vector.load %arg14[%c0_72, %c144] : memref<16x768xf32, #tpu.memory_space<vmem>>, vector<16x512xf32>
    %c7 = arith.constant 7 : index
    %c0_73 = arith.constant 0 : index
    %107 = vector.load %arg3[%c7, %c0_73] : memref<9x512xi8, #tpu.memory_space<vmem>>, vector<1x512xi8>
    %c0_i8_74 = arith.constant 0 : i8
    %108 = vector.broadcast %c0_i8_74 : i8 to vector<1x512xi8>
    %109 = arith.cmpi ne, %107, %108 : vector<1x512xi8>
    %cst_75 = arith.constant 0.000000e+00 : f32
    %110 = vector.shape_cast %109 : vector<1x512xi1> to vector<1x512xi1>
    %111 = vector.broadcast %110 : vector<1x512xi1> to vector<16x512xi1>
    %112 = vector.broadcast %cst_75 : f32 to vector<16x512xf32>
    %113 = arith.select %111, %106, %112 : vector<16x512xi1>, vector<16x512xf32>
    %c7_76 = arith.constant 7 : index
    %c0_77 = arith.constant 0 : index
    %c0_78 = arith.constant 0 : index
    %114 = vector.load %arg6[%c7_76, %c0_77, %c0_78] : memref<9x16x16xf32, #tpu.memory_space<vmem>>, vector<1x16x16xf32>
    %115 = vector.shape_cast %114 : vector<1x16x16xf32> to vector<16x16xf32>
    %cst_79 = arith.constant dense<0.000000e+00> : vector<16x512xf32>
    %116 = tpu.matmul %115, %113, %cst_79 {dimension_numbers = #tpu.dot_dimension_numbers<[1], [0], [0], [1], [0, 0, 1, 1], [], []>} : vector<16x16xf32>, vector<16x512xf32>, vector<16x512xf32> -> vector<16x512xf32>
    %117 = arith.addf %105, %116 : vector<16x512xf32>
    %c0_80 = arith.constant 0 : index
    %c145 = arith.constant 145 : index
    %118 = vector.load %arg14[%c0_80, %c145] : memref<16x768xf32, #tpu.memory_space<vmem>>, vector<16x512xf32>
    %c8 = arith.constant 8 : index
    %c0_81 = arith.constant 0 : index
    %119 = vector.load %arg3[%c8, %c0_81] : memref<9x512xi8, #tpu.memory_space<vmem>>, vector<1x512xi8>
    %c0_i8_82 = arith.constant 0 : i8
    %120 = vector.broadcast %c0_i8_82 : i8 to vector<1x512xi8>
    %121 = arith.cmpi ne, %119, %120 : vector<1x512xi8>
    %cst_83 = arith.constant 0.000000e+00 : f32
    %122 = vector.shape_cast %121 : vector<1x512xi1> to vector<1x512xi1>
    %123 = vector.broadcast %122 : vector<1x512xi1> to vector<16x512xi1>
    %124 = vector.broadcast %cst_83 : f32 to vector<16x512xf32>
    %125 = arith.select %123, %118, %124 : vector<16x512xi1>, vector<16x512xf32>
    %c8_84 = arith.constant 8 : index
    %c0_85 = arith.constant 0 : index
    %c0_86 = arith.constant 0 : index
    %126 = vector.load %arg6[%c8_84, %c0_85, %c0_86] : memref<9x16x16xf32, #tpu.memory_space<vmem>>, vector<1x16x16xf32>
    %127 = vector.shape_cast %126 : vector<1x16x16xf32> to vector<16x16xf32>
    %cst_87 = arith.constant dense<0.000000e+00> : vector<16x512xf32>
    %128 = tpu.matmul %127, %125, %cst_87 {dimension_numbers = #tpu.dot_dimension_numbers<[1], [0], [0], [1], [0, 0, 1, 1], [], []>} : vector<16x16xf32>, vector<16x512xf32>, vector<16x512xf32> -> vector<16x512xf32>
    %129 = arith.addf %117, %128 : vector<16x512xf32>
    %c0_88 = arith.constant 0 : index
    %c0_89 = arith.constant 0 : index
    %130 = vector.load %arg7[%c0_88, %c0_89] : memref<16x1xf32, #tpu.memory_space<vmem>>, vector<16x1xf32>
    %131 = vector.broadcast %130 : vector<16x1xf32> to vector<16x512xf32>
    %132 = arith.mulf %129, %131 : vector<16x512xf32>
    %c0_90 = arith.constant 0 : index
    %c0_91 = arith.constant 0 : index
    %133 = vector.load %arg8[%c0_90, %c0_91] : memref<16x1xf32, #tpu.memory_space<vmem>>, vector<16x1xf32>
    %134 = vector.broadcast %133 : vector<16x1xf32> to vector<16x512xf32>
    %135 = arith.addf %132, %134 : vector<16x512xf32>
    %c0_92 = arith.constant 0 : index
    %c0_93 = arith.constant 0 : index
    %136 = vector.load %arg13[%c0_92, %c0_93] : memref<16x512xf32, #tpu.memory_space<vmem>>, vector<16x512xf32>
    %cst_94 = arith.constant 2.500000e-01 : f32
    %137 = vector.broadcast %cst_94 : f32 to vector<16x512xf32>
    %138 = arith.mulf %136, %137 : vector<16x512xf32>
    %139 = arith.addf %138, %135 : vector<16x512xf32>
    %cst_95 = arith.constant 5.000000e-01 : f32
    %140 = vector.broadcast %cst_95 : f32 to vector<16x512xf32>
    %141 = arith.cmpf ogt, %139, %140 : vector<16x512xf32>
    %142 = arith.extui %141 : vector<16x512xi1> to vector<16x512xi32>
    %143 = arith.sitofp %142 : vector<16x512xi32> to vector<16x512xf32>
    %cst_96 = arith.constant 0.000000e+00 : f32
    %144 = vector.broadcast %cst_96 : f32 to vector<16x512xf32>
    %145 = arith.select %141, %144, %139 : vector<16x512xi1>, vector<16x512xf32>
    %c0_97 = arith.constant 0 : index
    %c0_98 = arith.constant 0 : index
    %146 = vector.load %arg13[%c0_97, %c0_98] : memref<16x512xf32, #tpu.memory_space<vmem>>, vector<16x512xf32>
    tpu.vector_store %arg13[%c0_97, %c0_98], %145 {strides = array<i32>} : memref<16x512xf32, #tpu.memory_space<vmem>>, vector<16x512xf32>,
    %c0_99 = arith.constant 0 : index
    %c0_100 = arith.constant 0 : index
    %147 = vector.load %arg9[%c0_99, %c0_100] : memref<8x16xf32, #tpu.memory_space<vmem>>, vector<8x16xf32>
    %cst_101 = arith.constant dense<0.000000e+00> : vector<8x512xf32>
    %148 = tpu.matmul %147, %143, %cst_101 {dimension_numbers = #tpu.dot_dimension_numbers<[1], [0], [0], [1], [0, 0, 1, 1], [], []>} : vector<8x16xf32>, vector<16x512xf32>, vector<8x512xf32> -> vector<8x512xf32>
    %c0_102 = arith.constant 0 : index
    %c0_103 = arith.constant 0 : index
    %149 = vector.load %arg10[%c0_102, %c0_103] : memref<8x1xf32, #tpu.memory_space<vmem>>, vector<8x1xf32>
    %150 = vector.broadcast %149 : vector<8x1xf32> to vector<8x512xf32>
    %151 = arith.addf %148, %150 : vector<8x512xf32>
    %c0_104 = arith.constant 0 : index
    %c0_105 = arith.constant 0 : index
    %c0_106 = arith.constant 0 : index
    %c0_107 = arith.constant 0 : index
    %152 = vector.load %arg11[%c0_104, %c0_105, %c0_106, %c0_107] : memref<1x1x8x512xf32, #tpu.memory_space<vmem>>, vector<1x1x8x512xf32>
    %153 = vector.shape_cast %152 : vector<1x1x8x512xf32> to vector<8x512xf32>
    %154 = vector.shape_cast %151 : vector<8x512xf32> to vector<1x1x8x512xf32>
    tpu.vector_store %arg11[%c0_104, %c0_105, %c0_106, %c0_107], %154 {strides = array<i32>} : memref<1x1x8x512xf32, #tpu.memory_space<vmem>>, vector<1x1x8x512xf32>,
    return
  }
  func.func @transform_0(%arg0: i32, %arg1: i32) -> (i32, i32, i32, i32) {
    %c0_i32 = arith.constant 0 : i32
    %c0_i32_0 = arith.constant 0 : i32
    %c0_i32_1 = arith.constant 0 : i32
    return %arg1, %arg0, %c0_i32, %c0_i32_0 : i32, i32, i32, i32
  }
  func.func @transform_1(%arg0: i32, %arg1: i32) -> (i32, i32) {
    %c0_i32 = arith.constant 0 : i32
    %c0_i32_0 = arith.constant 0 : i32
    %c0_i32_1 = arith.constant 0 : i32
    return %c0_i32, %c0_i32_0 : i32, i32
  }
  func.func @transform_2(%arg0: i32, %arg1: i32) -> (i32, i32) {
    %c0_i32 = arith.constant 0 : i32
    %c0_i32_0 = arith.constant 0 : i32
    %c0_i32_1 = arith.constant 0 : i32
    return %c0_i32, %c0_i32_0 : i32, i32
  }
  func.func @transform_3(%arg0: i32, %arg1: i32) -> (i32, i32) {
    %c0_i32 = arith.constant 0 : i32
    %c0_i32_0 = arith.constant 0 : i32
    %c0_i32_1 = arith.constant 0 : i32
    return %c0_i32, %c0_i32_0 : i32, i32
  }
  func.func @transform_4(%arg0: i32, %arg1: i32) -> (i32, i32, i32) {
    %c0_i32 = arith.constant 0 : i32
    %c0_i32_0 = arith.constant 0 : i32
    %c0_i32_1 = arith.constant 0 : i32
    %c0_i32_2 = arith.constant 0 : i32
    return %c0_i32, %c0_i32_0, %c0_i32_1 : i32, i32, i32
  }
  func.func @transform_5(%arg0: i32, %arg1: i32) -> (i32, i32) {
    %c0_i32 = arith.constant 0 : i32
    %c0_i32_0 = arith.constant 0 : i32
    %c0_i32_1 = arith.constant 0 : i32
    return %c0_i32, %c0_i32_0 : i32, i32
  }
  func.func @transform_6(%arg0: i32, %arg1: i32) -> (i32, i32) {
    %c0_i32 = arith.constant 0 : i32
    %c0_i32_0 = arith.constant 0 : i32
    %c0_i32_1 = arith.constant 0 : i32
    return %c0_i32, %c0_i32_0 : i32, i32
  }
  func.func @transform_7(%arg0: i32, %arg1: i32) -> (i32, i32) {
    %c0_i32 = arith.constant 0 : i32
    %c0_i32_0 = arith.constant 0 : i32
    %c0_i32_1 = arith.constant 0 : i32
    return %c0_i32, %c0_i32_0 : i32, i32
  }
  func.func @transform_8(%arg0: i32, %arg1: i32) -> (i32, i32) {
    %c0_i32 = arith.constant 0 : i32
    %c0_i32_0 = arith.constant 0 : i32
    %c0_i32_1 = arith.constant 0 : i32
    return %c0_i32, %c0_i32_0 : i32, i32
  }
  func.func @transform_9(%arg0: i32, %arg1: i32) -> (i32, i32, i32, i32) {
    %c0_i32 = arith.constant 0 : i32
    %c0_i32_0 = arith.constant 0 : i32
    %c0_i32_1 = arith.constant 0 : i32
    return %arg1, %arg0, %c0_i32, %c0_i32_0 : i32, i32, i32, i32
  }
}

</mosaic_0001>

<llo_original>
// kernel: tpu_custom_call.1
$region0: #{tpu_custom_call.1}
  #allocation0 [shape = 'u32[]', space=smem, size = 0x4, offset = 0x4, fixed_abs, tag = 'smem constant byte address 0x4 - core index']
  #allocation1 [shape = 'u32[144,128]{1,0:T(1,128)}', space=vmem, size = 0x12000, scoped, tag = 'internal scratch']
  #allocation2 [shape = 'f32[16,512]{1,0:T(8,128)}', space=vmem, size = 0x8000, scoped, tag = 'scratch operand']
  #allocation3 [shape = 'f32[16,512]{1,0:T(8,128)}', space=vmem, size = 0x8000, scoped, tag = 'scratch operand']
  #allocation4 [shape = 'f32[16,768]{1,0:T(8,128)}', space=vmem, size = 0xc000, scoped, tag = 'scratch operand']
  %s0 = inlined_call_operand.hbm [shape: f32[4,1,16,512], index: 0, kind: input, shape index: {}]
  %s1 = inlined_call_operand.vmem [shape: s8[9,512], index: 1, kind: input, shape index: {}]
  %s2 = inlined_call_operand.vmem [shape: f32[16,1], index: 2, kind: input, shape index: {}]
  %s3 = inlined_call_operand.vmem [shape: f32[16,1], index: 3, kind: input, shape index: {}]
  %s4 = inlined_call_operand.hbm [shape: f32[9,16,16], index: 4, kind: input, shape index: {}]
  %s5 = inlined_call_operand.vmem [shape: f32[16,1], index: 5, kind: input, shape index: {}]
  %s6 = inlined_call_operand.vmem [shape: f32[16,1], index: 6, kind: input, shape index: {}]
  %s7 = inlined_call_operand.vmem [shape: f32[8,16], index: 7, kind: input, shape index: {}]
  %s8 = inlined_call_operand.vmem [shape: f32[8,1], index: 8, kind: input, shape index: {}]
  %s9 = inlined_call_operand.hbm [shape: f32[4,1,8,512], index: 9, kind: output, shape index: {}]
  %s10 = sld [smem:[#allocation0]]
  $region81: #{tpu_custom_call.1} parent=0
    _
  %s12 = ssub.s32 1, %s10
  %s13 = scalar_select 0, %s12, %s10
  $region1: #{tpu_custom_call.1} parent=0
    #allocation5 [shape = 'u8[65536]{0}', space=vmem, size = 0x10000, scoped, tag = 'input window, operand 0']
    #allocation6 [shape = 's32[2]{0}', space=sflag, size = 0x8, scoped, tag = 'scoped memory for tpu_custom_call.1']
    #allocation7 [shape = 's32[2]{0}', space=sflag, size = 0x8, scoped, tag = 'scoped memory for tpu_custom_call.1']
    #allocation8 [shape = 'u8[73728]{0}', space=vmem, size = 0x12000, scoped, tag = 'input window, operand 4, single buffered']
    #allocation9 [shape = 's32[1]{0}', space=sflag, size = 0x4, scoped, tag = 'scoped memory for tpu_custom_call.1']
    #allocation10 [shape = 'u8[32768]{0}', space=vmem, size = 0x8000, scoped, tag = 'output window, operand 0']
    %14 = vsyncpa [#allocation6], 0
    %s15 = scalar_lea.sflag [#allocation6], 1
    %16 = vsyncpa %s15, 0
    %17 = vsyncpa [#allocation9], 0
    %18 = vsyncpa [#allocation7], 0
    %s19 = scalar_lea.sflag [#allocation7], 1
    %20 = vsyncpa %s19, 0
    loop: start=0, step=1, limit=6
    $region2: #{tpu_custom_call.1} parent=1 // loop_pre_header
      _
    $region3: #{tpu_custom_call.1} parent=1 // loop_header
      %s22 = sphi 0, %s26
      %p23 = scmp.ge.s32.totalorder %s22, 6
      %s29 = sphi 0, %s41
      %s30 = sphi 0, %s37
      %s31 = sphi 0, %s29
      %s32 = sphi 0, %s30
      %s33 = sphi 0, %s31
      %s34 = sphi 0, %s32
      %s46 = sphi 0, %s48
      %s49 = sphi 0, %s46
      %s50 = sphi 0, %s49
      %s66 = sphi 0, %s50
      %s70 = sphi 0, %s70
      %s72 = sphi 0, %s70
      %s73 = sphi 0, %s72
      %s87 = sphi 0, %s73
      %s91 = sphi 0, %s91
      %s93 = sphi 0, %s91
      %s94 = sphi 0, %s93
      %s108 = sphi 0, %s94
      %s112 = sphi 0, %s112
      %s114 = sphi 0, %s112
      %s115 = sphi 0, %s114
      %s129 = sphi 0, %s115
      %s133 = sphi 0, %s133
      %s135 = sphi 0, %s133
      %s136 = sphi 0, %s135
      %s150 = sphi 0, %s136
      %s154 = sphi 0, %s154
      %s156 = sphi 0, %s154
      %s157 = sphi 0, %s156
      %s171 = sphi 0, %s157
      %s175 = sphi 0, %s175
      %s177 = sphi 0, %s175
      %s178 = sphi 0, %s177
      %s192 = sphi 0, %s178
      %s196 = sphi 0, %s196
      %s198 = sphi 0, %s196
      %s199 = sphi 0, %s198
      %s213 = sphi 0, %s199
      %s217 = sphi 0, %s217
      %s219 = sphi 0, %s217
      %s220 = sphi 0, %s219
      %s234 = sphi 0, %s220
      %s242 = sphi 0, %s244
      %s245 = sphi 0, %s242
      %s246 = sphi 0, %s245
      %s262 = sphi 0, %s246
    $region4: #{tpu_custom_call.1} parent=1 // loop_header_branch
      %25 = sbr.rel (%p23) target = $region8
    $region5: #{tpu_custom_call.1} parent=1 // loop_body
      %s27 = ssub.s32 %s22, 1
      %s28 = ssub.s32 %s22, 2
      %s35 = sadd.s32 1, %s30
      %p36 = scmp.ge.s32.totalorder %s35, 4
      %s37 = scalar_select %p36, 0, %s35
      %s38 = sadd.s32 1, %s29
      %s39 = scalar_select %p36, %s38, %s29
      %p40 = scmp.ge.s32.totalorder %s39, 1
      %s41 = scalar_select %p40, 0, %s39
      %s42 = ssub.s32 %s30, %s37
      %s43 = ssub.s32 %s29, %s41
      %s44 = sor.u32 %s42, %s43
      %p45 = scmp.eq.s32.totalorder %s44, 0
      %s47 = sadd.s32 %s46, 1
      %s48 = scalar_select %p45, %s46, %s47
      %p51 = pneg %p45
      %p52 = scmp.eq.s32.totalorder %s22, 3
      %p53 = por %p51, %p52
      %p54 = scmp.ne.s32.totalorder %s46, %s49
      %p55 = scmp.eq.s32.totalorder %s22, 0
      %p56 = por %p54, %p55
      %p57 = scmp.ne.s32.totalorder %s46, %s49
      %p58 = scmp.eq.s32.totalorder %s27, 3
      %p59 = por %p57, %p58
      %p60 = scmp.ne.s32.totalorder %s49, %s50
      %p61 = scmp.eq.s32.totalorder %s27, 0
      %p62 = por %p60, %p61
      %p63 = scmp.ne.s32.totalorder %s49, %s50
      %p64 = scmp.eq.s32.totalorder %s28, 3
      %p65 = por %p63, %p64
      %p67 = scmp.ne.s32.totalorder %s50, %s66
      %p68 = scmp.eq.s32.totalorder %s28, 0
      %p69 = por %p67, %p68
      %s71 = sadd.s32 %s70, 1
      %p74 = scmp.eq.s32.totalorder %s22, 3
      %p75 = scmp.ne.s32.totalorder %s70, %s72
      %p76 = scmp.eq.s32.totalorder %s22, 0
      %p77 = por %p75, %p76
      %p78 = scmp.ne.s32.totalorder %s70, %s72
      %p79 = scmp.eq.s32.totalorder %s27, 3
      %p80 = por %p78, %p79
      %p81 = scmp.ne.s32.totalorder %s72, %s73
      %p82 = scmp.eq.s32.totalorder %s27, 0
      %p83 = por %p81, %p82
      %p84 = scmp.ne.s32.totalorder %s72, %s73
      %p85 = scmp.eq.s32.totalorder %s28, 3
      %p86 = por %p84, %p85
      %p88 = scmp.ne.s32.totalorder %s73, %s87
      %p89 = scmp.eq.s32.totalorder %s28, 0
      %p90 = por %p88, %p89
      %s92 = sadd.s32 %s91, 1
      %p95 = scmp.eq.s32.totalorder %s22, 3
      %p96 = scmp.ne.s32.totalorder %s91, %s93
      %p97 = scmp.eq.s32.totalorder %s22, 0
      %p98 = por %p96, %p97
      %p99 = scmp.ne.s32.totalorder %s91, %s93
      %p100 = scmp.eq.s32.totalorder %s27, 3
      %p101 = por %p99, %p100
      %p102 = scmp.ne.s32.totalorder %s93, %s94
      %p103 = scmp.eq.s32.totalorder %s27, 0
      %p104 = por %p102, %p103
      %p105 = scmp.ne.s32.totalorder %s93, %s94
      %p106 = scmp.eq.s32.totalorder %s28, 3
      %p107 = por %p105, %p106
      %p109 = scmp.ne.s32.totalorder %s94, %s108
      %p110 = scmp.eq.s32.totalorder %s28, 0
      %p111 = por %p109, %p110
      %s113 = sadd.s32 %s112, 1
      %p116 = scmp.eq.s32.totalorder %s22, 3
      %p117 = scmp.ne.s32.totalorder %s112, %s114
      %p118 = scmp.eq.s32.totalorder %s22, 0
      %p119 = por %p117, %p118
      %p120 = scmp.ne.s32.totalorder %s112, %s114
      %p121 = scmp.eq.s32.totalorder %s27, 3
      %p122 = por %p120, %p121
      %p123 = scmp.ne.s32.totalorder %s114, %s115
      %p124 = scmp.eq.s32.totalorder %s27, 0
      %p125 = por %p123, %p124
      %p126 = scmp.ne.s32.totalorder %s114, %s115
      %p127 = scmp.eq.s32.totalorder %s28, 3
      %p128 = por %p126, %p127
      %p130 = scmp.ne.s32.totalorder %s115, %s129
      %p131 = scmp.eq.s32.totalorder %s28, 0
      %p132 = por %p130, %p131
      %s134 = sadd.s32 %s133, 1
      %p137 = scmp.eq.s32.totalorder %s22, 3
      %p138 = scmp.ne.s32.totalorder %s133, %s135
      %p139 = scmp.eq.s32.totalorder %s22, 0
      %p140 = por %p138, %p139
      %p141 = scmp.ne.s32.totalorder %s133, %s135
      %p142 = scmp.eq.s32.totalorder %s27, 3
      %p143 = por %p141, %p142
      %p144 = scmp.ne.s32.totalorder %s135, %s136
      %p145 = scmp.eq.s32.totalorder %s27, 0
      %p146 = por %p144, %p145
      %p147 = scmp.ne.s32.totalorder %s135, %s136
      %p148 = scmp.eq.s32.totalorder %s28, 3
      %p149 = por %p147, %p148
      %p151 = scmp.ne.s32.totalorder %s136, %s150
      %p152 = scmp.eq.s32.totalorder %s28, 0
      %p153 = por %p151, %p152
      %s155 = sadd.s32 %s154, 1
      %p158 = scmp.eq.s32.totalorder %s22, 3
      %p159 = scmp.ne.s32.totalorder %s154, %s156
      %p160 = scmp.eq.s32.totalorder %s22, 0
      %p161 = por %p159, %p160
      %p162 = scmp.ne.s32.totalorder %s154, %s156
      %p163 = scmp.eq.s32.totalorder %s27, 3
      %p164 = por %p162, %p163
      %p165 = scmp.ne.s32.totalorder %s156, %s157
      %p166 = scmp.eq.s32.totalorder %s27, 0
      %p167 = por %p165, %p166
      %p168 = scmp.ne.s32.totalorder %s156, %s157
      %p169 = scmp.eq.s32.totalorder %s28, 3
      %p170 = por %p168, %p169
      %p172 = scmp.ne.s32.totalorder %s157, %s171
      %p173 = scmp.eq.s32.totalorder %s28, 0
      %p174 = por %p172, %p173
      %s176 = sadd.s32 %s175, 1
      %p179 = scmp.eq.s32.totalorder %s22, 3
      %p180 = scmp.ne.s32.totalorder %s175, %s177
      %p181 = scmp.eq.s32.totalorder %s22, 0
      %p182 = por %p180, %p181
      %p183 = scmp.ne.s32.totalorder %s175, %s177
      %p184 = scmp.eq.s32.totalorder %s27, 3
      %p185 = por %p183, %p184
      %p186 = scmp.ne.s32.totalorder %s177, %s178
      %p187 = scmp.eq.s32.totalorder %s27, 0
      %p188 = por %p186, %p187
      %p189 = scmp.ne.s32.totalorder %s177, %s178
      %p190 = scmp.eq.s32.totalorder %s28, 3
      %p191 = por %p189, %p190
      %p193 = scmp.ne.s32.totalorder %s178, %s192
      %p194 = scmp.eq.s32.totalorder %s28, 0
      %p195 = por %p193, %p194
      %s197 = sadd.s32 %s196, 1
      %p200 = scmp.eq.s32.totalorder %s22, 3
      %p201 = scmp.ne.s32.totalorder %s196, %s198
      %p202 = scmp.eq.s32.totalorder %s22, 0
      %p203 = por %p201, %p202
      %p204 = scmp.ne.s32.totalorder %s196, %s198
      %p205 = scmp.eq.s32.totalorder %s27, 3
      %p206 = por %p204, %p205
      %p207 = scmp.ne.s32.totalorder %s198, %s199
      %p208 = scmp.eq.s32.totalorder %s27, 0
      %p209 = por %p207, %p208
      %p210 = scmp.ne.s32.totalorder %s198, %s199
      %p211 = scmp.eq.s32.totalorder %s28, 3
      %p212 = por %p210, %p211
      %p214 = scmp.ne.s32.totalorder %s199, %s213
      %p215 = scmp.eq.s32.totalorder %s28, 0
      %p216 = por %p214, %p215
      %s218 = sadd.s32 %s217, 1
      %p221 = scmp.eq.s32.totalorder %s22, 3
      %p222 = scmp.ne.s32.totalorder %s217, %s219
      %p223 = scmp.eq.s32.totalorder %s22, 0
      %p224 = por %p222, %p223
      %p225 = scmp.ne.s32.totalorder %s217, %s219
      %p226 = scmp.eq.s32.totalorder %s27, 3
      %p227 = por %p225, %p226
      %p228 = scmp.ne.s32.totalorder %s219, %s220
      %p229 = scmp.eq.s32.totalorder %s27, 0
      %p230 = por %p228, %p229
      %p231 = scmp.ne.s32.totalorder %s219, %s220
      %p232 = scmp.eq.s32.totalorder %s28, 3
      %p233 = por %p231, %p232
      %p235 = scmp.ne.s32.totalorder %s220, %s234
      %p236 = scmp.eq.s32.totalorder %s28, 0
      %p237 = por %p235, %p236
      %s238 = ssub.s32 %s30, %s37
      %s239 = ssub.s32 %s29, %s41
      %s240 = sor.u32 %s238, %s239
      %p241 = scmp.eq.s32.totalorder %s240, 0
      %s243 = sadd.s32 %s242, 1
      %s244 = scalar_select %p241, %s242, %s243
      %p247 = pneg %p241
      %p248 = scmp.eq.s32.totalorder %s22, 3
      %p249 = por %p247, %p248
      %p250 = scmp.ne.s32.totalorder %s242, %s245
      %p251 = scmp.eq.s32.totalorder %s22, 0
      %p252 = por %p250, %p251
      %p253 = scmp.ne.s32.totalorder %s242, %s245
      %p254 = scmp.eq.s32.totalorder %s27, 3
      %p255 = por %p253, %p254
      %p256 = scmp.ne.s32.totalorder %s245, %s246
      %p257 = scmp.eq.s32.totalorder %s27, 0
      %p258 = por %p256, %p257
      %p259 = scmp.ne.s32.totalorder %s245, %s246
      %p260 = scmp.eq.s32.totalorder %s28, 3
      %p261 = por %p259, %p260
      %p263 = scmp.ne.s32.totalorder %s246, %s262
      %p264 = scmp.eq.s32.totalorder %s28, 0
      %p265 = por %p263, %p264
      %p266 = scmp.le.s32.totalorder 1, %s22
      %p267 = scmp.lt.s32.totalorder %s22, 5
      %p268 = pnand %p266, %p267
      %p269 = pneg %p268
      // Predicated region
      $region9: #{tpu_custom_call.1} parent=5 // pred_check
        _
      $region10: #{tpu_custom_call.1} parent=5 // pred_check_branch
        %271 = sbr.rel (%p268) target = $region12
      $region11: #{tpu_custom_call.1} parent=5 // pred_region
        %s272 = ssub.s32 %s22, 1
        // Predicated region
        $region13: #{tpu_custom_call.1} parent=11 // pred_check
          %p273 = pneg %p83
        $region14: #{tpu_custom_call.1} parent=11 // pred_check_branch
          %275 = sbr.rel (%p273) target = $region16
        $region15: #{tpu_custom_call.1} parent=11 // pred_region
          _
        $region16: #{tpu_custom_call.1} parent=11 // pred_fallthru
          _
        // Predicated region
        $region17: #{tpu_custom_call.1} parent=11 // pred_check
          %p276 = pneg %p104
        $region18: #{tpu_custom_call.1} parent=11 // pred_check_branch
          %278 = sbr.rel (%p276) target = $region20
        $region19: #{tpu_custom_call.1} parent=11 // pred_region
          _
        $region20: #{tpu_custom_call.1} parent=11 // pred_fallthru
          _
        // Predicated region
        $region21: #{tpu_custom_call.1} parent=11 // pred_check
          %p279 = pneg %p125
        $region22: #{tpu_custom_call.1} parent=11 // pred_check_branch
          %281 = sbr.rel (%p279) target = $region24
        $region23: #{tpu_custom_call.1} parent=11 // pred_region
          _
        $region24: #{tpu_custom_call.1} parent=11 // pred_fallthru
          _
        // Predicated region
        $region25: #{tpu_custom_call.1} parent=11 // pred_check
          %p282 = pneg %p146
        $region26: #{tpu_custom_call.1} parent=11 // pred_check_branch
          %284 = sbr.rel (%p282) target = $region28
        $region27: #{tpu_custom_call.1} parent=11 // pred_region
          %s286 = ssub.s32 2304, 2304
          %287 = vsyncadd [#allocation9], %s286
          %s288 = sshll.u32 [#allocation8], 4
          %s289 = int_to_ptr.vmem [resolvable:$true] %s288
          %294 = dma.hbm_to_vmem [thread:$0]  %s4, 2304, %s289, [#allocation9], 128, 128, 8
        $region28: #{tpu_custom_call.1} parent=11 // pred_fallthru
          _
        // Predicated region
        $region29: #{tpu_custom_call.1} parent=11 // pred_check
          %p295 = pneg %p167
        $region30: #{tpu_custom_call.1} parent=11 // pred_check_branch
          %297 = sbr.rel (%p295) target = $region32
        $region31: #{tpu_custom_call.1} parent=11 // pred_region
          _
        $region32: #{tpu_custom_call.1} parent=11 // pred_fallthru
          _
        // Predicated region
        $region33: #{tpu_custom_call.1} parent=11 // pred_check
          %p298 = pneg %p188
        $region34: #{tpu_custom_call.1} parent=11 // pred_check_branch
          %300 = sbr.rel (%p298) target = $region36
        $region35: #{tpu_custom_call.1} parent=11 // pred_region
          _
        $region36: #{tpu_custom_call.1} parent=11 // pred_fallthru
          _
        // Predicated region
        $region37: #{tpu_custom_call.1} parent=11 // pred_check
          %p301 = pneg %p209
        $region38: #{tpu_custom_call.1} parent=11 // pred_check_branch
          %303 = sbr.rel (%p301) target = $region40
        $region39: #{tpu_custom_call.1} parent=11 // pred_region
          _
        $region40: #{tpu_custom_call.1} parent=11 // pred_fallthru
          _
        // Predicated region
        $region41: #{tpu_custom_call.1} parent=11 // pred_check
          %p304 = pneg %p230
        $region42: #{tpu_custom_call.1} parent=11 // pred_check_branch
          %306 = sbr.rel (%p304) target = $region44
        $region43: #{tpu_custom_call.1} parent=11 // pred_region
          _
        $region44: #{tpu_custom_call.1} parent=11 // pred_fallthru
          _
      $region12: #{tpu_custom_call.1} parent=5 // pred_fallthru
        _
      %p307 = scmp.lt.s32.totalorder %s22, 4
      // Predicated region
      $region45: #{tpu_custom_call.1} parent=5 // pred_check
        %p308 = pneg %p307
      $region46: #{tpu_custom_call.1} parent=5 // pred_check_branch
        %310 = sbr.rel (%p308) target = $region48
      $region47: #{tpu_custom_call.1} parent=5 // pred_region
        // Predicated region
        $region49: #{tpu_custom_call.1} parent=47 // pred_check
          %p311 = pneg %p56
        $region50: #{tpu_custom_call.1} parent=47 // pred_check_branch
          %313 = sbr.rel (%p311) target = $region52
        $region51: #{tpu_custom_call.1} parent=47 // pred_region
          %s314 = sand.u32 %s46, 1
          %s315 = scalar_lea.sflag [#allocation6], %s314
          %s316 = sand.u32 %s46, 1
          %s317 = smul.addr %s316, 64
          %s318 = scalar_lea.vmem [#allocation5], %s317
          %s320 = ssub.s32 1024, 1024
          %321 = vsyncadd %s315, %s320
          %s322 = smul.addr %s29, 8
          %s323 = smul.addr %s30, 8
          %s324 = sadd.s32 %s322, %s323
          %s325 = smul.addr %s324, 128
          %s326 = scalar_lea.hbm %s0, %s325
          %s327 = sshll.u32 %s318, 4
          %s328 = int_to_ptr.vmem [resolvable:$true] %s327
          %333 = dma.hbm_to_vmem [thread:$0]  %s326, 1024, %s328, %s315, 512, 512, 32
        $region52: #{tpu_custom_call.1} parent=47 // pred_fallthru
          _
      $region48: #{tpu_custom_call.1} parent=5 // pred_fallthru
        _
      %p334 = scmp.le.s32.totalorder 1, %s22
      %p335 = scmp.lt.s32.totalorder %s22, 5
      %p336 = pnand %p334, %p335
      %p337 = pneg %p336
      // Predicated region
      $region53: #{tpu_custom_call.1} parent=5 // pred_check
        _
      $region54: #{tpu_custom_call.1} parent=5 // pred_check_branch
        %339 = sbr.rel (%p336) target = $region56
      $region55: #{tpu_custom_call.1} parent=5 // pred_region
        %s340 = ssub.s32 %s22, 1
        %s341 = sand.u32 %s49, 1
        %s342 = scalar_lea.sflag [#allocation6], %s341
        %s343 = sand.u32 %s49, 1
        %s344 = smul.addr %s343, 64
        %s345 = scalar_lea.vmem [#allocation5], %s344
        // Predicated region
        $region57: #{tpu_custom_call.1} parent=55 // pred_check
          %p346 = pneg %p62
        $region58: #{tpu_custom_call.1} parent=55 // pred_check_branch
          %348 = sbr.rel (%p346) target = $region60
        $region59: #{tpu_custom_call.1} parent=55 // pred_region
          %349 = dma.done %s342, 1024
        $region60: #{tpu_custom_call.1} parent=55 // pred_fallthru
          _
        // Predicated region
        $region61: #{tpu_custom_call.1} parent=55 // pred_check
          %p350 = pneg %p146
        $region62: #{tpu_custom_call.1} parent=55 // pred_check_branch
          %352 = sbr.rel (%p350) target = $region64
        $region63: #{tpu_custom_call.1} parent=55 // pred_region
          %353 = dma.done [#allocation9], 2304
        $region64: #{tpu_custom_call.1} parent=55 // pred_fallthru
          _
        %s354 = sand.u32 %s49, 1
        %s355 = scalar_lea.sflag [#allocation6], %s354
        %s356 = sand.u32 %s49, 1
        %s357 = smul.addr %s356, 64
        %s358 = scalar_lea.vmem [#allocation5], %s357
        %p359 = pneg %p62
        %p360 = pneg %p59
        %p361 = pneg %p83
        %p362 = pneg %p80
        %p363 = pneg %p104
        %p364 = pneg %p101
        %p365 = pneg %p125
        %p366 = pneg %p122
        %p367 = pneg %p146
        %p368 = pneg %p143
        %p369 = pneg %p167
        %p370 = pneg %p164
        %p371 = pneg %p188
        %p372 = pneg %p185
        %p373 = pneg %p209
        %p374 = pneg %p206
        %p375 = pneg %p230
        %p376 = pneg %p227
        %p377 = pneg %p258
        %p378 = pneg %p255
        %s379 = sand.u32 %s245, 1
        %s380 = scalar_lea.sflag [#allocation7], %s379
        %s381 = sand.u32 %s245, 1
        %s382 = smul.addr %s381, 32
        %s383 = scalar_lea.vmem [#allocation10], %s382
        %p386 = scmp.eq.s32.totalorder %s32, 0
        // Predicated region
        $region65: #{tpu_custom_call.1} parent=55 // pred_check
          %p387 = pneg %p386
        $region66: #{tpu_custom_call.1} parent=55 // pred_check_branch
          %389 = sbr.rel (%p387) target = $region68
        $region67: #{tpu_custom_call.1} parent=55 // pred_region
          %390 = vst [vmem:[#allocation2] sm:$0xff] 0.0
          %391 = vst [vmem:[#allocation2 + $0x8] sm:$0xff] 0.0
          %392 = vst [vmem:[#allocation2 + $0x10] sm:$0xff] 0.0
          %393 = vst [vmem:[#allocation2 + $0x18] sm:$0xff] 0.0
          %394 = vst [vmem:[#allocation2 + $0x20] sm:$0xff] 0.0
          %395 = vst [vmem:[#allocation2 + $0x28] sm:$0xff] 0.0
          %396 = vst [vmem:[#allocation2 + $0x30] sm:$0xff] 0.0
          %397 = vst [vmem:[#allocation2 + $0x38] sm:$0xff] 0.0
          %398 = vst [vmem:[#allocation3] sm:$0xff] 0.0
          %399 = vst [vmem:[#allocation3 + $0x8] sm:$0xff] 0.0
          %400 = vst [vmem:[#allocation3 + $0x10] sm:$0xff] 0.0
          %401 = vst [vmem:[#allocation3 + $0x18] sm:$0xff] 0.0
          %402 = vst [vmem:[#allocation3 + $0x20] sm:$0xff] 0.0
          %403 = vst [vmem:[#allocation3 + $0x28] sm:$0xff] 0.0
          %404 = vst [vmem:[#allocation3 + $0x30] sm:$0xff] 0.0
          %405 = vst [vmem:[#allocation3 + $0x38] sm:$0xff] 0.0
        $region68: #{tpu_custom_call.1} parent=55 // pred_fallthru
          _
        %v406 = vld [vmem:[%s345] sm:$0xff]
        %v407 = vld [vmem:[%s345 + $0x8] sm:$0xff]
        %v408 = vld [vmem:[%s345 + $0x10] sm:$0xff]
        %v409 = vld [vmem:[%s345 + $0x18] sm:$0xff]
        %v410 = vld [vmem:[%s345 + $0x20] sm:$0xff]
        %v411 = vld [vmem:[%s345 + $0x28] sm:$0xff]
        %v412 = vld [vmem:[%s345 + $0x30] sm:$0xff]
        %v413 = vld [vmem:[%s345 + $0x38] sm:$0xff]
        %v414 = vld [vmem:[%s2] sm:$0xff]
        %v415 = vld [vmem:[%s2 + $0x8] sm:$0xff]
        %417 = vset.pattern.permute.xlu0 0
        %418 = vperm.xlu0 %417, %v414
        %v419 = vpop.permute.xlu0 %418
        %422 = vset.pattern.permute.xlu0 0
        %423 = vperm.xlu0 %422, %v415
        %v424 = vpop.permute.xlu0 %423
        %v426 = vmul.f32 %v406, %v419
        %v427 = vmul.f32 %v407, %v419
        %v428 = vmul.f32 %v408, %v419
        %v429 = vmul.f32 %v409, %v419
        %v430 = vmul.f32 %v410, %v424
        %v431 = vmul.f32 %v411, %v424
        %v432 = vmul.f32 %v412, %v424
        %v433 = vmul.f32 %v413, %v424
        %v434 = vld [vmem:[%s3] sm:$0xff]
        %v435 = vld [vmem:[%s3 + $0x8] sm:$0xff]
        %437 = vset.pattern.permute.xlu0 0
        %438 = vperm.xlu0 %437, %v434
        %v439 = vpop.permute.xlu0 %438
        %442 = vset.pattern.permute.xlu0 0
        %443 = vperm.xlu0 %442, %v435
        %v444 = vpop.permute.xlu0 %443
        %v446 = vadd.f32 %v426, %v439
        %v447 = vadd.f32 %v427, %v439
        %v448 = vadd.f32 %v428, %v439
        %v449 = vadd.f32 %v429, %v439
        %v450 = vadd.f32 %v430, %v444
        %v451 = vadd.f32 %v431, %v444
        %v452 = vadd.f32 %v432, %v444
        %v453 = vadd.f32 %v433, %v444
        %v454 = vld [vmem:[#allocation2] sm:$0xff]
        %v455 = vld [vmem:[#allocation2 + $0x8] sm:$0xff]
        %v456 = vld [vmem:[#allocation2 + $0x10] sm:$0xff]
        %v457 = vld [vmem:[#allocation2 + $0x18] sm:$0xff]
        %v458 = vld [vmem:[#allocation2 + $0x20] sm:$0xff]
        %v459 = vld [vmem:[#allocation2 + $0x28] sm:$0xff]
        %v460 = vld [vmem:[#allocation2 + $0x30] sm:$0xff]
        %v461 = vld [vmem:[#allocation2 + $0x38] sm:$0xff]
        %v462 = vmul.f32 %v454, 0.25
        %v463 = vmul.f32 %v455, 0.25
        %v464 = vmul.f32 %v456, 0.25
        %v465 = vmul.f32 %v457, 0.25
        %v466 = vmul.f32 %v458, 0.25
        %v467 = vmul.f32 %v459, 0.25
        %v468 = vmul.f32 %v460, 0.25
        %v469 = vmul.f32 %v461, 0.25
        %v470 = vadd.f32 %v462, %v446
        %v471 = vadd.f32 %v463, %v447
        %v472 = vadd.f32 %v464, %v448
        %v473 = vadd.f32 %v465, %v449
        %v474 = vadd.f32 %v466, %v450
        %v475 = vadd.f32 %v467, %v451
        %v476 = vadd.f32 %v468, %v452
        %v477 = vadd.f32 %v469, %v453
        %vm478 = vcmp.gt.f32.partialorder %v470, 0.5
        %vm479 = vcmp.gt.f32.partialorder %v471, 0.5
        %vm480 = vcmp.gt.f32.partialorder %v472, 0.5
        %vm481 = vcmp.gt.f32.partialorder %v473, 0.5
        %vm482 = vcmp.gt.f32.partialorder %v474, 0.5
        %vm483 = vcmp.gt.f32.partialorder %v475, 0.5
        %vm484 = vcmp.gt.f32.partialorder %v476, 0.5
        %vm485 = vcmp.gt.f32.partialorder %v477, 0.5
        %v486 = vsel %vm478, 1, 0
        %v487 = vsel %vm479, 1, 0
        %v488 = vsel %vm480, 1, 0
        %v489 = vsel %vm481, 1, 0
        %v490 = vsel %vm482, 1, 0
        %v491 = vsel %vm483, 1, 0
        %v492 = vsel %vm484, 1, 0
        %v493 = vsel %vm485, 1, 0
        %v494 = vcvt.s32.f32 %v486
        %v495 = vcvt.s32.f32 %v487
        %v496 = vcvt.s32.f32 %v488
        %v497 = vcvt.s32.f32 %v489
        %v498 = vcvt.s32.f32 %v490
        %v499 = vcvt.s32.f32 %v491
        %v500 = vcvt.s32.f32 %v492
        %v501 = vcvt.s32.f32 %v493
        %v502 = vsel %vm478, 0.0, %v470
        %v503 = vsel %vm479, 0.0, %v471
        %v504 = vsel %vm480, 0.0, %v472
        %v505 = vsel %vm481, 0.0, %v473
        %v506 = vsel %vm482, 0.0, %v474
        %v507 = vsel %vm483, 0.0, %v475
        %v508 = vsel %vm484, 0.0, %v476
        %v509 = vsel %vm485, 0.0, %v477
        %510 = vst [vmem:[#allocation2] sm:$0xff] %v502
        %511 = vst [vmem:[#allocation2 + $0x8] sm:$0xff] %v503
        %512 = vst [vmem:[#allocation2 + $0x10] sm:$0xff] %v504
        %513 = vst [vmem:[#allocation2 + $0x18] sm:$0xff] %v505
        %514 = vst [vmem:[#allocation2 + $0x20] sm:$0xff] %v506
        %515 = vst [vmem:[#allocation2 + $0x28] sm:$0xff] %v507
        %516 = vst [vmem:[#allocation2 + $0x30] sm:$0xff] %v508
        %517 = vst [vmem:[#allocation2 + $0x38] sm:$0xff] %v509
        %518 = vst [vmem:[#allocation4 + $0x8] sm:$0xff] %v494
        %519 = vst [vmem:[#allocation4 + $0x10] sm:$0xff] %v495
        %520 = vst [vmem:[#allocation4 + $0x18] sm:$0xff] %v496
        %521 = vst [vmem:[#allocation4 + $0x20] sm:$0xff] %v497
        %522 = vst [vmem:[#allocation4 + $0x38] sm:$0xff] %v498
        %523 = vst [vmem:[#allocation4 + $0x40] sm:$0xff] %v499
        %524 = vst [vmem:[#allocation4 + $0x48] sm:$0xff] %v500
        %525 = vst [vmem:[#allocation4 + $0x50] sm:$0xff] %v501
        %v526 = vld [vmem:[#allocation4] sm:$0xff]
        %v527 = vld [vmem:[#allocation4 + $0x8] sm:$0xff]
        %v528 = vld [vmem:[#allocation4 + $0x10] sm:$0xff]
        %v529 = vld [vmem:[#allocation4 + $0x18] sm:$0xff]
        %v530 = vld [vmem:[#allocation4 + $0x20] sm:$0xff]
        %v531 = vld [vmem:[#allocation4 + $0x30] sm:$0xff]
        %v532 = vld [vmem:[#allocation4 + $0x38] sm:$0xff]
        %v533 = vld [vmem:[#allocation4 + $0x40] sm:$0xff]
        %v534 = vld [vmem:[#allocation4 + $0x48] sm:$0xff]
        %v535 = vld [vmem:[#allocation4 + $0x50] sm:$0xff]
        %v536 = vld [vmem:[%s1] sm:$0x55]
        %vm537 = vnez %v536
        %v538 = vsel %vm537, 16843009, 0
        %v539 = vunpack.c.0.s8 %v538
        %v540 = vunpack.c.1.s8 %v538
        %v541 = vunpack.c.2.s8 %v538
        %v542 = vunpack.c.3.s8 %v538
        %vm543 = vcmp.ne.s32.totalorder %v539, 0
        %vm544 = vcmp.ne.s32.totalorder %v540, 0
        %vm545 = vcmp.ne.s32.totalorder %v541, 0
        %vm546 = vcmp.ne.s32.totalorder %v542, 0
        %v547 = vsel %vm543, 1, 0
        %v548 = vsel %vm544, 1, 0
        %v549 = vsel %vm545, 1, 0
        %v550 = vsel %vm546, 1, 0
        %v551 = vlaneseq
        %v552 = vshrl.u32 %v551, 7
        %v553 = vsub.s32 0, %v552
        %v554 = vrot.slane %v547, %v553
        %v555 = vlaneseq
        %v556 = vshrl.u32 %v555, 7
        %v557 = vsub.s32 0, %v556
        %v558 = vrot.slane %v548, %v557
        %v559 = vlaneseq
        %v560 = vshrl.u32 %v559, 7
        %v561 = vsub.s32 0, %v560
        %v562 = vrot.slane %v549, %v561
        %v563 = vlaneseq
        %v564 = vshrl.u32 %v563, 7
        %v565 = vsub.s32 0, %v564
        %v566 = vrot.slane %v550, %v565
        %vm567 = vcmp.eq.s32.totalorder %v554, 1
        %vm568 = vcmp.eq.s32.totalorder %v558, 1
        %vm569 = vcmp.eq.s32.totalorder %v562, 1
        %vm570 = vcmp.eq.s32.totalorder %v566, 1
        %581 = vrot.lane.b32.xlu0 %v526, 17
        %v582 = vpop.permute.xlu0 %581
        %583 = vrot.lane.b32.xlu0 %v527, 17
        %v584 = vpop.permute.xlu0 %583
        %585 = vrot.lane.b32.xlu0 %v528, 17
        %v586 = vpop.permute.xlu0 %585
        %587 = vrot.lane.b32.xlu0 %v529, 17
        %v588 = vpop.permute.xlu0 %587
        %589 = vrot.lane.b32.xlu0 %v530, 17
        %v590 = vpop.permute.xlu0 %589
        %591 = vrot.lane.b32.xlu0 %v531, 17
        %v592 = vpop.permute.xlu0 %591
        %593 = vrot.lane.b32.xlu0 %v532, 17
        %v594 = vpop.permute.xlu0 %593
        %595 = vrot.lane.b32.xlu0 %v533, 17
        %v596 = vpop.permute.xlu0 %595
        %597 = vrot.lane.b32.xlu0 %v534, 17
        %v598 = vpop.permute.xlu0 %597
        %599 = vrot.lane.b32.xlu0 %v535, 17
        %v600 = vpop.permute.xlu0 %599
        %vm601 = vcmask 138240
        %v602 = vsel %vm601, %v582, %v584
        %v603 = vsel %vm601, %v584, %v586
        %v604 = vsel %vm601, %v586, %v588
        %v605 = vsel %vm601, %v588, %v590
        %v606 = vsel %vm601, %v592, %v594
        %v607 = vsel %vm601, %v594, %v596
        %v608 = vsel %vm601, %v596, %v598
        %v609 = vsel %vm601, %v598, %v600
        %v618 = vsel %vm567, %v602, 0.0
        %v619 = vsel %vm568, %v603, 0.0
        %v620 = vsel %vm569, %v604, 0.0
        %v621 = vsel %vm570, %v605, 0.0
        %v622 = vsel %vm567, %v606, 0.0
        %v623 = vsel %vm568, %v607, 0.0
        %v624 = vsel %vm569, %v608, 0.0
        %v625 = vsel %vm570, %v609, 0.0
        %v626 = vld [vmem:[#allocation8] sm:$0xff]
        %v627 = vld [vmem:[#allocation8 + $0x8] sm:$0xff]
        %v628 = vrot.slane %v547, 1
        %v629 = vrot.slane %v548, 1
        %v630 = vrot.slane %v549, 1
        %v631 = vrot.slane %v550, 1
        %vm632 = vcmp.ne.s32.totalorder %v628, 0
        %vm633 = vcmp.ne.s32.totalorder %v629, 0
        %vm634 = vcmp.ne.s32.totalorder %v630, 0
        %vm635 = vcmp.ne.s32.totalorder %v631, 0
        %v636 = vsel %vm632, 1, 0
        %v637 = vsel %vm633, 1, 0
        %v638 = vsel %vm634, 1, 0
        %v639 = vsel %vm635, 1, 0
        %v640 = vlaneseq
        %v641 = vshrl.u32 %v640, 7
        %v642 = vsub.s32 0, %v641
        %v643 = vrot.slane %v636, %v642
        %v644 = vlaneseq
        %v645 = vshrl.u32 %v644, 7
        %v646 = vsub.s32 0, %v645
        %v647 = vrot.slane %v637, %v646
        %v648 = vlaneseq
        %v649 = vshrl.u32 %v648, 7
        %v650 = vsub.s32 0, %v649
        %v651 = vrot.slane %v638, %v650
        %v652 = vlaneseq
        %v653 = vshrl.u32 %v652, 7
        %v654 = vsub.s32 0, %v653
        %v655 = vrot.slane %v639, %v654
        %vm656 = vcmp.eq.s32.totalorder %v643, 1
        %vm657 = vcmp.eq.s32.totalorder %v647, 1
        %vm658 = vcmp.eq.s32.totalorder %v651, 1
        %vm659 = vcmp.eq.s32.totalorder %v655, 1
        %660 = vrot.lane.b32.xlu0 %v526, 16
        %v661 = vpop.permute.xlu0 %660
        %662 = vrot.lane.b32.xlu0 %v527, 16
        %v663 = vpop.permute.xlu0 %662
        %664 = vrot.lane.b32.xlu0 %v528, 16
        %v665 = vpop.permute.xlu0 %664
        %666 = vrot.lane.b32.xlu0 %v529, 16
        %v667 = vpop.permute.xlu0 %666
        %668 = vrot.lane.b32.xlu0 %v530, 16
        %v669 = vpop.permute.xlu0 %668
        %670 = vrot.lane.b32.xlu0 %v531, 16
        %v671 = vpop.permute.xlu0 %670
        %672 = vrot.lane.b32.xlu0 %v532, 16
        %v673 = vpop.permute.xlu0 %672
        %674 = vrot.lane.b32.xlu0 %v533, 16
        %v675 = vpop.permute.xlu0 %674
        %676 = vrot.lane.b32.xlu0 %v534, 16
        %v677 = vpop.permute.xlu0 %676
        %678 = vrot.lane.b32.xlu0 %v535, 16
        %v679 = vpop.permute.xlu0 %678
        %vm680 = vcmask 130048
        %v681 = vsel %vm680, %v661, %v663
        %v682 = vsel %vm680, %v663, %v665
        %v683 = vsel %vm680, %v665, %v667
        %v684 = vsel %vm680, %v667, %v669
        %v685 = vsel %vm680, %v671, %v673
        %v686 = vsel %vm680, %v673, %v675
        %v687 = vsel %vm680, %v675, %v677
        %v688 = vsel %vm680, %v677, %v679
        %v697 = vsel %vm656, %v681, 0.0
        %v698 = vsel %vm657, %v682, 0.0
        %v699 = vsel %vm658, %v683, 0.0
        %v700 = vsel %vm659, %v684, 0.0
        %v701 = vsel %vm656, %v685, 0.0
        %v702 = vsel %vm657, %v686, 0.0
        %v703 = vsel %vm658, %v687, 0.0
        %v704 = vsel %vm659, %v688, 0.0
        %s705 = scalar_lea.vmem [#allocation8], 16
        %v706 = vld [vmem:[%s705] sm:$0xff]
        %v707 = vld [vmem:[%s705 + $0x8] sm:$0xff]
        %v709 = vsel %vm680, %v706, 0
        %v712 = vsel %vm680, %v707, 0
        %714 = vmatprep.subr.mxu0 %v698
        %715 = vmatpush1.msra.mxu0 %v697
        %716 = vmatprep.subr.mxu0 %v702
        %717 = vmatpush1.msra.mxu0 %v701
        %718 = vmatprep.subr.mxu0 0.0
        %719 = vmatpush1.msra.mxu0 0.0
        %720 = vmatprep.subr.mxu0 0.0
        %721 = vmatpush1.msra.mxu0 0.0
        %722 = vmatprep.subr.mxu0 0.0
        %723 = vmatpush1.msra.mxu0 0.0
        %724 = vmatprep.subr.mxu0 0.0
        %725 = vmatpush1.msra.mxu0 0.0
        %726 = vmatprep.subr.mxu0 0.0
        %727 = vmatpush1.msra.mxu0 0.0
        %728 = vmatprep.subr.mxu0 0.0
        %729 = vmatpush1.msra.mxu0 0.0
        %730 = vmatprep.subr.mxu0 0.0
        %731 = vmatpush1.msra.mxu0 0.0
        %732 = vmatprep.subr.mxu0 0.0
        %733 = vmatpush1.msra.mxu0 0.0
        %734 = vmatprep.subr.mxu0 0.0
        %735 = vmatpush1.msra.mxu0 0.0
        %736 = vmatprep.subr.mxu0 0.0
        %737 = vmatpush1.msra.mxu0 0.0
        %738 = vmatprep.subr.mxu0 0.0
        %739 = vmatpush1.msra.mxu0 0.0
        %740 = vmatprep.subr.mxu0 0.0
        %741 = vmatpush1.msra.mxu0 0.0
        %742 = vmatprep.subr.mxu0 0.0
        %743 = vmatpush1.msra.mxu0 0.0
        %744 = vmatprep.subr.mxu0 0.0
        %745 = vmatpush1.msra.mxu0 0.0
        %746 = vmatprep.subr.mxu0 0.0
        %747 = vmatpush1.msra.mxu0 0.0
        %748 = vmatprep.subr.mxu0 0.0
        %749 = vmatpush1.msra.mxu0 0.0
        %750 = vmatprep.subr.mxu0 0.0
        %751 = vmatpush1.msra.mxu0 0.0
        %752 = vmatprep.subr.mxu0 0.0
        %753 = vmatpush1.msra.mxu0 0.0
        %754 = vmatprep.subr.mxu0 0.0
        %755 = vmatpush1.msra.mxu0 0.0
        %756 = vmatprep.subr.mxu0 0.0
        %757 = vmatpush1.msra.mxu0 0.0
        %758 = vmatprep.subr.mxu0 0.0
        %759 = vmatpush1.msra.mxu0 0.0
        %760 = vmatprep.subr.mxu0 0.0
        %761 = vmatpush1.msra.mxu0 0.0
        %762 = vmatprep.subr.mxu0 0.0
        %763 = vmatpush1.msra.mxu0 0.0
        %764 = vmatprep.subr.mxu0 0.0
        %765 = vmatpush1.msra.mxu0 0.0
        %766 = vmatprep.subr.mxu0 0.0
        %767 = vmatpush1.msra.mxu0 0.0
        %768 = vmatprep.subr.mxu0 0.0
        %769 = vmatpush1.msra.mxu0 0.0
        %770 = vmatprep.subr.mxu0 0.0
        %771 = vmatpush1.msra.mxu0 0.0
        %772 = vmatprep.subr.mxu0 0.0
        %773 = vmatpush1.msra.mxu0 0.0
        %774 = vmatprep.subr.mxu0 0.0
        %775 = vmatpush1.msra.mxu0 0.0
        %776 = vmatprep.subr.mxu0 0.0
        %777 = vmatpush1.msra.mxu0 0.0
        %778 = vmatprep.mubr.f32.mxu0 0.0
        %779 = vmatmul.mubr.f32.gmra.mrb[0].mxu0 %v709
        %v780 = vpop.f32.mrb[0].mxu0
        %v781 = vadd.f32 0.0, %v780
        %v782 = vpop.f32.mrb[0].mxu0
        %v783 = vadd.f32 0.0, %v782
        %784 = vmatprep.mubr.f32.mxu0 0.0
        %785 = vmatmul.mubr.f32.gmra.mrb[0].mxu0 %v712
        %v786 = vpop.f32.mrb[0].mxu0
        %v787 = vadd.f32 0.0, %v786
        %v788 = vpop.f32.mrb[0].mxu0
        %v789 = vadd.f32 0.0, %v788
        %790 = vdwg.mxu0
        %791 = vmatprep.subr.mxu0 %v700
        %792 = vmatpush1.msra.mxu0 %v699
        %793 = vmatprep.subr.mxu0 %v704
        %794 = vmatpush1.msra.mxu0 %v703
        %795 = vmatprep.subr.mxu0 0.0
        %796 = vmatpush1.msra.mxu0 0.0
        %797 = vmatprep.subr.mxu0 0.0
        %798 = vmatpush1.msra.mxu0 0.0
        %799 = vmatprep.subr.mxu0 0.0
        %800 = vmatpush1.msra.mxu0 0.0
        %801 = vmatprep.subr.mxu0 0.0
        %802 = vmatpush1.msra.mxu0 0.0
        %803 = vmatprep.subr.mxu0 0.0
        %804 = vmatpush1.msra.mxu0 0.0
        %805 = vmatprep.subr.mxu0 0.0
        %806 = vmatpush1.msra.mxu0 0.0
        %807 = vmatprep.subr.mxu0 0.0
        %808 = vmatpush1.msra.mxu0 0.0
        %809 = vmatprep.subr.mxu0 0.0
        %810 = vmatpush1.msra.mxu0 0.0
        %811 = vmatprep.subr.mxu0 0.0
        %812 = vmatpush1.msra.mxu0 0.0
        %813 = vmatprep.subr.mxu0 0.0
        %814 = vmatpush1.msra.mxu0 0.0
        %815 = vmatprep.subr.mxu0 0.0
        %816 = vmatpush1.msra.mxu0 0.0
        %817 = vmatprep.subr.mxu0 0.0
        %818 = vmatpush1.msra.mxu0 0.0
        %819 = vmatprep.subr.mxu0 0.0
        %820 = vmatpush1.msra.mxu0 0.0
        %821 = vmatprep.subr.mxu0 0.0
        %822 = vmatpush1.msra.mxu0 0.0
        %823 = vmatprep.subr.mxu0 0.0
        %824 = vmatpush1.msra.mxu0 0.0
        %825 = vmatprep.subr.mxu0 0.0
        %826 = vmatpush1.msra.mxu0 0.0
        %827 = vmatprep.subr.mxu0 0.0
        %828 = vmatpush1.msra.mxu0 0.0
        %829 = vmatprep.subr.mxu0 0.0
        %830 = vmatpush1.msra.mxu0 0.0
        %831 = vmatprep.subr.mxu0 0.0
        %832 = vmatpush1.msra.mxu0 0.0
        %833 = vmatprep.subr.mxu0 0.0
        %834 = vmatpush1.msra.mxu0 0.0
        %835 = vmatprep.subr.mxu0 0.0
        %836 = vmatpush1.msra.mxu0 0.0
        %837 = vmatprep.subr.mxu0 0.0
        %838 = vmatpush1.msra.mxu0 0.0
        %839 = vmatprep.subr.mxu0 0.0
        %840 = vmatpush1.msra.mxu0 0.0
        %841 = vmatprep.subr.mxu0 0.0
        %842 = vmatpush1.msra.mxu0 0.0
        %843 = vmatprep.subr.mxu0 0.0
        %844 = vmatpush1.msra.mxu0 0.0
        %845 = vmatprep.subr.mxu0 0.0
        %846 = vmatpush1.msra.mxu0 0.0
        %847 = vmatprep.subr.mxu0 0.0
        %848 = vmatpush1.msra.mxu0 0.0
        %849 = vmatprep.subr.mxu0 0.0
        %850 = vmatpush1.msra.mxu0 0.0
        %851 = vmatprep.subr.mxu0 0.0
        %852 = vmatpush1.msra.mxu0 0.0
        %853 = vmatprep.subr.mxu0 0.0
        %854 = vmatpush1.msra.mxu0 0.0
        %855 = vmatprep.mubr.f32.mxu0 0.0
        %856 = vmatmul.mubr.f32.gmra.mrb[0].mxu0 %v709
        %v857 = vpop.f32.mrb[0].mxu0
        %v858 = vadd.f32 0.0, %v857
        %v859 = vpop.f32.mrb[0].mxu0
        %v860 = vadd.f32 0.0, %v859
        %861 = vmatprep.mubr.f32.mxu0 0.0
        %862 = vmatmul.mubr.f32.gmra.mrb[0].mxu0 %v712
        %v863 = vpop.f32.mrb[0].mxu0
        %v864 = vadd.f32 0.0, %v863
        %v865 = vpop.f32.mrb[0].mxu0
        %v866 = vadd.f32 0.0, %v865
        %867 = vdwg.mxu0
        %v869 = vsel %vm680, %v626, 0
        %v872 = vsel %vm680, %v627, 0
        %874 = vmatprep.subr.mxu0 %v619
        %875 = vmatpush1.msra.mxu0 %v618
        %876 = vmatprep.subr.mxu0 %v623
        %877 = vmatpush1.msra.mxu0 %v622
        %878 = vmatprep.subr.mxu0 0.0
        %879 = vmatpush1.msra.mxu0 0.0
        %880 = vmatprep.subr.mxu0 0.0
        %881 = vmatpush1.msra.mxu0 0.0
        %882 = vmatprep.subr.mxu0 0.0
        %883 = vmatpush1.msra.mxu0 0.0
        %884 = vmatprep.subr.mxu0 0.0
        %885 = vmatpush1.msra.mxu0 0.0
        %886 = vmatprep.subr.mxu0 0.0
        %887 = vmatpush1.msra.mxu0 0.0
        %888 = vmatprep.subr.mxu0 0.0
        %889 = vmatpush1.msra.mxu0 0.0
        %890 = vmatprep.subr.mxu0 0.0
        %891 = vmatpush1.msra.mxu0 0.0
        %892 = vmatprep.subr.mxu0 0.0
        %893 = vmatpush1.msra.mxu0 0.0
        %894 = vmatprep.subr.mxu0 0.0
        %895 = vmatpush1.msra.mxu0 0.0
        %896 = vmatprep.subr.mxu0 0.0
        %897 = vmatpush1.msra.mxu0 0.0
        %898 = vmatprep.subr.mxu0 0.0
        %899 = vmatpush1.msra.mxu0 0.0
        %900 = vmatprep.subr.mxu0 0.0
        %901 = vmatpush1.msra.mxu0 0.0
        %902 = vmatprep.subr.mxu0 0.0
        %903 = vmatpush1.msra.mxu0 0.0
        %904 = vmatprep.subr.mxu0 0.0
        %905 = vmatpush1.msra.mxu0 0.0
        %906 = vmatprep.subr.mxu0 0.0
        %907 = vmatpush1.msra.mxu0 0.0
        %908 = vmatprep.subr.mxu0 0.0
        %909 = vmatpush1.msra.mxu0 0.0
        %910 = vmatprep.subr.mxu0 0.0
        %911 = vmatpush1.msra.mxu0 0.0
        %912 = vmatprep.subr.mxu0 0.0
        %913 = vmatpush1.msra.mxu0 0.0
        %914 = vmatprep.subr.mxu0 0.0
        %915 = vmatpush1.msra.mxu0 0.0
        %916 = vmatprep.subr.mxu0 0.0
        %917 = vmatpush1.msra.mxu0 0.0
        %918 = vmatprep.subr.mxu0 0.0
        %919 = vmatpush1.msra.mxu0 0.0
        %920 = vmatprep.subr.mxu0 0.0
        %921 = vmatpush1.msra.mxu0 0.0
        %922 = vmatprep.subr.mxu0 0.0
        %923 = vmatpush1.msra.mxu0 0.0
        %924 = vmatprep.subr.mxu0 0.0
        %925 = vmatpush1.msra.mxu0 0.0
        %926 = vmatprep.subr.mxu0 0.0
        %927 = vmatpush1.msra.mxu0 0.0
        %928 = vmatprep.subr.mxu0 0.0
        %929 = vmatpush1.msra.mxu0 0.0
        %930 = vmatprep.subr.mxu0 0.0
        %931 = vmatpush1.msra.mxu0 0.0
        %932 = vmatprep.subr.mxu0 0.0
        %933 = vmatpush1.msra.mxu0 0.0
        %934 = vmatprep.subr.mxu0 0.0
        %935 = vmatpush1.msra.mxu0 0.0
        %936 = vmatprep.subr.mxu0 0.0
        %937 = vmatpush1.msra.mxu0 0.0
        %938 = vmatprep.mubr.f32.mxu0 0.0
        %939 = vmatmul.mubr.f32.gmra.mrb[0].mxu0 %v869
        %v940 = vpop.f32.mrb[0].mxu0
        %v941 = vadd.f32 %v781, %v940
        %v942 = vpop.f32.mrb[0].mxu0
        %v943 = vadd.f32 %v783, %v942
        %944 = vmatprep.mubr.f32.mxu0 0.0
        %945 = vmatmul.mubr.f32.gmra.mrb[0].mxu0 %v872
        %v946 = vpop.f32.mrb[0].mxu0
        %v947 = vadd.f32 %v787, %v946
        %v948 = vpop.f32.mrb[0].mxu0
        %v949 = vadd.f32 %v789, %v948
        %950 = vdwg.mxu0
        %951 = vmatprep.subr.mxu0 %v621
        %952 = vmatpush1.msra.mxu0 %v620
        %953 = vmatprep.subr.mxu0 %v625
        %954 = vmatpush1.msra.mxu0 %v624
        %955 = vmatprep.subr.mxu0 0.0
        %956 = vmatpush1.msra.mxu0 0.0
        %957 = vmatprep.subr.mxu0 0.0
        %958 = vmatpush1.msra.mxu0 0.0
        %959 = vmatprep.subr.mxu0 0.0
        %960 = vmatpush1.msra.mxu0 0.0
        %961 = vmatprep.subr.mxu0 0.0
        %962 = vmatpush1.msra.mxu0 0.0
        %963 = vmatprep.subr.mxu0 0.0
        %964 = vmatpush1.msra.mxu0 0.0
        %965 = vmatprep.subr.mxu0 0.0
        %966 = vmatpush1.msra.mxu0 0.0
        %967 = vmatprep.subr.mxu0 0.0
        %968 = vmatpush1.msra.mxu0 0.0
        %969 = vmatprep.subr.mxu0 0.0
        %970 = vmatpush1.msra.mxu0 0.0
        %971 = vmatprep.subr.mxu0 0.0
        %972 = vmatpush1.msra.mxu0 0.0
        %973 = vmatprep.subr.mxu0 0.0
        %974 = vmatpush1.msra.mxu0 0.0
        %975 = vmatprep.subr.mxu0 0.0
        %976 = vmatpush1.msra.mxu0 0.0
        %977 = vmatprep.subr.mxu0 0.0
        %978 = vmatpush1.msra.mxu0 0.0
        %979 = vmatprep.subr.mxu0 0.0
        %980 = vmatpush1.msra.mxu0 0.0
        %981 = vmatprep.subr.mxu0 0.0
        %982 = vmatpush1.msra.mxu0 0.0
        %983 = vmatprep.subr.mxu0 0.0
        %984 = vmatpush1.msra.mxu0 0.0
        %985 = vmatprep.subr.mxu0 0.0
        %986 = vmatpush1.msra.mxu0 0.0
        %987 = vmatprep.subr.mxu0 0.0
        %988 = vmatpush1.msra.mxu0 0.0
        %989 = vmatprep.subr.mxu0 0.0
        %990 = vmatpush1.msra.mxu0 0.0
        %991 = vmatprep.subr.mxu0 0.0
        %992 = vmatpush1.msra.mxu0 0.0
        %993 = vmatprep.subr.mxu0 0.0
        %994 = vmatpush1.msra.mxu0 0.0
        %995 = vmatprep.subr.mxu0 0.0
        %996 = vmatpush1.msra.mxu0 0.0
        %997 = vmatprep.subr.mxu0 0.0
        %998 = vmatpush1.msra.mxu0 0.0
        %999 = vmatprep.subr.mxu0 0.0
        %1000 = vmatpush1.msra.mxu0 0.0
        %1001 = vmatprep.subr.mxu0 0.0
        %1002 = vmatpush1.msra.mxu0 0.0
        %1003 = vmatprep.subr.mxu0 0.0
        %1004 = vmatpush1.msra.mxu0 0.0
        %1005 = vmatprep.subr.mxu0 0.0
        %1006 = vmatpush1.msra.mxu0 0.0
        %1007 = vmatprep.subr.mxu0 0.0
        %1008 = vmatpush1.msra.mxu0 0.0
        %1009 = vmatprep.subr.mxu0 0.0
        %1010 = vmatpush1.msra.mxu0 0.0
        %1011 = vmatprep.subr.mxu0 0.0
        %1012 = vmatpush1.msra.mxu0 0.0
        %1013 = vmatprep.subr.mxu0 0.0
        %1014 = vmatpush1.msra.mxu0 0.0
        %1015 = vmatprep.mubr.f32.mxu0 0.0
        %1016 = vmatmul.mubr.f32.gmra.mrb[0].mxu0 %v869
        %v1017 = vpop.f32.mrb[0].mxu0
        %v1018 = vadd.f32 %v858, %v1017
        %v1019 = vpop.f32.mrb[0].mxu0
        %v1020 = vadd.f32 %v860, %v1019
        %1021 = vmatprep.mubr.f32.mxu0 0.0
        %1022 = vmatmul.mubr.f32.gmra.mrb[0].mxu0 %v872
        %v1023 = vpop.f32.mrb[0].mxu0
        %v1024 = vadd.f32 %v864, %v1023
        %v1025 = vpop.f32.mrb[0].mxu0
        %v1026 = vadd.f32 %v866, %v1025
        %1027 = vdwg.mxu0
        %v1028 = vrot.slane %v547, 2
        %v1029 = vrot.slane %v548, 2
        %v1030 = vrot.slane %v549, 2
        %v1031 = vrot.slane %v550, 2
        %vm1032 = vcmp.ne.s32.totalorder %v1028, 0
        %vm1033 = vcmp.ne.s32.totalorder %v1029, 0
        %vm1034 = vcmp.ne.s32.totalorder %v1030, 0
        %vm1035 = vcmp.ne.s32.totalorder %v1031, 0
        %v1036 = vsel %vm1032, 1, 0
        %v1037 = vsel %vm1033, 1, 0
        %v1038 = vsel %vm1034, 1, 0
        %v1039 = vsel %vm1035, 1, 0
        %v1040 = vlaneseq
        %v1041 = vshrl.u32 %v1040, 7
        %v1042 = vsub.s32 0, %v1041
        %v1043 = vrot.slane %v1036, %v1042
        %v1044 = vlaneseq
        %v1045 = vshrl.u32 %v1044, 7
        %v1046 = vsub.s32 0, %v1045
        %v1047 = vrot.slane %v1037, %v1046
        %v1048 = vlaneseq
        %v1049 = vshrl.u32 %v1048, 7
        %v1050 = vsub.s32 0, %v1049
        %v1051 = vrot.slane %v1038, %v1050
        %v1052 = vlaneseq
        %v1053 = vshrl.u32 %v1052, 7
        %v1054 = vsub.s32 0, %v1053
        %v1055 = vrot.slane %v1039, %v1054
        %vm1056 = vcmp.eq.s32.totalorder %v1043, 1
        %vm1057 = vcmp.eq.s32.totalorder %v1047, 1
        %vm1058 = vcmp.eq.s32.totalorder %v1051, 1
        %vm1059 = vcmp.eq.s32.totalorder %v1055, 1
        %1060 = vrot.lane.b32.xlu0 %v526, 15
        %v1061 = vpop.permute.xlu0 %1060
        %1062 = vrot.lane.b32.xlu0 %v527, 15
        %v1063 = vpop.permute.xlu0 %1062
        %1064 = vrot.lane.b32.xlu0 %v528, 15
        %v1065 = vpop.permute.xlu0 %1064
        %1066 = vrot.lane.b32.xlu0 %v529, 15
        %v1067 = vpop.permute.xlu0 %1066
        %1068 = vrot.lane.b32.xlu0 %v530, 15
        %v1069 = vpop.permute.xlu0 %1068
        %1070 = vrot.lane.b32.xlu0 %v531, 15
        %v1071 = vpop.permute.xlu0 %1070
        %1072 = vrot.lane.b32.xlu0 %v532, 15
        %v1073 = vpop.permute.xlu0 %1072
        %1074 = vrot.lane.b32.xlu0 %v533, 15
        %v1075 = vpop.permute.xlu0 %1074
        %1076 = vrot.lane.b32.xlu0 %v534, 15
        %v1077 = vpop.permute.xlu0 %1076
        %1078 = vrot.lane.b32.xlu0 %v535, 15
        %v1079 = vpop.permute.xlu0 %1078
        %vm1080 = vcmask 121856
        %v1081 = vsel %vm1080, %v1061, %v1063
        %v1082 = vsel %vm1080, %v1063, %v1065
        %v1083 = vsel %vm1080, %v1065, %v1067
        %v1084 = vsel %vm1080, %v1067, %v1069
        %v1085 = vsel %vm1080, %v1071, %v1073
        %v1086 = vsel %vm1080, %v1073, %v1075
        %v1087 = vsel %vm1080, %v1075, %v1077
        %v1088 = vsel %vm1080, %v1077, %v1079
        %v1097 = vsel %vm1056, %v1081, 0.0
        %v1098 = vsel %vm1057, %v1082, 0.0
        %v1099 = vsel %vm1058, %v1083, 0.0
        %v1100 = vsel %vm1059, %v1084, 0.0
        %v1101 = vsel %vm1056, %v1085, 0.0
        %v1102 = vsel %vm1057, %v1086, 0.0
        %v1103 = vsel %vm1058, %v1087, 0.0
        %v1104 = vsel %vm1059, %v1088, 0.0
        %s1105 = scalar_lea.vmem [#allocation8], 32
        %v1106 = vld [vmem:[%s1105] sm:$0xff]
        %v1107 = vld [vmem:[%s1105 + $0x8] sm:$0xff]
        %v1109 = vsel %vm680, %v1106, 0
        %v1112 = vsel %vm680, %v1107, 0
        %1114 = vmatprep.subr.mxu0 %v1098
        %1115 = vmatpush1.msra.mxu0 %v1097
        %1116 = vmatprep.subr.mxu0 %v1102
        %1117 = vmatpush1.msra.mxu0 %v1101
        %1118 = vmatprep.subr.mxu0 0.0
        %1119 = vmatpush1.msra.mxu0 0.0
        %1120 = vmatprep.subr.mxu0 0.0
        %1121 = vmatpush1.msra.mxu0 0.0
        %1122 = vmatprep.subr.mxu0 0.0
        %1123 = vmatpush1.msra.mxu0 0.0
        %1124 = vmatprep.subr.mxu0 0.0
        %1125 = vmatpush1.msra.mxu0 0.0
        %1126 = vmatprep.subr.mxu0 0.0
        %1127 = vmatpush1.msra.mxu0 0.0
        %1128 = vmatprep.subr.mxu0 0.0
        %1129 = vmatpush1.msra.mxu0 0.0
        %1130 = vmatprep.subr.mxu0 0.0
        %1131 = vmatpush1.msra.mxu0 0.0
        %1132 = vmatprep.subr.mxu0 0.0
        %1133 = vmatpush1.msra.mxu0 0.0
        %1134 = vmatprep.subr.mxu0 0.0
        %1135 = vmatpush1.msra.mxu0 0.0
        %1136 = vmatprep.subr.mxu0 0.0
        %1137 = vmatpush1.msra.mxu0 0.0
        %1138 = vmatprep.subr.mxu0 0.0
        %1139 = vmatpush1.msra.mxu0 0.0
        %1140 = vmatprep.subr.mxu0 0.0
        %1141 = vmatpush1.msra.mxu0 0.0
        %1142 = vmatprep.subr.mxu0 0.0
        %1143 = vmatpush1.msra.mxu0 0.0
        %1144 = vmatprep.subr.mxu0 0.0
        %1145 = vmatpush1.msra.mxu0 0.0
        %1146 = vmatprep.subr.mxu0 0.0
        %1147 = vmatpush1.msra.mxu0 0.0
        %1148 = vmatprep.subr.mxu0 0.0
        %1149 = vmatpush1.msra.mxu0 0.0
        %1150 = vmatprep.subr.mxu0 0.0
        %1151 = vmatpush1.msra.mxu0 0.0
        %1152 = vmatprep.subr.mxu0 0.0
        %1153 = vmatpush1.msra.mxu0 0.0
        %1154 = vmatprep.subr.mxu0 0.0
        %1155 = vmatpush1.msra.mxu0 0.0
        %1156 = vmatprep.subr.mxu0 0.0
        %1157 = vmatpush1.msra.mxu0 0.0
        %1158 = vmatprep.subr.mxu0 0.0
        %1159 = vmatpush1.msra.mxu0 0.0
        %1160 = vmatprep.subr.mxu0 0.0
        %1161 = vmatpush1.msra.mxu0 0.0
        %1162 = vmatprep.subr.mxu0 0.0
        %1163 = vmatpush1.msra.mxu0 0.0
        %1164 = vmatprep.subr.mxu0 0.0
        %1165 = vmatpush1.msra.mxu0 0.0
        %1166 = vmatprep.subr.mxu0 0.0
        %1167 = vmatpush1.msra.mxu0 0.0
        %1168 = vmatprep.subr.mxu0 0.0
        %1169 = vmatpush1.msra.mxu0 0.0
        %1170 = vmatprep.subr.mxu0 0.0
        %1171 = vmatpush1.msra.mxu0 0.0
        %1172 = vmatprep.subr.mxu0 0.0
        %1173 = vmatpush1.msra.mxu0 0.0
        %1174 = vmatprep.subr.mxu0 0.0
        %1175 = vmatpush1.msra.mxu0 0.0
        %1176 = vmatprep.subr.mxu0 0.0
        %1177 = vmatpush1.msra.mxu0 0.0
        %1178 = vmatprep.mubr.f32.mxu0 0.0
        %1179 = vmatmul.mubr.f32.gmra.mrb[0].mxu0 %v1109
        %v1180 = vpop.f32.mrb[0].mxu0
        %v1181 = vadd.f32 0.0, %v1180
        %v1182 = vpop.f32.mrb[0].mxu0
        %v1183 = vadd.f32 0.0, %v1182
        %1184 = vmatprep.mubr.f32.mxu0 0.0
        %1185 = vmatmul.mubr.f32.gmra.mrb[0].mxu0 %v1112
        %v1186 = vpop.f32.mrb[0].mxu0
        %v1187 = vadd.f32 0.0, %v1186
        %v1188 = vpop.f32.mrb[0].mxu0
        %v1189 = vadd.f32 0.0, %v1188
        %1190 = vdwg.mxu0
        %1191 = vmatprep.subr.mxu0 %v1100
        %1192 = vmatpush1.msra.mxu0 %v1099
        %1193 = vmatprep.subr.mxu0 %v1104
        %1194 = vmatpush1.msra.mxu0 %v1103
        %1195 = vmatprep.subr.mxu0 0.0
        %1196 = vmatpush1.msra.mxu0 0.0
        %1197 = vmatprep.subr.mxu0 0.0
        %1198 = vmatpush1.msra.mxu0 0.0
        %1199 = vmatprep.subr.mxu0 0.0
        %1200 = vmatpush1.msra.mxu0 0.0
        %1201 = vmatprep.subr.mxu0 0.0
        %1202 = vmatpush1.msra.mxu0 0.0
        %1203 = vmatprep.subr.mxu0 0.0
        %1204 = vmatpush1.msra.mxu0 0.0
        %1205 = vmatprep.subr.mxu0 0.0
        %1206 = vmatpush1.msra.mxu0 0.0
        %1207 = vmatprep.subr.mxu0 0.0
        %1208 = vmatpush1.msra.mxu0 0.0
        %1209 = vmatprep.subr.mxu0 0.0
        %1210 = vmatpush1.msra.mxu0 0.0
        %1211 = vmatprep.subr.mxu0 0.0
        %1212 = vmatpush1.msra.mxu0 0.0
        %1213 = vmatprep.subr.mxu0 0.0
        %1214 = vmatpush1.msra.mxu0 0.0
        %1215 = vmatprep.subr.mxu0 0.0
        %1216 = vmatpush1.msra.mxu0 0.0
        %1217 = vmatprep.subr.mxu0 0.0
        %1218 = vmatpush1.msra.mxu0 0.0
        %1219 = vmatprep.subr.mxu0 0.0
        %1220 = vmatpush1.msra.mxu0 0.0
        %1221 = vmatprep.subr.mxu0 0.0
        %1222 = vmatpush1.msra.mxu0 0.0
        %1223 = vmatprep.subr.mxu0 0.0
        %1224 = vmatpush1.msra.mxu0 0.0
        %1225 = vmatprep.subr.mxu0 0.0
        %1226 = vmatpush1.msra.mxu0 0.0
        %1227 = vmatprep.subr.mxu0 0.0
        %1228 = vmatpush1.msra.mxu0 0.0
        %1229 = vmatprep.subr.mxu0 0.0
        %1230 = vmatpush1.msra.mxu0 0.0
        %1231 = vmatprep.subr.mxu0 0.0
        %1232 = vmatpush1.msra.mxu0 0.0
        %1233 = vmatprep.subr.mxu0 0.0
        %1234 = vmatpush1.msra.mxu0 0.0
        %1235 = vmatprep.subr.mxu0 0.0
        %1236 = vmatpush1.msra.mxu0 0.0
        %1237 = vmatprep.subr.mxu0 0.0
        %1238 = vmatpush1.msra.mxu0 0.0
        %1239 = vmatprep.subr.mxu0 0.0
        %1240 = vmatpush1.msra.mxu0 0.0
        %1241 = vmatprep.subr.mxu0 0.0
        %1242 = vmatpush1.msra.mxu0 0.0
        %1243 = vmatprep.subr.mxu0 0.0
        %1244 = vmatpush1.msra.mxu0 0.0
        %1245 = vmatprep.subr.mxu0 0.0
        %1246 = vmatpush1.msra.mxu0 0.0
        %1247 = vmatprep.subr.mxu0 0.0
        %1248 = vmatpush1.msra.mxu0 0.0
        %1249 = vmatprep.subr.mxu0 0.0
        %1250 = vmatpush1.msra.mxu0 0.0
        %1251 = vmatprep.subr.mxu0 0.0
        %1252 = vmatpush1.msra.mxu0 0.0
        %1253 = vmatprep.subr.mxu0 0.0
        %1254 = vmatpush1.msra.mxu0 0.0
        %1255 = vmatprep.mubr.f32.mxu0 0.0
        %1256 = vmatmul.mubr.f32.gmra.mrb[0].mxu0 %v1109
        %v1257 = vpop.f32.mrb[0].mxu0
        %v1258 = vadd.f32 0.0, %v1257
        %v1259 = vpop.f32.mrb[0].mxu0
        %v1260 = vadd.f32 0.0, %v1259
        %1261 = vmatprep.mubr.f32.mxu0 0.0
        %1262 = vmatmul.mubr.f32.gmra.mrb[0].mxu0 %v1112
        %v1263 = vpop.f32.mrb[0].mxu0
        %v1264 = vadd.f32 0.0, %v1263
        %v1265 = vpop.f32.mrb[0].mxu0
        %v1266 = vadd.f32 0.0, %v1265
        %1267 = vdwg.mxu0
        %v1268 = vadd.f32 %v941, %v1181
        %v1269 = vadd.f32 %v943, %v1183
        %v1270 = vadd.f32 %v1018, %v1258
        %v1271 = vadd.f32 %v1020, %v1260
        %v1272 = vadd.f32 %v947, %v1187
        %v1273 = vadd.f32 %v949, %v1189
        %v1274 = vadd.f32 %v1024, %v1264
        %v1275 = vadd.f32 %v1026, %v1266
        %v1276 = vrot.slane %v547, 3
        %v1277 = vrot.slane %v548, 3
        %v1278 = vrot.slane %v549, 3
        %v1279 = vrot.slane %v550, 3
        %vm1280 = vcmp.ne.s32.totalorder %v1276, 0
        %vm1281 = vcmp.ne.s32.totalorder %v1277, 0
        %vm1282 = vcmp.ne.s32.totalorder %v1278, 0
        %vm1283 = vcmp.ne.s32.totalorder %v1279, 0
        %v1284 = vsel %vm1280, 1, 0
        %v1285 = vsel %vm1281, 1, 0
        %v1286 = vsel %vm1282, 1, 0
        %v1287 = vsel %vm1283, 1, 0
        %v1288 = vlaneseq
        %v1289 = vshrl.u32 %v1288, 7
        %v1290 = vsub.s32 0, %v1289
        %v1291 = vrot.slane %v1284, %v1290
        %v1292 = vlaneseq
        %v1293 = vshrl.u32 %v1292, 7
        %v1294 = vsub.s32 0, %v1293
        %v1295 = vrot.slane %v1285, %v1294
        %v1296 = vlaneseq
        %v1297 = vshrl.u32 %v1296, 7
        %v1298 = vsub.s32 0, %v1297
        %v1299 = vrot.slane %v1286, %v1298
        %v1300 = vlaneseq
        %v1301 = vshrl.u32 %v1300, 7
        %v1302 = vsub.s32 0, %v1301
        %v1303 = vrot.slane %v1287, %v1302
        %vm1304 = vcmp.eq.s32.totalorder %v1291, 1
        %vm1305 = vcmp.eq.s32.totalorder %v1295, 1
        %vm1306 = vcmp.eq.s32.totalorder %v1299, 1
        %vm1307 = vcmp.eq.s32.totalorder %v1303, 1
        %1308 = vrot.lane.b32.xlu0 %v526, 1
        %v1309 = vpop.permute.xlu0 %1308
        %1310 = vrot.lane.b32.xlu0 %v527, 1
        %v1311 = vpop.permute.xlu0 %1310
        %1312 = vrot.lane.b32.xlu0 %v528, 1
        %v1313 = vpop.permute.xlu0 %1312
        %1314 = vrot.lane.b32.xlu0 %v529, 1
        %v1315 = vpop.permute.xlu0 %1314
        %1316 = vrot.lane.b32.xlu0 %v530, 1
        %v1317 = vpop.permute.xlu0 %1316
        %1318 = vrot.lane.b32.xlu0 %v531, 1
        %v1319 = vpop.permute.xlu0 %1318
        %1320 = vrot.lane.b32.xlu0 %v532, 1
        %v1321 = vpop.permute.xlu0 %1320
        %1322 = vrot.lane.b32.xlu0 %v533, 1
        %v1323 = vpop.permute.xlu0 %1322
        %1324 = vrot.lane.b32.xlu0 %v534, 1
        %v1325 = vpop.permute.xlu0 %1324
        %1326 = vrot.lane.b32.xlu0 %v535, 1
        %v1327 = vpop.permute.xlu0 %1326
        %vm1328 = vcmask 7168
        %v1329 = vsel %vm1328, %v1309, %v1311
        %v1330 = vsel %vm1328, %v1311, %v1313
        %v1331 = vsel %vm1328, %v1313, %v1315
        %v1332 = vsel %vm1328, %v1315, %v1317
        %v1333 = vsel %vm1328, %v1319, %v1321
        %v1334 = vsel %vm1328, %v1321, %v1323
        %v1335 = vsel %vm1328, %v1323, %v1325
        %v1336 = vsel %vm1328, %v1325, %v1327
        %v1345 = vsel %vm1304, %v1329, 0.0
        %v1346 = vsel %vm1305, %v1330, 0.0
        %v1347 = vsel %vm1306, %v1331, 0.0
        %v1348 = vsel %vm1307, %v1332, 0.0
        %v1349 = vsel %vm1304, %v1333, 0.0
        %v1350 = vsel %vm1305, %v1334, 0.0
        %v1351 = vsel %vm1306, %v1335, 0.0
        %v1352 = vsel %vm1307, %v1336, 0.0
        %s1353 = scalar_lea.vmem [#allocation8], 48
        %v1354 = vld [vmem:[%s1353] sm:$0xff]
        %v1355 = vld [vmem:[%s1353 + $0x8] sm:$0xff]
        %v1357 = vsel %vm680, %v1354, 0
        %v1360 = vsel %vm680, %v1355, 0
        %1362 = vmatprep.subr.mxu0 %v1346
        %1363 = vmatpush1.msra.mxu0 %v1345
        %1364 = vmatprep.subr.mxu0 %v1350
        %1365 = vmatpush1.msra.mxu0 %v1349
        %1366 = vmatprep.subr.mxu0 0.0
        %1367 = vmatpush1.msra.mxu0 0.0
        %1368 = vmatprep.subr.mxu0 0.0
        %1369 = vmatpush1.msra.mxu0 0.0
        %1370 = vmatprep.subr.mxu0 0.0
        %1371 = vmatpush1.msra.mxu0 0.0
        %1372 = vmatprep.subr.mxu0 0.0
        %1373 = vmatpush1.msra.mxu0 0.0
        %1374 = vmatprep.subr.mxu0 0.0
        %1375 = vmatpush1.msra.mxu0 0.0
        %1376 = vmatprep.subr.mxu0 0.0
        %1377 = vmatpush1.msra.mxu0 0.0
        %1378 = vmatprep.subr.mxu0 0.0
        %1379 = vmatpush1.msra.mxu0 0.0
        %1380 = vmatprep.subr.mxu0 0.0
        %1381 = vmatpush1.msra.mxu0 0.0
        %1382 = vmatprep.subr.mxu0 0.0
        %1383 = vmatpush1.msra.mxu0 0.0
        %1384 = vmatprep.subr.mxu0 0.0
        %1385 = vmatpush1.msra.mxu0 0.0
        %1386 = vmatprep.subr.mxu0 0.0
        %1387 = vmatpush1.msra.mxu0 0.0
        %1388 = vmatprep.subr.mxu0 0.0
        %1389 = vmatpush1.msra.mxu0 0.0
        %1390 = vmatprep.subr.mxu0 0.0
        %1391 = vmatpush1.msra.mxu0 0.0
        %1392 = vmatprep.subr.mxu0 0.0
        %1393 = vmatpush1.msra.mxu0 0.0
        %1394 = vmatprep.subr.mxu0 0.0
        %1395 = vmatpush1.msra.mxu0 0.0
        %1396 = vmatprep.subr.mxu0 0.0
        %1397 = vmatpush1.msra.mxu0 0.0
        %1398 = vmatprep.subr.mxu0 0.0
        %1399 = vmatpush1.msra.mxu0 0.0
        %1400 = vmatprep.subr.mxu0 0.0
        %1401 = vmatpush1.msra.mxu0 0.0
        %1402 = vmatprep.subr.mxu0 0.0
        %1403 = vmatpush1.msra.mxu0 0.0
        %1404 = vmatprep.subr.mxu0 0.0
        %1405 = vmatpush1.msra.mxu0 0.0
        %1406 = vmatprep.subr.mxu0 0.0
        %1407 = vmatpush1.msra.mxu0 0.0
        %1408 = vmatprep.subr.mxu0 0.0
        %1409 = vmatpush1.msra.mxu0 0.0
        %1410 = vmatprep.subr.mxu0 0.0
        %1411 = vmatpush1.msra.mxu0 0.0
        %1412 = vmatprep.subr.mxu0 0.0
        %1413 = vmatpush1.msra.mxu0 0.0
        %1414 = vmatprep.subr.mxu0 0.0
        %1415 = vmatpush1.msra.mxu0 0.0
        %1416 = vmatprep.subr.mxu0 0.0
        %1417 = vmatpush1.msra.mxu0 0.0
        %1418 = vmatprep.subr.mxu0 0.0
        %1419 = vmatpush1.msra.mxu0 0.0
        %1420 = vmatprep.subr.mxu0 0.0
        %1421 = vmatpush1.msra.mxu0 0.0
        %1422 = vmatprep.subr.mxu0 0.0
        %1423 = vmatpush1.msra.mxu0 0.0
        %1424 = vmatprep.subr.mxu0 0.0
        %1425 = vmatpush1.msra.mxu0 0.0
        %1426 = vmatprep.mubr.f32.mxu0 0.0
        %1427 = vmatmul.mubr.f32.gmra.mrb[0].mxu0 %v1357
        %v1428 = vpop.f32.mrb[0].mxu0
        %v1429 = vadd.f32 0.0, %v1428
        %v1430 = vpop.f32.mrb[0].mxu0
        %v1431 = vadd.f32 0.0, %v1430
        %1432 = vmatprep.mubr.f32.mxu0 0.0
        %1433 = vmatmul.mubr.f32.gmra.mrb[0].mxu0 %v1360
        %v1434 = vpop.f32.mrb[0].mxu0
        %v1435 = vadd.f32 0.0, %v1434
        %v1436 = vpop.f32.mrb[0].mxu0
        %v1437 = vadd.f32 0.0, %v1436
        %1438 = vdwg.mxu0
        %1439 = vmatprep.subr.mxu0 %v1348
        %1440 = vmatpush1.msra.mxu0 %v1347
        %1441 = vmatprep.subr.mxu0 %v1352
        %1442 = vmatpush1.msra.mxu0 %v1351
        %1443 = vmatprep.subr.mxu0 0.0
        %1444 = vmatpush1.msra.mxu0 0.0
        %1445 = vmatprep.subr.mxu0 0.0
        %1446 = vmatpush1.msra.mxu0 0.0
        %1447 = vmatprep.subr.mxu0 0.0
        %1448 = vmatpush1.msra.mxu0 0.0
        %1449 = vmatprep.subr.mxu0 0.0
        %1450 = vmatpush1.msra.mxu0 0.0
        %1451 = vmatprep.subr.mxu0 0.0
        %1452 = vmatpush1.msra.mxu0 0.0
        %1453 = vmatprep.subr.mxu0 0.0
        %1454 = vmatpush1.msra.mxu0 0.0
        %1455 = vmatprep.subr.mxu0 0.0
        %1456 = vmatpush1.msra.mxu0 0.0
        %1457 = vmatprep.subr.mxu0 0.0
        %1458 = vmatpush1.msra.mxu0 0.0
        %1459 = vmatprep.subr.mxu0 0.0
        %1460 = vmatpush1.msra.mxu0 0.0
        %1461 = vmatprep.subr.mxu0 0.0
        %1462 = vmatpush1.msra.mxu0 0.0
        %1463 = vmatprep.subr.mxu0 0.0
        %1464 = vmatpush1.msra.mxu0 0.0
        %1465 = vmatprep.subr.mxu0 0.0
        %1466 = vmatpush1.msra.mxu0 0.0
        %1467 = vmatprep.subr.mxu0 0.0
        %1468 = vmatpush1.msra.mxu0 0.0
        %1469 = vmatprep.subr.mxu0 0.0
        %1470 = vmatpush1.msra.mxu0 0.0
        %1471 = vmatprep.subr.mxu0 0.0
        %1472 = vmatpush1.msra.mxu0 0.0
        %1473 = vmatprep.subr.mxu0 0.0
        %1474 = vmatpush1.msra.mxu0 0.0
        %1475 = vmatprep.subr.mxu0 0.0
        %1476 = vmatpush1.msra.mxu0 0.0
        %1477 = vmatprep.subr.mxu0 0.0
        %1478 = vmatpush1.msra.mxu0 0.0
        %1479 = vmatprep.subr.mxu0 0.0
        %1480 = vmatpush1.msra.mxu0 0.0
        %1481 = vmatprep.subr.mxu0 0.0
        %1482 = vmatpush1.msra.mxu0 0.0
        %1483 = vmatprep.subr.mxu0 0.0
        %1484 = vmatpush1.msra.mxu0 0.0
        %1485 = vmatprep.subr.mxu0 0.0
        %1486 = vmatpush1.msra.mxu0 0.0
        %1487 = vmatprep.subr.mxu0 0.0
        %1488 = vmatpush1.msra.mxu0 0.0
        %1489 = vmatprep.subr.mxu0 0.0
        %1490 = vmatpush1.msra.mxu0 0.0
        %1491 = vmatprep.subr.mxu0 0.0
        %1492 = vmatpush1.msra.mxu0 0.0
        %1493 = vmatprep.subr.mxu0 0.0
        %1494 = vmatpush1.msra.mxu0 0.0
        %1495 = vmatprep.subr.mxu0 0.0
        %1496 = vmatpush1.msra.mxu0 0.0
        %1497 = vmatprep.subr.mxu0 0.0
        %1498 = vmatpush1.msra.mxu0 0.0
        %1499 = vmatprep.subr.mxu0 0.0
        %1500 = vmatpush1.msra.mxu0 0.0
        %1501 = vmatprep.subr.mxu0 0.0
        %1502 = vmatpush1.msra.mxu0 0.0
        %1503 = vmatprep.mubr.f32.mxu0 0.0
        %1504 = vmatmul.mubr.f32.gmra.mrb[0].mxu0 %v1357
        %v1505 = vpop.f32.mrb[0].mxu0
        %v1506 = vadd.f32 0.0, %v1505
        %v1507 = vpop.f32.mrb[0].mxu0
        %v1508 = vadd.f32 0.0, %v1507
        %1509 = vmatprep.mubr.f32.mxu0 0.0
        %1510 = vmatmul.mubr.f32.gmra.mrb[0].mxu0 %v1360
        %v1511 = vpop.f32.mrb[0].mxu0
        %v1512 = vadd.f32 0.0, %v1511
        %v1513 = vpop.f32.mrb[0].mxu0
        %v1514 = vadd.f32 0.0, %v1513
        %1515 = vdwg.mxu0
        %v1516 = vadd.f32 %v1268, %v1429
        %v1517 = vadd.f32 %v1269, %v1431
        %v1518 = vadd.f32 %v1270, %v1506
        %v1519 = vadd.f32 %v1271, %v1508
        %v1520 = vadd.f32 %v1272, %v1435
        %v1521 = vadd.f32 %v1273, %v1437
        %v1522 = vadd.f32 %v1274, %v1512
        %v1523 = vadd.f32 %v1275, %v1514
        %v1524 = vld [vmem:[%s1] sm:$0xaa]
        %vm1525 = vnez %v1524
        %v1526 = vsel %vm1525, 16843009, 0
        %v1527 = vunpack.c.0.s8 %v1526
        %v1528 = vunpack.c.1.s8 %v1526
        %v1529 = vunpack.c.2.s8 %v1526
        %v1530 = vunpack.c.3.s8 %v1526
        %vm1531 = vcmp.ne.s32.totalorder %v1527, 0
        %vm1532 = vcmp.ne.s32.totalorder %v1528, 0
        %vm1533 = vcmp.ne.s32.totalorder %v1529, 0
        %vm1534 = vcmp.ne.s32.totalorder %v1530, 0
        %v1535 = vsel %vm1531, 1, 0
        %v1536 = vsel %vm1532, 1, 0
        %v1537 = vsel %vm1533, 1, 0
        %v1538 = vsel %vm1534, 1, 0
        %v1539 = vrot.slane %v1535, 4
        %v1540 = vrot.slane %v1536, 4
        %v1541 = vrot.slane %v1537, 4
        %v1542 = vrot.slane %v1538, 4
        %vm1543 = vcmp.ne.s32.totalorder %v1539, 0
        %vm1544 = vcmp.ne.s32.totalorder %v1540, 0
        %vm1545 = vcmp.ne.s32.totalorder %v1541, 0
        %vm1546 = vcmp.ne.s32.totalorder %v1542, 0
        %v1547 = vsel %vm1543, 1, 0
        %v1548 = vsel %vm1544, 1, 0
        %v1549 = vsel %vm1545, 1, 0
        %v1550 = vsel %vm1546, 1, 0
        %v1551 = vlaneseq
        %v1552 = vshrl.u32 %v1551, 7
        %v1553 = vsub.s32 0, %v1552
        %v1554 = vrot.slane %v1547, %v1553
        %v1555 = vlaneseq
        %v1556 = vshrl.u32 %v1555, 7
        %v1557 = vsub.s32 0, %v1556
        %v1558 = vrot.slane %v1548, %v1557
        %v1559 = vlaneseq
        %v1560 = vshrl.u32 %v1559, 7
        %v1561 = vsub.s32 0, %v1560
        %v1562 = vrot.slane %v1549, %v1561
        %v1563 = vlaneseq
        %v1564 = vshrl.u32 %v1563, 7
        %v1565 = vsub.s32 0, %v1564
        %v1566 = vrot.slane %v1550, %v1565
        %vm1567 = vcmp.eq.s32.totalorder %v1554, 1
        %vm1568 = vcmp.eq.s32.totalorder %v1558, 1
        %vm1569 = vcmp.eq.s32.totalorder %v1562, 1
        %vm1570 = vcmp.eq.s32.totalorder %v1566, 1
        %v1571 = vsel %vm1567, %v527, 0.0
        %v1572 = vsel %vm1568, %v528, 0.0
        %v1573 = vsel %vm1569, %v529, 0.0
        %v1574 = vsel %vm1570, %v530, 0.0
        %v1575 = vsel %vm1567, %v532, 0.0
        %v1576 = vsel %vm1568, %v533, 0.0
        %v1577 = vsel %vm1569, %v534, 0.0
        %v1578 = vsel %vm1570, %v535, 0.0
        %s1579 = scalar_lea.vmem [#allocation8], 64
        %v1580 = vld [vmem:[%s1579] sm:$0xff]
        %v1581 = vld [vmem:[%s1579 + $0x8] sm:$0xff]
        %v1583 = vsel %vm680, %v1580, 0
        %v1586 = vsel %vm680, %v1581, 0
        %1588 = vmatprep.subr.mxu0 %v1572
        %1589 = vmatpush1.msra.mxu0 %v1571
        %1590 = vmatprep.subr.mxu0 %v1576
        %1591 = vmatpush1.msra.mxu0 %v1575
        %1592 = vmatprep.subr.mxu0 0.0
        %1593 = vmatpush1.msra.mxu0 0.0
        %1594 = vmatprep.subr.mxu0 0.0
        %1595 = vmatpush1.msra.mxu0 0.0
        %1596 = vmatprep.subr.mxu0 0.0
        %1597 = vmatpush1.msra.mxu0 0.0
        %1598 = vmatprep.subr.mxu0 0.0
        %1599 = vmatpush1.msra.mxu0 0.0
        %1600 = vmatprep.subr.mxu0 0.0
        %1601 = vmatpush1.msra.mxu0 0.0
        %1602 = vmatprep.subr.mxu0 0.0
        %1603 = vmatpush1.msra.mxu0 0.0
        %1604 = vmatprep.subr.mxu0 0.0
        %1605 = vmatpush1.msra.mxu0 0.0
        %1606 = vmatprep.subr.mxu0 0.0
        %1607 = vmatpush1.msra.mxu0 0.0
        %1608 = vmatprep.subr.mxu0 0.0
        %1609 = vmatpush1.msra.mxu0 0.0
        %1610 = vmatprep.subr.mxu0 0.0
        %1611 = vmatpush1.msra.mxu0 0.0
        %1612 = vmatprep.subr.mxu0 0.0
        %1613 = vmatpush1.msra.mxu0 0.0
        %1614 = vmatprep.subr.mxu0 0.0
        %1615 = vmatpush1.msra.mxu0 0.0
        %1616 = vmatprep.subr.mxu0 0.0
        %1617 = vmatpush1.msra.mxu0 0.0
        %1618 = vmatprep.subr.mxu0 0.0
        %1619 = vmatpush1.msra.mxu0 0.0
        %1620 = vmatprep.subr.mxu0 0.0
        %1621 = vmatpush1.msra.mxu0 0.0
        %1622 = vmatprep.subr.mxu0 0.0
        %1623 = vmatpush1.msra.mxu0 0.0
        %1624 = vmatprep.subr.mxu0 0.0
        %1625 = vmatpush1.msra.mxu0 0.0
        %1626 = vmatprep.subr.mxu0 0.0
        %1627 = vmatpush1.msra.mxu0 0.0
        %1628 = vmatprep.subr.mxu0 0.0
        %1629 = vmatpush1.msra.mxu0 0.0
        %1630 = vmatprep.subr.mxu0 0.0
        %1631 = vmatpush1.msra.mxu0 0.0
        %1632 = vmatprep.subr.mxu0 0.0
        %1633 = vmatpush1.msra.mxu0 0.0
        %1634 = vmatprep.subr.mxu0 0.0
        %1635 = vmatpush1.msra.mxu0 0.0
        %1636 = vmatprep.subr.mxu0 0.0
        %1637 = vmatpush1.msra.mxu0 0.0
        %1638 = vmatprep.subr.mxu0 0.0
        %1639 = vmatpush1.msra.mxu0 0.0
        %1640 = vmatprep.subr.mxu0 0.0
        %1641 = vmatpush1.msra.mxu0 0.0
        %1642 = vmatprep.subr.mxu0 0.0
        %1643 = vmatpush1.msra.mxu0 0.0
        %1644 = vmatprep.subr.mxu0 0.0
        %1645 = vmatpush1.msra.mxu0 0.0
        %1646 = vmatprep.subr.mxu0 0.0
        %1647 = vmatpush1.msra.mxu0 0.0
        %1648 = vmatprep.subr.mxu0 0.0
        %1649 = vmatpush1.msra.mxu0 0.0
        %1650 = vmatprep.subr.mxu0 0.0
        %1651 = vmatpush1.msra.mxu0 0.0
        %1652 = vmatprep.mubr.f32.mxu0 0.0
        %1653 = vmatmul.mubr.f32.gmra.mrb[0].mxu0 %v1583
        %v1654 = vpop.f32.mrb[0].mxu0
        %v1655 = vadd.f32 0.0, %v1654
        %v1656 = vpop.f32.mrb[0].mxu0
        %v1657 = vadd.f32 0.0, %v1656
        %1658 = vmatprep.mubr.f32.mxu0 0.0
        %1659 = vmatmul.mubr.f32.gmra.mrb[0].mxu0 %v1586
        %v1660 = vpop.f32.mrb[0].mxu0
        %v1661 = vadd.f32 0.0, %v1660
        %v1662 = vpop.f32.mrb[0].mxu0
        %v1663 = vadd.f32 0.0, %v1662
        %1664 = vdwg.mxu0
        %1665 = vmatprep.subr.mxu0 %v1574
        %1666 = vmatpush1.msra.mxu0 %v1573
        %1667 = vmatprep.subr.mxu0 %v1578
        %1668 = vmatpush1.msra.mxu0 %v1577
        %1669 = vmatprep.subr.mxu0 0.0
        %1670 = vmatpush1.msra.mxu0 0.0
        %1671 = vmatprep.subr.mxu0 0.0
        %1672 = vmatpush1.msra.mxu0 0.0
        %1673 = vmatprep.subr.mxu0 0.0
        %1674 = vmatpush1.msra.mxu0 0.0
        %1675 = vmatprep.subr.mxu0 0.0
        %1676 = vmatpush1.msra.mxu0 0.0
        %1677 = vmatprep.subr.mxu0 0.0
        %1678 = vmatpush1.msra.mxu0 0.0
        %1679 = vmatprep.subr.mxu0 0.0
        %1680 = vmatpush1.msra.mxu0 0.0
        %1681 = vmatprep.subr.mxu0 0.0
        %1682 = vmatpush1.msra.mxu0 0.0
        %1683 = vmatprep.subr.mxu0 0.0
        %1684 = vmatpush1.msra.mxu0 0.0
        %1685 = vmatprep.subr.mxu0 0.0
        %1686 = vmatpush1.msra.mxu0 0.0
        %1687 = vmatprep.subr.mxu0 0.0
        %1688 = vmatpush1.msra.mxu0 0.0
        %1689 = vmatprep.subr.mxu0 0.0
        %1690 = vmatpush1.msra.mxu0 0.0
        %1691 = vmatprep.subr.mxu0 0.0
        %1692 = vmatpush1.msra.mxu0 0.0
        %1693 = vmatprep.subr.mxu0 0.0
        %1694 = vmatpush1.msra.mxu0 0.0
        %1695 = vmatprep.subr.mxu0 0.0
        %1696 = vmatpush1.msra.mxu0 0.0
        %1697 = vmatprep.subr.mxu0 0.0
        %1698 = vmatpush1.msra.mxu0 0.0
        %1699 = vmatprep.subr.mxu0 0.0
        %1700 = vmatpush1.msra.mxu0 0.0
        %1701 = vmatprep.subr.mxu0 0.0
        %1702 = vmatpush1.msra.mxu0 0.0
        %1703 = vmatprep.subr.mxu0 0.0
        %1704 = vmatpush1.msra.mxu0 0.0
        %1705 = vmatprep.subr.mxu0 0.0
        %1706 = vmatpush1.msra.mxu0 0.0
        %1707 = vmatprep.subr.mxu0 0.0
        %1708 = vmatpush1.msra.mxu0 0.0
        %1709 = vmatprep.subr.mxu0 0.0
        %1710 = vmatpush1.msra.mxu0 0.0
        %1711 = vmatprep.subr.mxu0 0.0
        %1712 = vmatpush1.msra.mxu0 0.0
        %1713 = vmatprep.subr.mxu0 0.0
        %1714 = vmatpush1.msra.mxu0 0.0
        %1715 = vmatprep.subr.mxu0 0.0
        %1716 = vmatpush1.msra.mxu0 0.0
        %1717 = vmatprep.subr.mxu0 0.0
        %1718 = vmatpush1.msra.mxu0 0.0
        %1719 = vmatprep.subr.mxu0 0.0
        %1720 = vmatpush1.msra.mxu0 0.0
        %1721 = vmatprep.subr.mxu0 0.0
        %1722 = vmatpush1.msra.mxu0 0.0
        %1723 = vmatprep.subr.mxu0 0.0
        %1724 = vmatpush1.msra.mxu0 0.0
        %1725 = vmatprep.subr.mxu0 0.0
        %1726 = vmatpush1.msra.mxu0 0.0
        %1727 = vmatprep.subr.mxu0 0.0
        %1728 = vmatpush1.msra.mxu0 0.0
        %1729 = vmatprep.mubr.f32.mxu0 0.0
        %1730 = vmatmul.mubr.f32.gmra.mrb[0].mxu0 %v1583
        %v1731 = vpop.f32.mrb[0].mxu0
        %v1732 = vadd.f32 0.0, %v1731
        %v1733 = vpop.f32.mrb[0].mxu0
        %v1734 = vadd.f32 0.0, %v1733
        %1735 = vmatprep.mubr.f32.mxu0 0.0
        %1736 = vmatmul.mubr.f32.gmra.mrb[0].mxu0 %v1586
        %v1737 = vpop.f32.mrb[0].mxu0
        %v1738 = vadd.f32 0.0, %v1737
        %v1739 = vpop.f32.mrb[0].mxu0
        %v1740 = vadd.f32 0.0, %v1739
        %1741 = vdwg.mxu0
        %v1742 = vadd.f32 %v1516, %v1655
        %v1743 = vadd.f32 %v1517, %v1657
        %v1744 = vadd.f32 %v1518, %v1732
        %v1745 = vadd.f32 %v1519, %v1734
        %v1746 = vadd.f32 %v1520, %v1661
        %v1747 = vadd.f32 %v1521, %v1663
        %v1748 = vadd.f32 %v1522, %v1738
        %v1749 = vadd.f32 %v1523, %v1740
        %v1750 = vld [vmem:[#allocation4 + $0x8] sm:$0xff]
        %v1751 = vld [vmem:[#allocation4 + $0x10] sm:$0xff]
        %v1752 = vld [vmem:[#allocation4 + $0x18] sm:$0xff]
        %v1753 = vld [vmem:[#allocation4 + $0x20] sm:$0xff]
        %v1754 = vld [vmem:[#allocation4 + $0x28] sm:$0xff]
        %v1755 = vld [vmem:[#allocation4 + $0x38] sm:$0xff]
        %v1756 = vld [vmem:[#allocation4 + $0x40] sm:$0xff]
        %v1757 = vld [vmem:[#allocation4 + $0x48] sm:$0xff]
        %v1758 = vld [vmem:[#allocation4 + $0x50] sm:$0xff]
        %v1759 = vld [vmem:[#allocation4 + $0x58] sm:$0xff]
        %v1760 = vrot.slane %v1535, 5
        %v1761 = vrot.slane %v1536, 5
        %v1762 = vrot.slane %v1537, 5
        %v1763 = vrot.slane %v1538, 5
        %vm1764 = vcmp.ne.s32.totalorder %v1760, 0
        %vm1765 = vcmp.ne.s32.totalorder %v1761, 0
        %vm1766 = vcmp.ne.s32.totalorder %v1762, 0
        %vm1767 = vcmp.ne.s32.totalorder %v1763, 0
        %v1768 = vsel %vm1764, 1, 0
        %v1769 = vsel %vm1765, 1, 0
        %v1770 = vsel %vm1766, 1, 0
        %v1771 = vsel %vm1767, 1, 0
        %v1772 = vlaneseq
        %v1773 = vshrl.u32 %v1772, 7
        %v1774 = vsub.s32 0, %v1773
        %v1775 = vrot.slane %v1768, %v1774
        %v1776 = vlaneseq
        %v1777 = vshrl.u32 %v1776, 7
        %v1778 = vsub.s32 0, %v1777
        %v1779 = vrot.slane %v1769, %v1778
        %v1780 = vlaneseq
        %v1781 = vshrl.u32 %v1780, 7
        %v1782 = vsub.s32 0, %v1781
        %v1783 = vrot.slane %v1770, %v1782
        %v1784 = vlaneseq
        %v1785 = vshrl.u32 %v1784, 7
        %v1786 = vsub.s32 0, %v1785
        %v1787 = vrot.slane %v1771, %v1786
        %vm1788 = vcmp.eq.s32.totalorder %v1775, 1
        %vm1789 = vcmp.eq.s32.totalorder %v1779, 1
        %vm1790 = vcmp.eq.s32.totalorder %v1783, 1
        %vm1791 = vcmp.eq.s32.totalorder %v1787, 1
        %1802 = vrot.lane.b32.xlu0 %v1750, 127
        %v1803 = vpop.permute.xlu0 %1802
        %1804 = vrot.lane.b32.xlu0 %v1751, 127
        %v1805 = vpop.permute.xlu0 %1804
        %1806 = vrot.lane.b32.xlu0 %v1752, 127
        %v1807 = vpop.permute.xlu0 %1806
        %1808 = vrot.lane.b32.xlu0 %v1753, 127
        %v1809 = vpop.permute.xlu0 %1808
        %1810 = vrot.lane.b32.xlu0 %v1754, 127
        %v1811 = vpop.permute.xlu0 %1810
        %1812 = vrot.lane.b32.xlu0 %v1755, 127
        %v1813 = vpop.permute.xlu0 %1812
        %1814 = vrot.lane.b32.xlu0 %v1756, 127
        %v1815 = vpop.permute.xlu0 %1814
        %1816 = vrot.lane.b32.xlu0 %v1757, 127
        %v1817 = vpop.permute.xlu0 %1816
        %1818 = vrot.lane.b32.xlu0 %v1758, 127
        %v1819 = vpop.permute.xlu0 %1818
        %1820 = vrot.lane.b32.xlu0 %v1759, 127
        %v1821 = vpop.permute.xlu0 %1820
        %vm1822 = vcmask 1039360
        %v1823 = vsel %vm1822, %v1803, %v1805
        %v1824 = vsel %vm1822, %v1805, %v1807
        %v1825 = vsel %vm1822, %v1807, %v1809
        %v1826 = vsel %vm1822, %v1809, %v1811
        %v1827 = vsel %vm1822, %v1813, %v1815
        %v1828 = vsel %vm1822, %v1815, %v1817
        %v1829 = vsel %vm1822, %v1817, %v1819
        %v1830 = vsel %vm1822, %v1819, %v1821
        %v1839 = vsel %vm1788, %v1823, 0.0
        %v1840 = vsel %vm1789, %v1824, 0.0
        %v1841 = vsel %vm1790, %v1825, 0.0
        %v1842 = vsel %vm1791, %v1826, 0.0
        %v1843 = vsel %vm1788, %v1827, 0.0
        %v1844 = vsel %vm1789, %v1828, 0.0
        %v1845 = vsel %vm1790, %v1829, 0.0
        %v1846 = vsel %vm1791, %v1830, 0.0
        %s1847 = scalar_lea.vmem [#allocation8], 80
        %v1848 = vld [vmem:[%s1847] sm:$0xff]
        %v1849 = vld [vmem:[%s1847 + $0x8] sm:$0xff]
        %v1851 = vsel %vm680, %v1848, 0
        %v1854 = vsel %vm680, %v1849, 0
        %1856 = vmatprep.subr.mxu0 %v1840
        %1857 = vmatpush1.msra.mxu0 %v1839
        %1858 = vmatprep.subr.mxu0 %v1844
        %1859 = vmatpush1.msra.mxu0 %v1843
        %1860 = vmatprep.subr.mxu0 0.0
        %1861 = vmatpush1.msra.mxu0 0.0
        %1862 = vmatprep.subr.mxu0 0.0
        %1863 = vmatpush1.msra.mxu0 0.0
        %1864 = vmatprep.subr.mxu0 0.0
        %1865 = vmatpush1.msra.mxu0 0.0
        %1866 = vmatprep.subr.mxu0 0.0
        %1867 = vmatpush1.msra.mxu0 0.0
        %1868 = vmatprep.subr.mxu0 0.0
        %1869 = vmatpush1.msra.mxu0 0.0
        %1870 = vmatprep.subr.mxu0 0.0
        %1871 = vmatpush1.msra.mxu0 0.0
        %1872 = vmatprep.subr.mxu0 0.0
        %1873 = vmatpush1.msra.mxu0 0.0
        %1874 = vmatprep.subr.mxu0 0.0
        %1875 = vmatpush1.msra.mxu0 0.0
        %1876 = vmatprep.subr.mxu0 0.0
        %1877 = vmatpush1.msra.mxu0 0.0
        %1878 = vmatprep.subr.mxu0 0.0
        %1879 = vmatpush1.msra.mxu0 0.0
        %1880 = vmatprep.subr.mxu0 0.0
        %1881 = vmatpush1.msra.mxu0 0.0
        %1882 = vmatprep.subr.mxu0 0.0
        %1883 = vmatpush1.msra.mxu0 0.0
        %1884 = vmatprep.subr.mxu0 0.0
        %1885 = vmatpush1.msra.mxu0 0.0
        %1886 = vmatprep.subr.mxu0 0.0
        %1887 = vmatpush1.msra.mxu0 0.0
        %1888 = vmatprep.subr.mxu0 0.0
        %1889 = vmatpush1.msra.mxu0 0.0
        %1890 = vmatprep.subr.mxu0 0.0
        %1891 = vmatpush1.msra.mxu0 0.0
        %1892 = vmatprep.subr.mxu0 0.0
        %1893 = vmatpush1.msra.mxu0 0.0
        %1894 = vmatprep.subr.mxu0 0.0
        %1895 = vmatpush1.msra.mxu0 0.0
        %1896 = vmatprep.subr.mxu0 0.0
        %1897 = vmatpush1.msra.mxu0 0.0
        %1898 = vmatprep.subr.mxu0 0.0
        %1899 = vmatpush1.msra.mxu0 0.0
        %1900 = vmatprep.subr.mxu0 0.0
        %1901 = vmatpush1.msra.mxu0 0.0
        %1902 = vmatprep.subr.mxu0 0.0
        %1903 = vmatpush1.msra.mxu0 0.0
        %1904 = vmatprep.subr.mxu0 0.0
        %1905 = vmatpush1.msra.mxu0 0.0
        %1906 = vmatprep.subr.mxu0 0.0
        %1907 = vmatpush1.msra.mxu0 0.0
        %1908 = vmatprep.subr.mxu0 0.0
        %1909 = vmatpush1.msra.mxu0 0.0
        %1910 = vmatprep.subr.mxu0 0.0
        %1911 = vmatpush1.msra.mxu0 0.0
        %1912 = vmatprep.subr.mxu0 0.0
        %1913 = vmatpush1.msra.mxu0 0.0
        %1914 = vmatprep.subr.mxu0 0.0
        %1915 = vmatpush1.msra.mxu0 0.0
        %1916 = vmatprep.subr.mxu0 0.0
        %1917 = vmatpush1.msra.mxu0 0.0
        %1918 = vmatprep.subr.mxu0 0.0
        %1919 = vmatpush1.msra.mxu0 0.0
        %1920 = vmatprep.mubr.f32.mxu0 0.0
        %1921 = vmatmul.mubr.f32.gmra.mrb[0].mxu0 %v1851
        %v1922 = vpop.f32.mrb[0].mxu0
        %v1923 = vadd.f32 0.0, %v1922
        %v1924 = vpop.f32.mrb[0].mxu0
        %v1925 = vadd.f32 0.0, %v1924
        %1926 = vmatprep.mubr.f32.mxu0 0.0
        %1927 = vmatmul.mubr.f32.gmra.mrb[0].mxu0 %v1854
        %v1928 = vpop.f32.mrb[0].mxu0
        %v1929 = vadd.f32 0.0, %v1928
        %v1930 = vpop.f32.mrb[0].mxu0
        %v1931 = vadd.f32 0.0, %v1930
        %1932 = vdwg.mxu0
        %1933 = vmatprep.subr.mxu0 %v1842
        %1934 = vmatpush1.msra.mxu0 %v1841
        %1935 = vmatprep.subr.mxu0 %v1846
        %1936 = vmatpush1.msra.mxu0 %v1845
        %1937 = vmatprep.subr.mxu0 0.0
        %1938 = vmatpush1.msra.mxu0 0.0
        %1939 = vmatprep.subr.mxu0 0.0
        %1940 = vmatpush1.msra.mxu0 0.0
        %1941 = vmatprep.subr.mxu0 0.0
        %1942 = vmatpush1.msra.mxu0 0.0
        %1943 = vmatprep.subr.mxu0 0.0
        %1944 = vmatpush1.msra.mxu0 0.0
        %1945 = vmatprep.subr.mxu0 0.0
        %1946 = vmatpush1.msra.mxu0 0.0
        %1947 = vmatprep.subr.mxu0 0.0
        %1948 = vmatpush1.msra.mxu0 0.0
        %1949 = vmatprep.subr.mxu0 0.0
        %1950 = vmatpush1.msra.mxu0 0.0
        %1951 = vmatprep.subr.mxu0 0.0
        %1952 = vmatpush1.msra.mxu0 0.0
        %1953 = vmatprep.subr.mxu0 0.0
        %1954 = vmatpush1.msra.mxu0 0.0
        %1955 = vmatprep.subr.mxu0 0.0
        %1956 = vmatpush1.msra.mxu0 0.0
        %1957 = vmatprep.subr.mxu0 0.0
        %1958 = vmatpush1.msra.mxu0 0.0
        %1959 = vmatprep.subr.mxu0 0.0
        %1960 = vmatpush1.msra.mxu0 0.0
        %1961 = vmatprep.subr.mxu0 0.0
        %1962 = vmatpush1.msra.mxu0 0.0
        %1963 = vmatprep.subr.mxu0 0.0
        %1964 = vmatpush1.msra.mxu0 0.0
        %1965 = vmatprep.subr.mxu0 0.0
        %1966 = vmatpush1.msra.mxu0 0.0
        %1967 = vmatprep.subr.mxu0 0.0
        %1968 = vmatpush1.msra.mxu0 0.0
        %1969 = vmatprep.subr.mxu0 0.0
        %1970 = vmatpush1.msra.mxu0 0.0
        %1971 = vmatprep.subr.mxu0 0.0
        %1972 = vmatpush1.msra.mxu0 0.0
        %1973 = vmatprep.subr.mxu0 0.0
        %1974 = vmatpush1.msra.mxu0 0.0
        %1975 = vmatprep.subr.mxu0 0.0
        %1976 = vmatpush1.msra.mxu0 0.0
        %1977 = vmatprep.subr.mxu0 0.0
        %1978 = vmatpush1.msra.mxu0 0.0
        %1979 = vmatprep.subr.mxu0 0.0
        %1980 = vmatpush1.msra.mxu0 0.0
        %1981 = vmatprep.subr.mxu0 0.0
        %1982 = vmatpush1.msra.mxu0 0.0
        %1983 = vmatprep.subr.mxu0 0.0
        %1984 = vmatpush1.msra.mxu0 0.0
        %1985 = vmatprep.subr.mxu0 0.0
        %1986 = vmatpush1.msra.mxu0 0.0
        %1987 = vmatprep.subr.mxu0 0.0
        %1988 = vmatpush1.msra.mxu0 0.0
        %1989 = vmatprep.subr.mxu0 0.0
        %1990 = vmatpush1.msra.mxu0 0.0
        %1991 = vmatprep.subr.mxu0 0.0
        %1992 = vmatpush1.msra.mxu0 0.0
        %1993 = vmatprep.subr.mxu0 0.0
        %1994 = vmatpush1.msra.mxu0 0.0
        %1995 = vmatprep.subr.mxu0 0.0
        %1996 = vmatpush1.msra.mxu0 0.0
        %1997 = vmatprep.mubr.f32.mxu0 0.0
        %1998 = vmatmul.mubr.f32.gmra.mrb[0].mxu0 %v1851
        %v1999 = vpop.f32.mrb[0].mxu0
        %v2000 = vadd.f32 0.0, %v1999
        %v2001 = vpop.f32.mrb[0].mxu0
        %v2002 = vadd.f32 0.0, %v2001
        %2003 = vmatprep.mubr.f32.mxu0 0.0
        %2004 = vmatmul.mubr.f32.gmra.mrb[0].mxu0 %v1854
        %v2005 = vpop.f32.mrb[0].mxu0
        %v2006 = vadd.f32 0.0, %v2005
        %v2007 = vpop.f32.mrb[0].mxu0
        %v2008 = vadd.f32 0.0, %v2007
        %2009 = vdwg.mxu0
        %v2010 = vadd.f32 %v1742, %v1923
        %v2011 = vadd.f32 %v1743, %v1925
        %v2012 = vadd.f32 %v1744, %v2000
        %v2013 = vadd.f32 %v1745, %v2002
        %v2014 = vadd.f32 %v1746, %v1929
        %v2015 = vadd.f32 %v1747, %v1931
        %v2016 = vadd.f32 %v1748, %v2006
        %v2017 = vadd.f32 %v1749, %v2008
        %v2018 = vrot.slane %v1535, 6
        %v2019 = vrot.slane %v1536, 6
        %v2020 = vrot.slane %v1537, 6
        %v2021 = vrot.slane %v1538, 6
        %vm2022 = vcmp.ne.s32.totalorder %v2018, 0
        %vm2023 = vcmp.ne.s32.totalorder %v2019, 0
        %vm2024 = vcmp.ne.s32.totalorder %v2020, 0
        %vm2025 = vcmp.ne.s32.totalorder %v2021, 0
        %v2026 = vsel %vm2022, 1, 0
        %v2027 = vsel %vm2023, 1, 0
        %v2028 = vsel %vm2024, 1, 0
        %v2029 = vsel %vm2025, 1, 0
        %v2030 = vlaneseq
        %v2031 = vshrl.u32 %v2030, 7
        %v2032 = vsub.s32 0, %v2031
        %v2033 = vrot.slane %v2026, %v2032
        %v2034 = vlaneseq
        %v2035 = vshrl.u32 %v2034, 7
        %v2036 = vsub.s32 0, %v2035
        %v2037 = vrot.slane %v2027, %v2036
        %v2038 = vlaneseq
        %v2039 = vshrl.u32 %v2038, 7
        %v2040 = vsub.s32 0, %v2039
        %v2041 = vrot.slane %v2028, %v2040
        %v2042 = vlaneseq
        %v2043 = vshrl.u32 %v2042, 7
        %v2044 = vsub.s32 0, %v2043
        %v2045 = vrot.slane %v2029, %v2044
        %vm2046 = vcmp.eq.s32.totalorder %v2033, 1
        %vm2047 = vcmp.eq.s32.totalorder %v2037, 1
        %vm2048 = vcmp.eq.s32.totalorder %v2041, 1
        %vm2049 = vcmp.eq.s32.totalorder %v2045, 1
        %2050 = vrot.lane.b32.xlu0 %v1750, 113
        %v2051 = vpop.permute.xlu0 %2050
        %2052 = vrot.lane.b32.xlu0 %v1751, 113
        %v2053 = vpop.permute.xlu0 %2052
        %2054 = vrot.lane.b32.xlu0 %v1752, 113
        %v2055 = vpop.permute.xlu0 %2054
        %2056 = vrot.lane.b32.xlu0 %v1753, 113
        %v2057 = vpop.permute.xlu0 %2056
        %2058 = vrot.lane.b32.xlu0 %v1754, 113
        %v2059 = vpop.permute.xlu0 %2058
        %2060 = vrot.lane.b32.xlu0 %v1755, 113
        %v2061 = vpop.permute.xlu0 %2060
        %2062 = vrot.lane.b32.xlu0 %v1756, 113
        %v2063 = vpop.permute.xlu0 %2062
        %2064 = vrot.lane.b32.xlu0 %v1757, 113
        %v2065 = vpop.permute.xlu0 %2064
        %2066 = vrot.lane.b32.xlu0 %v1758, 113
        %v2067 = vpop.permute.xlu0 %2066
        %2068 = vrot.lane.b32.xlu0 %v1759, 113
        %v2069 = vpop.permute.xlu0 %2068
        %vm2070 = vcmask 924672
        %v2071 = vsel %vm2070, %v2051, %v2053
        %v2072 = vsel %vm2070, %v2053, %v2055
        %v2073 = vsel %vm2070, %v2055, %v2057
        %v2074 = vsel %vm2070, %v2057, %v2059
        %v2075 = vsel %vm2070, %v2061, %v2063
        %v2076 = vsel %vm2070, %v2063, %v2065
        %v2077 = vsel %vm2070, %v2065, %v2067
        %v2078 = vsel %vm2070, %v2067, %v2069
        %v2087 = vsel %vm2046, %v2071, 0.0
        %v2088 = vsel %vm2047, %v2072, 0.0
        %v2089 = vsel %vm2048, %v2073, 0.0
        %v2090 = vsel %vm2049, %v2074, 0.0
        %v2091 = vsel %vm2046, %v2075, 0.0
        %v2092 = vsel %vm2047, %v2076, 0.0
        %v2093 = vsel %vm2048, %v2077, 0.0
        %v2094 = vsel %vm2049, %v2078, 0.0
        %s2095 = scalar_lea.vmem [#allocation8], 96
        %v2096 = vld [vmem:[%s2095] sm:$0xff]
        %v2097 = vld [vmem:[%s2095 + $0x8] sm:$0xff]
        %v2099 = vsel %vm680, %v2096, 0
        %v2102 = vsel %vm680, %v2097, 0
        %2104 = vmatprep.subr.mxu0 %v2088
        %2105 = vmatpush1.msra.mxu0 %v2087
        %2106 = vmatprep.subr.mxu0 %v2092
        %2107 = vmatpush1.msra.mxu0 %v2091
        %2108 = vmatprep.subr.mxu0 0.0
        %2109 = vmatpush1.msra.mxu0 0.0
        %2110 = vmatprep.subr.mxu0 0.0
        %2111 = vmatpush1.msra.mxu0 0.0
        %2112 = vmatprep.subr.mxu0 0.0
        %2113 = vmatpush1.msra.mxu0 0.0
        %2114 = vmatprep.subr.mxu0 0.0
        %2115 = vmatpush1.msra.mxu0 0.0
        %2116 = vmatprep.subr.mxu0 0.0
        %2117 = vmatpush1.msra.mxu0 0.0
        %2118 = vmatprep.subr.mxu0 0.0
        %2119 = vmatpush1.msra.mxu0 0.0
        %2120 = vmatprep.subr.mxu0 0.0
        %2121 = vmatpush1.msra.mxu0 0.0
        %2122 = vmatprep.subr.mxu0 0.0
        %2123 = vmatpush1.msra.mxu0 0.0
        %2124 = vmatprep.subr.mxu0 0.0
        %2125 = vmatpush1.msra.mxu0 0.0
        %2126 = vmatprep.subr.mxu0 0.0
        %2127 = vmatpush1.msra.mxu0 0.0
        %2128 = vmatprep.subr.mxu0 0.0
        %2129 = vmatpush1.msra.mxu0 0.0
        %2130 = vmatprep.subr.mxu0 0.0
        %2131 = vmatpush1.msra.mxu0 0.0
        %2132 = vmatprep.subr.mxu0 0.0
        %2133 = vmatpush1.msra.mxu0 0.0
        %2134 = vmatprep.subr.mxu0 0.0
        %2135 = vmatpush1.msra.mxu0 0.0
        %2136 = vmatprep.subr.mxu0 0.0
        %2137 = vmatpush1.msra.mxu0 0.0
        %2138 = vmatprep.subr.mxu0 0.0
        %2139 = vmatpush1.msra.mxu0 0.0
        %2140 = vmatprep.subr.mxu0 0.0
        %2141 = vmatpush1.msra.mxu0 0.0
        %2142 = vmatprep.subr.mxu0 0.0
        %2143 = vmatpush1.msra.mxu0 0.0
        %2144 = vmatprep.subr.mxu0 0.0
        %2145 = vmatpush1.msra.mxu0 0.0
        %2146 = vmatprep.subr.mxu0 0.0
        %2147 = vmatpush1.msra.mxu0 0.0
        %2148 = vmatprep.subr.mxu0 0.0
        %2149 = vmatpush1.msra.mxu0 0.0
        %2150 = vmatprep.subr.mxu0 0.0
        %2151 = vmatpush1.msra.mxu0 0.0
        %2152 = vmatprep.subr.mxu0 0.0
        %2153 = vmatpush1.msra.mxu0 0.0
        %2154 = vmatprep.subr.mxu0 0.0
        %2155 = vmatpush1.msra.mxu0 0.0
        %2156 = vmatprep.subr.mxu0 0.0
        %2157 = vmatpush1.msra.mxu0 0.0
        %2158 = vmatprep.subr.mxu0 0.0
        %2159 = vmatpush1.msra.mxu0 0.0
        %2160 = vmatprep.subr.mxu0 0.0
        %2161 = vmatpush1.msra.mxu0 0.0
        %2162 = vmatprep.subr.mxu0 0.0
        %2163 = vmatpush1.msra.mxu0 0.0
        %2164 = vmatprep.subr.mxu0 0.0
        %2165 = vmatpush1.msra.mxu0 0.0
        %2166 = vmatprep.subr.mxu0 0.0
        %2167 = vmatpush1.msra.mxu0 0.0
        %2168 = vmatprep.mubr.f32.mxu0 0.0
        %2169 = vmatmul.mubr.f32.gmra.mrb[0].mxu0 %v2099
        %v2170 = vpop.f32.mrb[0].mxu0
        %v2171 = vadd.f32 0.0, %v2170
        %v2172 = vpop.f32.mrb[0].mxu0
        %v2173 = vadd.f32 0.0, %v2172
        %2174 = vmatprep.mubr.f32.mxu0 0.0
        %2175 = vmatmul.mubr.f32.gmra.mrb[0].mxu0 %v2102
        %v2176 = vpop.f32.mrb[0].mxu0
        %v2177 = vadd.f32 0.0, %v2176
        %v2178 = vpop.f32.mrb[0].mxu0
        %v2179 = vadd.f32 0.0, %v2178
        %2180 = vdwg.mxu0
        %2181 = vmatprep.subr.mxu0 %v2090
        %2182 = vmatpush1.msra.mxu0 %v2089
        %2183 = vmatprep.subr.mxu0 %v2094
        %2184 = vmatpush1.msra.mxu0 %v2093
        %2185 = vmatprep.subr.mxu0 0.0
        %2186 = vmatpush1.msra.mxu0 0.0
        %2187 = vmatprep.subr.mxu0 0.0
        %2188 = vmatpush1.msra.mxu0 0.0
        %2189 = vmatprep.subr.mxu0 0.0
        %2190 = vmatpush1.msra.mxu0 0.0
        %2191 = vmatprep.subr.mxu0 0.0
        %2192 = vmatpush1.msra.mxu0 0.0
        %2193 = vmatprep.subr.mxu0 0.0
        %2194 = vmatpush1.msra.mxu0 0.0
        %2195 = vmatprep.subr.mxu0 0.0
        %2196 = vmatpush1.msra.mxu0 0.0
        %2197 = vmatprep.subr.mxu0 0.0
        %2198 = vmatpush1.msra.mxu0 0.0
        %2199 = vmatprep.subr.mxu0 0.0
        %2200 = vmatpush1.msra.mxu0 0.0
        %2201 = vmatprep.subr.mxu0 0.0
        %2202 = vmatpush1.msra.mxu0 0.0
        %2203 = vmatprep.subr.mxu0 0.0
        %2204 = vmatpush1.msra.mxu0 0.0
        %2205 = vmatprep.subr.mxu0 0.0
        %2206 = vmatpush1.msra.mxu0 0.0
        %2207 = vmatprep.subr.mxu0 0.0
        %2208 = vmatpush1.msra.mxu0 0.0
        %2209 = vmatprep.subr.mxu0 0.0
        %2210 = vmatpush1.msra.mxu0 0.0
        %2211 = vmatprep.subr.mxu0 0.0
        %2212 = vmatpush1.msra.mxu0 0.0
        %2213 = vmatprep.subr.mxu0 0.0
        %2214 = vmatpush1.msra.mxu0 0.0
        %2215 = vmatprep.subr.mxu0 0.0
        %2216 = vmatpush1.msra.mxu0 0.0
        %2217 = vmatprep.subr.mxu0 0.0
        %2218 = vmatpush1.msra.mxu0 0.0
        %2219 = vmatprep.subr.mxu0 0.0
        %2220 = vmatpush1.msra.mxu0 0.0
        %2221 = vmatprep.subr.mxu0 0.0
        %2222 = vmatpush1.msra.mxu0 0.0
        %2223 = vmatprep.subr.mxu0 0.0
        %2224 = vmatpush1.msra.mxu0 0.0
        %2225 = vmatprep.subr.mxu0 0.0
        %2226 = vmatpush1.msra.mxu0 0.0
        %2227 = vmatprep.subr.mxu0 0.0
        %2228 = vmatpush1.msra.mxu0 0.0
        %2229 = vmatprep.subr.mxu0 0.0
        %2230 = vmatpush1.msra.mxu0 0.0
        %2231 = vmatprep.subr.mxu0 0.0
        %2232 = vmatpush1.msra.mxu0 0.0
        %2233 = vmatprep.subr.mxu0 0.0
        %2234 = vmatpush1.msra.mxu0 0.0
        %2235 = vmatprep.subr.mxu0 0.0
        %2236 = vmatpush1.msra.mxu0 0.0
        %2237 = vmatprep.subr.mxu0 0.0
        %2238 = vmatpush1.msra.mxu0 0.0
        %2239 = vmatprep.subr.mxu0 0.0
        %2240 = vmatpush1.msra.mxu0 0.0
        %2241 = vmatprep.subr.mxu0 0.0
        %2242 = vmatpush1.msra.mxu0 0.0
        %2243 = vmatprep.subr.mxu0 0.0
        %2244 = vmatpush1.msra.mxu0 0.0
        %2245 = vmatprep.mubr.f32.mxu0 0.0
        %2246 = vmatmul.mubr.f32.gmra.mrb[0].mxu0 %v2099
        %v2247 = vpop.f32.mrb[0].mxu0
        %v2248 = vadd.f32 0.0, %v2247
        %v2249 = vpop.f32.mrb[0].mxu0
        %v2250 = vadd.f32 0.0, %v2249
        %2251 = vmatprep.mubr.f32.mxu0 0.0
        %2252 = vmatmul.mubr.f32.gmra.mrb[0].mxu0 %v2102
        %v2253 = vpop.f32.mrb[0].mxu0
        %v2254 = vadd.f32 0.0, %v2253
        %v2255 = vpop.f32.mrb[0].mxu0
        %v2256 = vadd.f32 0.0, %v2255
        %2257 = vdwg.mxu0
        %v2258 = vadd.f32 %v2010, %v2171
        %v2259 = vadd.f32 %v2011, %v2173
        %v2260 = vadd.f32 %v2012, %v2248
        %v2261 = vadd.f32 %v2013, %v2250
        %v2262 = vadd.f32 %v2014, %v2177
        %v2263 = vadd.f32 %v2015, %v2179
        %v2264 = vadd.f32 %v2016, %v2254
        %v2265 = vadd.f32 %v2017, %v2256
        %v2266 = vrot.slane %v1535, 7
        %v2267 = vrot.slane %v1536, 7
        %v2268 = vrot.slane %v1537, 7
        %v2269 = vrot.slane %v1538, 7
        %vm2270 = vcmp.ne.s32.totalorder %v2266, 0
        %vm2271 = vcmp.ne.s32.totalorder %v2267, 0
        %vm2272 = vcmp.ne.s32.totalorder %v2268, 0
        %vm2273 = vcmp.ne.s32.totalorder %v2269, 0
        %v2274 = vsel %vm2270, 1, 0
        %v2275 = vsel %vm2271, 1, 0
        %v2276 = vsel %vm2272, 1, 0
        %v2277 = vsel %vm2273, 1, 0
        %v2278 = vlaneseq
        %v2279 = vshrl.u32 %v2278, 7
        %v2280 = vsub.s32 0, %v2279
        %v2281 = vrot.slane %v2274, %v2280
        %v2282 = vlaneseq
        %v2283 = vshrl.u32 %v2282, 7
        %v2284 = vsub.s32 0, %v2283
        %v2285 = vrot.slane %v2275, %v2284
        %v2286 = vlaneseq
        %v2287 = vshrl.u32 %v2286, 7
        %v2288 = vsub.s32 0, %v2287
        %v2289 = vrot.slane %v2276, %v2288
        %v2290 = vlaneseq
        %v2291 = vshrl.u32 %v2290, 7
        %v2292 = vsub.s32 0, %v2291
        %v2293 = vrot.slane %v2277, %v2292
        %vm2294 = vcmp.eq.s32.totalorder %v2281, 1
        %vm2295 = vcmp.eq.s32.totalorder %v2285, 1
        %vm2296 = vcmp.eq.s32.totalorder %v2289, 1
        %vm2297 = vcmp.eq.s32.totalorder %v2293, 1
        %2298 = vrot.lane.b32.xlu0 %v1750, 112
        %v2299 = vpop.permute.xlu0 %2298
        %2300 = vrot.lane.b32.xlu0 %v1751, 112
        %v2301 = vpop.permute.xlu0 %2300
        %2302 = vrot.lane.b32.xlu0 %v1752, 112
        %v2303 = vpop.permute.xlu0 %2302
        %2304 = vrot.lane.b32.xlu0 %v1753, 112
        %v2305 = vpop.permute.xlu0 %2304
        %2306 = vrot.lane.b32.xlu0 %v1754, 112
        %v2307 = vpop.permute.xlu0 %2306
        %2308 = vrot.lane.b32.xlu0 %v1755, 112
        %v2309 = vpop.permute.xlu0 %2308
        %2310 = vrot.lane.b32.xlu0 %v1756, 112
        %v2311 = vpop.permute.xlu0 %2310
        %2312 = vrot.lane.b32.xlu0 %v1757, 112
        %v2313 = vpop.permute.xlu0 %2312
        %2314 = vrot.lane.b32.xlu0 %v1758, 112
        %v2315 = vpop.permute.xlu0 %2314
        %2316 = vrot.lane.b32.xlu0 %v1759, 112
        %v2317 = vpop.permute.xlu0 %2316
        %vm2318 = vcmask 916480
        %v2319 = vsel %vm2318, %v2299, %v2301
        %v2320 = vsel %vm2318, %v2301, %v2303
        %v2321 = vsel %vm2318, %v2303, %v2305
        %v2322 = vsel %vm2318, %v2305, %v2307
        %v2323 = vsel %vm2318, %v2309, %v2311
        %v2324 = vsel %vm2318, %v2311, %v2313
        %v2325 = vsel %vm2318, %v2313, %v2315
        %v2326 = vsel %vm2318, %v2315, %v2317
        %v2335 = vsel %vm2294, %v2319, 0.0
        %v2336 = vsel %vm2295, %v2320, 0.0
        %v2337 = vsel %vm2296, %v2321, 0.0
        %v2338 = vsel %vm2297, %v2322, 0.0
        %v2339 = vsel %vm2294, %v2323, 0.0
        %v2340 = vsel %vm2295, %v2324, 0.0
        %v2341 = vsel %vm2296, %v2325, 0.0
        %v2342 = vsel %vm2297, %v2326, 0.0
        %s2343 = scalar_lea.vmem [#allocation8], 112
        %v2344 = vld [vmem:[%s2343] sm:$0xff]
        %v2345 = vld [vmem:[%s2343 + $0x8] sm:$0xff]
        %v2347 = vsel %vm680, %v2344, 0
        %v2350 = vsel %vm680, %v2345, 0
        %2352 = vmatprep.subr.mxu0 %v2336
        %2353 = vmatpush1.msra.mxu0 %v2335
        %2354 = vmatprep.subr.mxu0 %v2340
        %2355 = vmatpush1.msra.mxu0 %v2339
        %2356 = vmatprep.subr.mxu0 0.0
        %2357 = vmatpush1.msra.mxu0 0.0
        %2358 = vmatprep.subr.mxu0 0.0
        %2359 = vmatpush1.msra.mxu0 0.0
        %2360 = vmatprep.subr.mxu0 0.0
        %2361 = vmatpush1.msra.mxu0 0.0
        %2362 = vmatprep.subr.mxu0 0.0
        %2363 = vmatpush1.msra.mxu0 0.0
        %2364 = vmatprep.subr.mxu0 0.0
        %2365 = vmatpush1.msra.mxu0 0.0
        %2366 = vmatprep.subr.mxu0 0.0
        %2367 = vmatpush1.msra.mxu0 0.0
        %2368 = vmatprep.subr.mxu0 0.0
        %2369 = vmatpush1.msra.mxu0 0.0
        %2370 = vmatprep.subr.mxu0 0.0
        %2371 = vmatpush1.msra.mxu0 0.0
        %2372 = vmatprep.subr.mxu0 0.0
        %2373 = vmatpush1.msra.mxu0 0.0
        %2374 = vmatprep.subr.mxu0 0.0
        %2375 = vmatpush1.msra.mxu0 0.0
        %2376 = vmatprep.subr.mxu0 0.0
        %2377 = vmatpush1.msra.mxu0 0.0
        %2378 = vmatprep.subr.mxu0 0.0
        %2379 = vmatpush1.msra.mxu0 0.0
        %2380 = vmatprep.subr.mxu0 0.0
        %2381 = vmatpush1.msra.mxu0 0.0
        %2382 = vmatprep.subr.mxu0 0.0
        %2383 = vmatpush1.msra.mxu0 0.0
        %2384 = vmatprep.subr.mxu0 0.0
        %2385 = vmatpush1.msra.mxu0 0.0
        %2386 = vmatprep.subr.mxu0 0.0
        %2387 = vmatpush1.msra.mxu0 0.0
        %2388 = vmatprep.subr.mxu0 0.0
        %2389 = vmatpush1.msra.mxu0 0.0
        %2390 = vmatprep.subr.mxu0 0.0
        %2391 = vmatpush1.msra.mxu0 0.0
        %2392 = vmatprep.subr.mxu0 0.0
        %2393 = vmatpush1.msra.mxu0 0.0
        %2394 = vmatprep.subr.mxu0 0.0
        %2395 = vmatpush1.msra.mxu0 0.0
        %2396 = vmatprep.subr.mxu0 0.0
        %2397 = vmatpush1.msra.mxu0 0.0
        %2398 = vmatprep.subr.mxu0 0.0
        %2399 = vmatpush1.msra.mxu0 0.0
        %2400 = vmatprep.subr.mxu0 0.0
        %2401 = vmatpush1.msra.mxu0 0.0
        %2402 = vmatprep.subr.mxu0 0.0
        %2403 = vmatpush1.msra.mxu0 0.0
        %2404 = vmatprep.subr.mxu0 0.0
        %2405 = vmatpush1.msra.mxu0 0.0
        %2406 = vmatprep.subr.mxu0 0.0
        %2407 = vmatpush1.msra.mxu0 0.0
        %2408 = vmatprep.subr.mxu0 0.0
        %2409 = vmatpush1.msra.mxu0 0.0
        %2410 = vmatprep.subr.mxu0 0.0
        %2411 = vmatpush1.msra.mxu0 0.0
        %2412 = vmatprep.subr.mxu0 0.0
        %2413 = vmatpush1.msra.mxu0 0.0
        %2414 = vmatprep.subr.mxu0 0.0
        %2415 = vmatpush1.msra.mxu0 0.0
        %2416 = vmatprep.mubr.f32.mxu0 0.0
        %2417 = vmatmul.mubr.f32.gmra.mrb[0].mxu0 %v2347
        %v2418 = vpop.f32.mrb[0].mxu0
        %v2419 = vadd.f32 0.0, %v2418
        %v2420 = vpop.f32.mrb[0].mxu0
        %v2421 = vadd.f32 0.0, %v2420
        %2422 = vmatprep.mubr.f32.mxu0 0.0
        %2423 = vmatmul.mubr.f32.gmra.mrb[0].mxu0 %v2350
        %v2424 = vpop.f32.mrb[0].mxu0
        %v2425 = vadd.f32 0.0, %v2424
        %v2426 = vpop.f32.mrb[0].mxu0
        %v2427 = vadd.f32 0.0, %v2426
        %2428 = vdwg.mxu0
        %2429 = vmatprep.subr.mxu0 %v2338
        %2430 = vmatpush1.msra.mxu0 %v2337
        %2431 = vmatprep.subr.mxu0 %v2342
        %2432 = vmatpush1.msra.mxu0 %v2341
        %2433 = vmatprep.subr.mxu0 0.0
        %2434 = vmatpush1.msra.mxu0 0.0
        %2435 = vmatprep.subr.mxu0 0.0
        %2436 = vmatpush1.msra.mxu0 0.0
        %2437 = vmatprep.subr.mxu0 0.0
        %2438 = vmatpush1.msra.mxu0 0.0
        %2439 = vmatprep.subr.mxu0 0.0
        %2440 = vmatpush1.msra.mxu0 0.0
        %2441 = vmatprep.subr.mxu0 0.0
        %2442 = vmatpush1.msra.mxu0 0.0
        %2443 = vmatprep.subr.mxu0 0.0
        %2444 = vmatpush1.msra.mxu0 0.0
        %2445 = vmatprep.subr.mxu0 0.0
        %2446 = vmatpush1.msra.mxu0 0.0
        %2447 = vmatprep.subr.mxu0 0.0
        %2448 = vmatpush1.msra.mxu0 0.0
        %2449 = vmatprep.subr.mxu0 0.0
        %2450 = vmatpush1.msra.mxu0 0.0
        %2451 = vmatprep.subr.mxu0 0.0
        %2452 = vmatpush1.msra.mxu0 0.0
        %2453 = vmatprep.subr.mxu0 0.0
        %2454 = vmatpush1.msra.mxu0 0.0
        %2455 = vmatprep.subr.mxu0 0.0
        %2456 = vmatpush1.msra.mxu0 0.0
        %2457 = vmatprep.subr.mxu0 0.0
        %2458 = vmatpush1.msra.mxu0 0.0
        %2459 = vmatprep.subr.mxu0 0.0
        %2460 = vmatpush1.msra.mxu0 0.0
        %2461 = vmatprep.subr.mxu0 0.0
        %2462 = vmatpush1.msra.mxu0 0.0
        %2463 = vmatprep.subr.mxu0 0.0
        %2464 = vmatpush1.msra.mxu0 0.0
        %2465 = vmatprep.subr.mxu0 0.0
        %2466 = vmatpush1.msra.mxu0 0.0
        %2467 = vmatprep.subr.mxu0 0.0
        %2468 = vmatpush1.msra.mxu0 0.0
        %2469 = vmatprep.subr.mxu0 0.0
        %2470 = vmatpush1.msra.mxu0 0.0
        %2471 = vmatprep.subr.mxu0 0.0
        %2472 = vmatpush1.msra.mxu0 0.0
        %2473 = vmatprep.subr.mxu0 0.0
        %2474 = vmatpush1.msra.mxu0 0.0
        %2475 = vmatprep.subr.mxu0 0.0
        %2476 = vmatpush1.msra.mxu0 0.0
        %2477 = vmatprep.subr.mxu0 0.0
        %2478 = vmatpush1.msra.mxu0 0.0
        %2479 = vmatprep.subr.mxu0 0.0
        %2480 = vmatpush1.msra.mxu0 0.0
        %2481 = vmatprep.subr.mxu0 0.0
        %2482 = vmatpush1.msra.mxu0 0.0
        %2483 = vmatprep.subr.mxu0 0.0
        %2484 = vmatpush1.msra.mxu0 0.0
        %2485 = vmatprep.subr.mxu0 0.0
        %2486 = vmatpush1.msra.mxu0 0.0
        %2487 = vmatprep.subr.mxu0 0.0
        %2488 = vmatpush1.msra.mxu0 0.0
        %2489 = vmatprep.subr.mxu0 0.0
        %2490 = vmatpush1.msra.mxu0 0.0
        %2491 = vmatprep.subr.mxu0 0.0
        %2492 = vmatpush1.msra.mxu0 0.0
        %2493 = vmatprep.mubr.f32.mxu0 0.0
        %2494 = vmatmul.mubr.f32.gmra.mrb[0].mxu0 %v2347
        %v2495 = vpop.f32.mrb[0].mxu0
        %v2496 = vadd.f32 0.0, %v2495
        %v2497 = vpop.f32.mrb[0].mxu0
        %v2498 = vadd.f32 0.0, %v2497
        %2499 = vmatprep.mubr.f32.mxu0 0.0
        %2500 = vmatmul.mubr.f32.gmra.mrb[0].mxu0 %v2350
        %v2501 = vpop.f32.mrb[0].mxu0
        %v2502 = vadd.f32 0.0, %v2501
        %v2503 = vpop.f32.mrb[0].mxu0
        %v2504 = vadd.f32 0.0, %v2503
        %2505 = vdwg.mxu0
        %v2506 = vadd.f32 %v2258, %v2419
        %v2507 = vadd.f32 %v2259, %v2421
        %v2508 = vadd.f32 %v2260, %v2496
        %v2509 = vadd.f32 %v2261, %v2498
        %v2510 = vadd.f32 %v2262, %v2425
        %v2511 = vadd.f32 %v2263, %v2427
        %v2512 = vadd.f32 %v2264, %v2502
        %v2513 = vadd.f32 %v2265, %v2504
        %v2514 = vld [vmem:[%s1 + $0x8] sm:$0x55]
        %vm2515 = vnez %v2514
        %v2516 = vsel %vm2515, 16843009, 0
        %v2517 = vunpack.c.0.s8 %v2516
        %v2518 = vunpack.c.1.s8 %v2516
        %v2519 = vunpack.c.2.s8 %v2516
        %v2520 = vunpack.c.3.s8 %v2516
        %vm2521 = vcmp.ne.s32.totalorder %v2517, 0
        %vm2522 = vcmp.ne.s32.totalorder %v2518, 0
        %vm2523 = vcmp.ne.s32.totalorder %v2519, 0
        %vm2524 = vcmp.ne.s32.totalorder %v2520, 0
        %v2525 = vsel %vm2521, 1, 0
        %v2526 = vsel %vm2522, 1, 0
        %v2527 = vsel %vm2523, 1, 0
        %v2528 = vsel %vm2524, 1, 0
        %v2529 = vlaneseq
        %v2530 = vshrl.u32 %v2529, 7
        %v2531 = vsub.s32 0, %v2530
        %v2532 = vrot.slane %v2525, %v2531
        %v2533 = vlaneseq
        %v2534 = vshrl.u32 %v2533, 7
        %v2535 = vsub.s32 0, %v2534
        %v2536 = vrot.slane %v2526, %v2535
        %v2537 = vlaneseq
        %v2538 = vshrl.u32 %v2537, 7
        %v2539 = vsub.s32 0, %v2538
        %v2540 = vrot.slane %v2527, %v2539
        %v2541 = vlaneseq
        %v2542 = vshrl.u32 %v2541, 7
        %v2543 = vsub.s32 0, %v2542
        %v2544 = vrot.slane %v2528, %v2543
        %vm2545 = vcmp.eq.s32.totalorder %v2532, 1
        %vm2546 = vcmp.eq.s32.totalorder %v2536, 1
        %vm2547 = vcmp.eq.s32.totalorder %v2540, 1
        %vm2548 = vcmp.eq.s32.totalorder %v2544, 1
        %2549 = vrot.lane.b32.xlu0 %v1750, 111
        %v2550 = vpop.permute.xlu0 %2549
        %2551 = vrot.lane.b32.xlu0 %v1751, 111
        %v2552 = vpop.permute.xlu0 %2551
        %2553 = vrot.lane.b32.xlu0 %v1752, 111
        %v2554 = vpop.permute.xlu0 %2553
        %2555 = vrot.lane.b32.xlu0 %v1753, 111
        %v2556 = vpop.permute.xlu0 %2555
        %2557 = vrot.lane.b32.xlu0 %v1754, 111
        %v2558 = vpop.permute.xlu0 %2557
        %2559 = vrot.lane.b32.xlu0 %v1755, 111
        %v2560 = vpop.permute.xlu0 %2559
        %2561 = vrot.lane.b32.xlu0 %v1756, 111
        %v2562 = vpop.permute.xlu0 %2561
        %2563 = vrot.lane.b32.xlu0 %v1757, 111
        %v2564 = vpop.permute.xlu0 %2563
        %2565 = vrot.lane.b32.xlu0 %v1758, 111
        %v2566 = vpop.permute.xlu0 %2565
        %2567 = vrot.lane.b32.xlu0 %v1759, 111
        %v2568 = vpop.permute.xlu0 %2567
        %vm2569 = vcmask 908288
        %v2570 = vsel %vm2569, %v2550, %v2552
        %v2571 = vsel %vm2569, %v2552, %v2554
        %v2572 = vsel %vm2569, %v2554, %v2556
        %v2573 = vsel %vm2569, %v2556, %v2558
        %v2574 = vsel %vm2569, %v2560, %v2562
        %v2575 = vsel %vm2569, %v2562, %v2564
        %v2576 = vsel %vm2569, %v2564, %v2566
        %v2577 = vsel %vm2569, %v2566, %v2568
        %v2586 = vsel %vm2545, %v2570, 0.0
        %v2587 = vsel %vm2546, %v2571, 0.0
        %v2588 = vsel %vm2547, %v2572, 0.0
        %v2589 = vsel %vm2548, %v2573, 0.0
        %v2590 = vsel %vm2545, %v2574, 0.0
        %v2591 = vsel %vm2546, %v2575, 0.0
        %v2592 = vsel %vm2547, %v2576, 0.0
        %v2593 = vsel %vm2548, %v2577, 0.0
        %s2594 = scalar_lea.vmem [#allocation8], 128
        %v2595 = vld [vmem:[%s2594] sm:$0xff]
        %v2596 = vld [vmem:[%s2594 + $0x8] sm:$0xff]
        %v2598 = vsel %vm680, %v2595, 0
        %v2601 = vsel %vm680, %v2596, 0
        %2603 = vmatprep.subr.mxu0 %v2587
        %2604 = vmatpush1.msra.mxu0 %v2586
        %2605 = vmatprep.subr.mxu0 %v2591
        %2606 = vmatpush1.msra.mxu0 %v2590
        %2607 = vmatprep.subr.mxu0 0.0
        %2608 = vmatpush1.msra.mxu0 0.0
        %2609 = vmatprep.subr.mxu0 0.0
        %2610 = vmatpush1.msra.mxu0 0.0
        %2611 = vmatprep.subr.mxu0 0.0
        %2612 = vmatpush1.msra.mxu0 0.0
        %2613 = vmatprep.subr.mxu0 0.0
        %2614 = vmatpush1.msra.mxu0 0.0
        %2615 = vmatprep.subr.mxu0 0.0
        %2616 = vmatpush1.msra.mxu0 0.0
        %2617 = vmatprep.subr.mxu0 0.0
        %2618 = vmatpush1.msra.mxu0 0.0
        %2619 = vmatprep.subr.mxu0 0.0
        %2620 = vmatpush1.msra.mxu0 0.0
        %2621 = vmatprep.subr.mxu0 0.0
        %2622 = vmatpush1.msra.mxu0 0.0
        %2623 = vmatprep.subr.mxu0 0.0
        %2624 = vmatpush1.msra.mxu0 0.0
        %2625 = vmatprep.subr.mxu0 0.0
        %2626 = vmatpush1.msra.mxu0 0.0
        %2627 = vmatprep.subr.mxu0 0.0
        %2628 = vmatpush1.msra.mxu0 0.0
        %2629 = vmatprep.subr.mxu0 0.0
        %2630 = vmatpush1.msra.mxu0 0.0
        %2631 = vmatprep.subr.mxu0 0.0
        %2632 = vmatpush1.msra.mxu0 0.0
        %2633 = vmatprep.subr.mxu0 0.0
        %2634 = vmatpush1.msra.mxu0 0.0
        %2635 = vmatprep.subr.mxu0 0.0
        %2636 = vmatpush1.msra.mxu0 0.0
        %2637 = vmatprep.subr.mxu0 0.0
        %2638 = vmatpush1.msra.mxu0 0.0
        %2639 = vmatprep.subr.mxu0 0.0
        %2640 = vmatpush1.msra.mxu0 0.0
        %2641 = vmatprep.subr.mxu0 0.0
        %2642 = vmatpush1.msra.mxu0 0.0
        %2643 = vmatprep.subr.mxu0 0.0
        %2644 = vmatpush1.msra.mxu0 0.0
        %2645 = vmatprep.subr.mxu0 0.0
        %2646 = vmatpush1.msra.mxu0 0.0
        %2647 = vmatprep.subr.mxu0 0.0
        %2648 = vmatpush1.msra.mxu0 0.0
        %2649 = vmatprep.subr.mxu0 0.0
        %2650 = vmatpush1.msra.mxu0 0.0
        %2651 = vmatprep.subr.mxu0 0.0
        %2652 = vmatpush1.msra.mxu0 0.0
        %2653 = vmatprep.subr.mxu0 0.0
        %2654 = vmatpush1.msra.mxu0 0.0
        %2655 = vmatprep.subr.mxu0 0.0
        %2656 = vmatpush1.msra.mxu0 0.0
        %2657 = vmatprep.subr.mxu0 0.0
        %2658 = vmatpush1.msra.mxu0 0.0
        %2659 = vmatprep.subr.mxu0 0.0
        %2660 = vmatpush1.msra.mxu0 0.0
        %2661 = vmatprep.subr.mxu0 0.0
        %2662 = vmatpush1.msra.mxu0 0.0
        %2663 = vmatprep.subr.mxu0 0.0
        %2664 = vmatpush1.msra.mxu0 0.0
        %2665 = vmatprep.subr.mxu0 0.0
        %2666 = vmatpush1.msra.mxu0 0.0
        %2667 = vmatprep.mubr.f32.mxu0 0.0
        %2668 = vmatmul.mubr.f32.gmra.mrb[0].mxu0 %v2598
        %v2669 = vpop.f32.mrb[0].mxu0
        %v2670 = vadd.f32 0.0, %v2669
        %v2671 = vpop.f32.mrb[0].mxu0
        %v2672 = vadd.f32 0.0, %v2671
        %2673 = vmatprep.mubr.f32.mxu0 0.0
        %2674 = vmatmul.mubr.f32.gmra.mrb[0].mxu0 %v2601
        %v2675 = vpop.f32.mrb[0].mxu0
        %v2676 = vadd.f32 0.0, %v2675
        %v2677 = vpop.f32.mrb[0].mxu0
        %v2678 = vadd.f32 0.0, %v2677
        %2679 = vdwg.mxu0
        %2680 = vmatprep.subr.mxu0 %v2589
        %2681 = vmatpush1.msra.mxu0 %v2588
        %2682 = vmatprep.subr.mxu0 %v2593
        %2683 = vmatpush1.msra.mxu0 %v2592
        %2684 = vmatprep.subr.mxu0 0.0
        %2685 = vmatpush1.msra.mxu0 0.0
        %2686 = vmatprep.subr.mxu0 0.0
        %2687 = vmatpush1.msra.mxu0 0.0
        %2688 = vmatprep.subr.mxu0 0.0
        %2689 = vmatpush1.msra.mxu0 0.0
        %2690 = vmatprep.subr.mxu0 0.0
        %2691 = vmatpush1.msra.mxu0 0.0
        %2692 = vmatprep.subr.mxu0 0.0
        %2693 = vmatpush1.msra.mxu0 0.0
        %2694 = vmatprep.subr.mxu0 0.0
        %2695 = vmatpush1.msra.mxu0 0.0
        %2696 = vmatprep.subr.mxu0 0.0
        %2697 = vmatpush1.msra.mxu0 0.0
        %2698 = vmatprep.subr.mxu0 0.0
        %2699 = vmatpush1.msra.mxu0 0.0
        %2700 = vmatprep.subr.mxu0 0.0
        %2701 = vmatpush1.msra.mxu0 0.0
        %2702 = vmatprep.subr.mxu0 0.0
        %2703 = vmatpush1.msra.mxu0 0.0
        %2704 = vmatprep.subr.mxu0 0.0
        %2705 = vmatpush1.msra.mxu0 0.0
        %2706 = vmatprep.subr.mxu0 0.0
        %2707 = vmatpush1.msra.mxu0 0.0
        %2708 = vmatprep.subr.mxu0 0.0
        %2709 = vmatpush1.msra.mxu0 0.0
        %2710 = vmatprep.subr.mxu0 0.0
        %2711 = vmatpush1.msra.mxu0 0.0
        %2712 = vmatprep.subr.mxu0 0.0
        %2713 = vmatpush1.msra.mxu0 0.0
        %2714 = vmatprep.subr.mxu0 0.0
        %2715 = vmatpush1.msra.mxu0 0.0
        %2716 = vmatprep.subr.mxu0 0.0
        %2717 = vmatpush1.msra.mxu0 0.0
        %2718 = vmatprep.subr.mxu0 0.0
        %2719 = vmatpush1.msra.mxu0 0.0
        %2720 = vmatprep.subr.mxu0 0.0
        %2721 = vmatpush1.msra.mxu0 0.0
        %2722 = vmatprep.subr.mxu0 0.0
        %2723 = vmatpush1.msra.mxu0 0.0
        %2724 = vmatprep.subr.mxu0 0.0
        %2725 = vmatpush1.msra.mxu0 0.0
        %2726 = vmatprep.subr.mxu0 0.0
        %2727 = vmatpush1.msra.mxu0 0.0
        %2728 = vmatprep.subr.mxu0 0.0
        %2729 = vmatpush1.msra.mxu0 0.0
        %2730 = vmatprep.subr.mxu0 0.0
        %2731 = vmatpush1.msra.mxu0 0.0
        %2732 = vmatprep.subr.mxu0 0.0
        %2733 = vmatpush1.msra.mxu0 0.0
        %2734 = vmatprep.subr.mxu0 0.0
        %2735 = vmatpush1.msra.mxu0 0.0
        %2736 = vmatprep.subr.mxu0 0.0
        %2737 = vmatpush1.msra.mxu0 0.0
        %2738 = vmatprep.subr.mxu0 0.0
        %2739 = vmatpush1.msra.mxu0 0.0
        %2740 = vmatprep.subr.mxu0 0.0
        %2741 = vmatpush1.msra.mxu0 0.0
        %2742 = vmatprep.subr.mxu0 0.0
        %2743 = vmatpush1.msra.mxu0 0.0
        %2744 = vmatprep.mubr.f32.mxu0 0.0
        %2745 = vmatmul.mubr.f32.gmra.mrb[0].mxu0 %v2598
        %v2746 = vpop.f32.mrb[0].mxu0
        %v2747 = vadd.f32 0.0, %v2746
        %v2748 = vpop.f32.mrb[0].mxu0
        %v2749 = vadd.f32 0.0, %v2748
        %2750 = vmatprep.mubr.f32.mxu0 0.0
        %2751 = vmatmul.mubr.f32.gmra.mrb[0].mxu0 %v2601
        %v2752 = vpop.f32.mrb[0].mxu0
        %v2753 = vadd.f32 0.0, %v2752
        %v2754 = vpop.f32.mrb[0].mxu0
        %v2755 = vadd.f32 0.0, %v2754
        %2756 = vdwg.mxu0
        %v2757 = vadd.f32 %v2506, %v2670
        %v2758 = vadd.f32 %v2507, %v2672
        %v2759 = vadd.f32 %v2508, %v2747
        %v2760 = vadd.f32 %v2509, %v2749
        %v2761 = vadd.f32 %v2510, %v2676
        %v2762 = vadd.f32 %v2511, %v2678
        %v2763 = vadd.f32 %v2512, %v2753
        %v2764 = vadd.f32 %v2513, %v2755
        %v2765 = vld [vmem:[%s5] sm:$0xff]
        %v2766 = vld [vmem:[%s5 + $0x8] sm:$0xff]
        %2768 = vset.pattern.permute.xlu0 0
        %2769 = vperm.xlu0 %2768, %v2765
        %v2770 = vpop.permute.xlu0 %2769
        %2773 = vset.pattern.permute.xlu0 0
        %2774 = vperm.xlu0 %2773, %v2766
        %v2775 = vpop.permute.xlu0 %2774
        %v2777 = vmul.f32 %v2757, %v2770
        %v2778 = vmul.f32 %v2758, %v2770
        %v2779 = vmul.f32 %v2759, %v2770
        %v2780 = vmul.f32 %v2760, %v2770
        %v2781 = vmul.f32 %v2761, %v2775
        %v2782 = vmul.f32 %v2762, %v2775
        %v2783 = vmul.f32 %v2763, %v2775
        %v2784 = vmul.f32 %v2764, %v2775
        %v2785 = vld [vmem:[%s6] sm:$0xff]
        %v2786 = vld [vmem:[%s6 + $0x8] sm:$0xff]
        %2788 = vset.pattern.permute.xlu0 0
        %2789 = vperm.xlu0 %2788, %v2785
        %v2790 = vpop.permute.xlu0 %2789
        %2793 = vset.pattern.permute.xlu0 0
        %2794 = vperm.xlu0 %2793, %v2786
        %v2795 = vpop.permute.xlu0 %2794
        %v2797 = vadd.f32 %v2777, %v2790
        %v2798 = vadd.f32 %v2778, %v2790
        %v2799 = vadd.f32 %v2779, %v2790
        %v2800 = vadd.f32 %v2780, %v2790
        %v2801 = vadd.f32 %v2781, %v2795
        %v2802 = vadd.f32 %v2782, %v2795
        %v2803 = vadd.f32 %v2783, %v2795
        %v2804 = vadd.f32 %v2784, %v2795
        %v2805 = vld [vmem:[#allocation3] sm:$0xff]
        %v2806 = vld [vmem:[#allocation3 + $0x8] sm:$0xff]
        %v2807 = vld [vmem:[#allocation3 + $0x10] sm:$0xff]
        %v2808 = vld [vmem:[#allocation3 + $0x18] sm:$0xff]
        %v2809 = vld [vmem:[#allocation3 + $0x20] sm:$0xff]
        %v2810 = vld [vmem:[#allocation3 + $0x28] sm:$0xff]
        %v2811 = vld [vmem:[#allocation3 + $0x30] sm:$0xff]
        %v2812 = vld [vmem:[#allocation3 + $0x38] sm:$0xff]
        %v2813 = vmul.f32 %v2805, 0.25
        %v2814 = vmul.f32 %v2806, 0.25
        %v2815 = vmul.f32 %v2807, 0.25
        %v2816 = vmul.f32 %v2808, 0.25
        %v2817 = vmul.f32 %v2809, 0.25
        %v2818 = vmul.f32 %v2810, 0.25
        %v2819 = vmul.f32 %v2811, 0.25
        %v2820 = vmul.f32 %v2812, 0.25
        %v2821 = vadd.f32 %v2813, %v2797
        %v2822 = vadd.f32 %v2814, %v2798
        %v2823 = vadd.f32 %v2815, %v2799
        %v2824 = vadd.f32 %v2816, %v2800
        %v2825 = vadd.f32 %v2817, %v2801
        %v2826 = vadd.f32 %v2818, %v2802
        %v2827 = vadd.f32 %v2819, %v2803
        %v2828 = vadd.f32 %v2820, %v2804
        %vm2829 = vcmp.gt.f32.partialorder %v2821, 0.5
        %vm2830 = vcmp.gt.f32.partialorder %v2822, 0.5
        %vm2831 = vcmp.gt.f32.partialorder %v2823, 0.5
        %vm2832 = vcmp.gt.f32.partialorder %v2824, 0.5
        %vm2833 = vcmp.gt.f32.partialorder %v2825, 0.5
        %vm2834 = vcmp.gt.f32.partialorder %v2826, 0.5
        %vm2835 = vcmp.gt.f32.partialorder %v2827, 0.5
        %vm2836 = vcmp.gt.f32.partialorder %v2828, 0.5
        %v2837 = vsel %vm2829, 1, 0
        %v2838 = vsel %vm2830, 1, 0
        %v2839 = vsel %vm2831, 1, 0
        %v2840 = vsel %vm2832, 1, 0
        %v2841 = vsel %vm2833, 1, 0
        %v2842 = vsel %vm2834, 1, 0
        %v2843 = vsel %vm2835, 1, 0
        %v2844 = vsel %vm2836, 1, 0
        %v2845 = vcvt.s32.f32 %v2837
        %v2846 = vcvt.s32.f32 %v2838
        %v2847 = vcvt.s32.f32 %v2839
        %v2848 = vcvt.s32.f32 %v2840
        %v2849 = vcvt.s32.f32 %v2841
        %v2850 = vcvt.s32.f32 %v2842
        %v2851 = vcvt.s32.f32 %v2843
        %v2852 = vcvt.s32.f32 %v2844
        %v2853 = vsel %vm2829, 0.0, %v2821
        %v2854 = vsel %vm2830, 0.0, %v2822
        %v2855 = vsel %vm2831, 0.0, %v2823
        %v2856 = vsel %vm2832, 0.0, %v2824
        %v2857 = vsel %vm2833, 0.0, %v2825
        %v2858 = vsel %vm2834, 0.0, %v2826
        %v2859 = vsel %vm2835, 0.0, %v2827
        %v2860 = vsel %vm2836, 0.0, %v2828
        %2861 = vst [vmem:[#allocation3] sm:$0xff] %v2853
        %2862 = vst [vmem:[#allocation3 + $0x8] sm:$0xff] %v2854
        %2863 = vst [vmem:[#allocation3 + $0x10] sm:$0xff] %v2855
        %2864 = vst [vmem:[#allocation3 + $0x18] sm:$0xff] %v2856
        %2865 = vst [vmem:[#allocation3 + $0x20] sm:$0xff] %v2857
        %2866 = vst [vmem:[#allocation3 + $0x28] sm:$0xff] %v2858
        %2867 = vst [vmem:[#allocation3 + $0x30] sm:$0xff] %v2859
        %2868 = vst [vmem:[#allocation3 + $0x38] sm:$0xff] %v2860
        %v2869 = vld [vmem:[%s7] sm:$0xff]
        %v2870 = vld [vmem:[%s8] sm:$0xff]
        %2872 = vset.pattern.permute.xlu0 0
        %2873 = vperm.xlu0 %2872, %v2870
        %v2874 = vpop.permute.xlu0 %2873
        %v2877 = vsel %vm680, %v2869, 0
        %2879 = vmatprep.subr.mxu0 %v2846
        %2880 = vmatpush1.msra.mxu0 %v2845
        %2881 = vmatprep.subr.mxu0 %v2850
        %2882 = vmatpush1.msra.mxu0 %v2849
        %2883 = vmatprep.subr.mxu0 0.0
        %2884 = vmatpush1.msra.mxu0 0.0
        %2885 = vmatprep.subr.mxu0 0.0
        %2886 = vmatpush1.msra.mxu0 0.0
        %2887 = vmatprep.subr.mxu0 0.0
        %2888 = vmatpush1.msra.mxu0 0.0
        %2889 = vmatprep.subr.mxu0 0.0
        %2890 = vmatpush1.msra.mxu0 0.0
        %2891 = vmatprep.subr.mxu0 0.0
        %2892 = vmatpush1.msra.mxu0 0.0
        %2893 = vmatprep.subr.mxu0 0.0
        %2894 = vmatpush1.msra.mxu0 0.0
        %2895 = vmatprep.subr.mxu0 0.0
        %2896 = vmatpush1.msra.mxu0 0.0
        %2897 = vmatprep.subr.mxu0 0.0
        %2898 = vmatpush1.msra.mxu0 0.0
        %2899 = vmatprep.subr.mxu0 0.0
        %2900 = vmatpush1.msra.mxu0 0.0
        %2901 = vmatprep.subr.mxu0 0.0
        %2902 = vmatpush1.msra.mxu0 0.0
        %2903 = vmatprep.subr.mxu0 0.0
        %2904 = vmatpush1.msra.mxu0 0.0
        %2905 = vmatprep.subr.mxu0 0.0
        %2906 = vmatpush1.msra.mxu0 0.0
        %2907 = vmatprep.subr.mxu0 0.0
        %2908 = vmatpush1.msra.mxu0 0.0
        %2909 = vmatprep.subr.mxu0 0.0
        %2910 = vmatpush1.msra.mxu0 0.0
        %2911 = vmatprep.subr.mxu0 0.0
        %2912 = vmatpush1.msra.mxu0 0.0
        %2913 = vmatprep.subr.mxu0 0.0
        %2914 = vmatpush1.msra.mxu0 0.0
        %2915 = vmatprep.subr.mxu0 0.0
        %2916 = vmatpush1.msra.mxu0 0.0
        %2917 = vmatprep.subr.mxu0 0.0
        %2918 = vmatpush1.msra.mxu0 0.0
        %2919 = vmatprep.subr.mxu0 0.0
        %2920 = vmatpush1.msra.mxu0 0.0
        %2921 = vmatprep.subr.mxu0 0.0
        %2922 = vmatpush1.msra.mxu0 0.0
        %2923 = vmatprep.subr.mxu0 0.0
        %2924 = vmatpush1.msra.mxu0 0.0
        %2925 = vmatprep.subr.mxu0 0.0
        %2926 = vmatpush1.msra.mxu0 0.0
        %2927 = vmatprep.subr.mxu0 0.0
        %2928 = vmatpush1.msra.mxu0 0.0
        %2929 = vmatprep.subr.mxu0 0.0
        %2930 = vmatpush1.msra.mxu0 0.0
        %2931 = vmatprep.subr.mxu0 0.0
        %2932 = vmatpush1.msra.mxu0 0.0
        %2933 = vmatprep.subr.mxu0 0.0
        %2934 = vmatpush1.msra.mxu0 0.0
        %2935 = vmatprep.subr.mxu0 0.0
        %2936 = vmatpush1.msra.mxu0 0.0
        %2937 = vmatprep.subr.mxu0 0.0
        %2938 = vmatpush1.msra.mxu0 0.0
        %2939 = vmatprep.subr.mxu0 0.0
        %2940 = vmatpush1.msra.mxu0 0.0
        %2941 = vmatprep.subr.mxu0 0.0
        %2942 = vmatpush1.msra.mxu0 0.0
        %2943 = vmatprep.mubr.f32.mxu0 0.0
        %2944 = vmatmul.mubr.f32.gmra.mrb[0].mxu0 %v2877
        %v2945 = vpop.f32.mrb[0].mxu0
        %v2946 = vadd.f32 %v2874, %v2945
        %v2947 = vpop.f32.mrb[0].mxu0
        %v2948 = vadd.f32 %v2874, %v2947
        %2949 = vdwg.mxu0
        %2950 = vmatprep.subr.mxu0 %v2848
        %2951 = vmatpush1.msra.mxu0 %v2847
        %2952 = vmatprep.subr.mxu0 %v2852
        %2953 = vmatpush1.msra.mxu0 %v2851
        %2954 = vmatprep.subr.mxu0 0.0
        %2955 = vmatpush1.msra.mxu0 0.0
        %2956 = vmatprep.subr.mxu0 0.0
        %2957 = vmatpush1.msra.mxu0 0.0
        %2958 = vmatprep.subr.mxu0 0.0
        %2959 = vmatpush1.msra.mxu0 0.0
        %2960 = vmatprep.subr.mxu0 0.0
        %2961 = vmatpush1.msra.mxu0 0.0
        %2962 = vmatprep.subr.mxu0 0.0
        %2963 = vmatpush1.msra.mxu0 0.0
        %2964 = vmatprep.subr.mxu0 0.0
        %2965 = vmatpush1.msra.mxu0 0.0
        %2966 = vmatprep.subr.mxu0 0.0
        %2967 = vmatpush1.msra.mxu0 0.0
        %2968 = vmatprep.subr.mxu0 0.0
        %2969 = vmatpush1.msra.mxu0 0.0
        %2970 = vmatprep.subr.mxu0 0.0
        %2971 = vmatpush1.msra.mxu0 0.0
        %2972 = vmatprep.subr.mxu0 0.0
        %2973 = vmatpush1.msra.mxu0 0.0
        %2974 = vmatprep.subr.mxu0 0.0
        %2975 = vmatpush1.msra.mxu0 0.0
        %2976 = vmatprep.subr.mxu0 0.0
        %2977 = vmatpush1.msra.mxu0 0.0
        %2978 = vmatprep.subr.mxu0 0.0
        %2979 = vmatpush1.msra.mxu0 0.0
        %2980 = vmatprep.subr.mxu0 0.0
        %2981 = vmatpush1.msra.mxu0 0.0
        %2982 = vmatprep.subr.mxu0 0.0
        %2983 = vmatpush1.msra.mxu0 0.0
        %2984 = vmatprep.subr.mxu0 0.0
        %2985 = vmatpush1.msra.mxu0 0.0
        %2986 = vmatprep.subr.mxu0 0.0
        %2987 = vmatpush1.msra.mxu0 0.0
        %2988 = vmatprep.subr.mxu0 0.0
        %2989 = vmatpush1.msra.mxu0 0.0
        %2990 = vmatprep.subr.mxu0 0.0
        %2991 = vmatpush1.msra.mxu0 0.0
        %2992 = vmatprep.subr.mxu0 0.0
        %2993 = vmatpush1.msra.mxu0 0.0
        %2994 = vmatprep.subr.mxu0 0.0
        %2995 = vmatpush1.msra.mxu0 0.0
        %2996 = vmatprep.subr.mxu0 0.0
        %2997 = vmatpush1.msra.mxu0 0.0
        %2998 = vmatprep.subr.mxu0 0.0
        %2999 = vmatpush1.msra.mxu0 0.0
        %3000 = vmatprep.subr.mxu0 0.0
        %3001 = vmatpush1.msra.mxu0 0.0
        %3002 = vmatprep.subr.mxu0 0.0
        %3003 = vmatpush1.msra.mxu0 0.0
        %3004 = vmatprep.subr.mxu0 0.0
        %3005 = vmatpush1.msra.mxu0 0.0
        %3006 = vmatprep.subr.mxu0 0.0
        %3007 = vmatpush1.msra.mxu0 0.0
        %3008 = vmatprep.subr.mxu0 0.0
        %3009 = vmatpush1.msra.mxu0 0.0
        %3010 = vmatprep.subr.mxu0 0.0
        %3011 = vmatpush1.msra.mxu0 0.0
        %3012 = vmatprep.subr.mxu0 0.0
        %3013 = vmatpush1.msra.mxu0 0.0
        %3014 = vmatprep.mubr.f32.mxu0 0.0
        %3015 = vmatmul.mubr.f32.gmra.mrb[0].mxu0 %v2877
        %v3016 = vpop.f32.mrb[0].mxu0
        %v3017 = vadd.f32 %v2874, %v3016
        %v3018 = vpop.f32.mrb[0].mxu0
        %v3019 = vadd.f32 %v2874, %v3018
        %3020 = vdwg.mxu0
        %3021 = vst [vmem:[%s383] sm:$0xff] %v2946
        %3022 = vst [vmem:[%s383 + $0x8] sm:$0xff] %v2948
        %3023 = vst [vmem:[%s383 + $0x10] sm:$0xff] %v3017
        %3024 = vst [vmem:[%s383 + $0x18] sm:$0xff] %v3019
        %s3025 = sand.u32 %s245, 1
        %s3026 = scalar_lea.sflag [#allocation7], %s3025
        %s3027 = sand.u32 %s245, 1
        %s3028 = smul.addr %s3027, 32
        %s3029 = scalar_lea.vmem [#allocation10], %s3028
        // Predicated region
        $region69: #{tpu_custom_call.1} parent=55 // pred_check
          %p3030 = pneg %p255
        $region70: #{tpu_custom_call.1} parent=55 // pred_check_branch
          %3032 = sbr.rel (%p3030) target = $region72
        $region71: #{tpu_custom_call.1} parent=55 // pred_region
          %s3034 = ssub.s32 512, 512
          %3035 = vsyncadd %s3026, %s3034
          %s3036 = smul.addr %s31, 4
          %s3037 = smul.addr %s32, 4
          %s3038 = sadd.s32 %s3036, %s3037
          %s3039 = smul.addr %s3038, 128
          %s3040 = scalar_lea.hbm %s9, %s3039
          %s3042 = sshll.u32 %s3029, 4
          %s3043 = int_to_ptr.vmem [resolvable:$true] %s3042
          %3045 = dma.vmem_to_hbm [thread:$0]  %s3043, 512, %s3040, %s3026
        $region72: #{tpu_custom_call.1} parent=55 // pred_fallthru
          _
      $region56: #{tpu_custom_call.1} parent=5 // pred_fallthru
        _
      %p3046 = scmp.le.s32.totalorder 2, %s22
      // Predicated region
      $region73: #{tpu_custom_call.1} parent=5 // pred_check
        %p3047 = pneg %p3046
      $region74: #{tpu_custom_call.1} parent=5 // pred_check_branch
        %3049 = sbr.rel (%p3047) target = $region76
      $region75: #{tpu_custom_call.1} parent=5 // pred_region
        %s3050 = ssub.s32 %s22, 2
        // Predicated region
        $region77: #{tpu_custom_call.1} parent=75 // pred_check
          %p3051 = pneg %p261
        $region78: #{tpu_custom_call.1} parent=75 // pred_check_branch
          %3053 = sbr.rel (%p3051) target = $region80
        $region79: #{tpu_custom_call.1} parent=75 // pred_region
          %s3054 = sand.u32 %s246, 1
          %s3055 = scalar_lea.sflag [#allocation7], %s3054
          %s3056 = sand.u32 %s246, 1
          %s3057 = smul.addr %s3056, 32
          %s3058 = scalar_lea.vmem [#allocation10], %s3057
          %3059 = dma.done %s3055, 512
        $region80: #{tpu_custom_call.1} parent=75 // pred_fallthru
          _
      $region76: #{tpu_custom_call.1} parent=5 // pred_fallthru
        _
    $region6: #{tpu_custom_call.1} parent=1 // loop_footer
      %s26 = sadd.s32 1, %s22
    $region7: #{tpu_custom_call.1} parent=1 // loop_footer_branch
      %21 = sbr.rel target = $region3
    $region8: #{tpu_custom_call.1} parent=1 // loop_exit
      _
    %3060 = vsyncpa [#allocation6], 1
    %s3061 = scalar_lea.sflag [#allocation6], 1
    %3062 = vsyncpa %s3061, 1
    %3063 = vsyncpa [#allocation9], 1
    %3064 = vsyncpa [#allocation7], 1
    %s3065 = scalar_lea.sflag [#allocation7], 1
    %3066 = vsyncpa %s3065, 1

</llo_original>
